<compile_context>
chip_gen: v5e
topology: v5e:2x2
jax: 0.10.0
libtpu: 0.0.40
codegen_flags: <defaults>
</compile_context>

<pallas_src>
import jax
import jax.numpy as jnp
from jax.experimental import pallas as pl
from jax.experimental.pallas import tpu as pltpu

# ----- small synthetic shapes (analog of 512x28x28 backbone / 768-d BERT) ----
B = 16                     # samples per call (>=8 so launch/weight-DMA cost amortizes)
TB = 8                     # batch tile per grid step (shardable across v7x's 2 TCs)
C = 8                      # backbone channels         (512 in the original)
H = W = 16                 # backbone spatial          (28 in the original)
POOL = 4                   # F.avg_pool2d kernel = stride = 4
HP, WP = H // POOL, W // POOL
CHW = C * H * W            # raw (pre-pool) flattened feature size = 2048
FEAT = C * HP * WP         # fc1 in-features (512*7*7 in the original)
HIDDEN = 32                # fc1 out-features ("hidden")
TXT = HIDDEN               # BERT pooler dim; fc2 expects hidden*hidden
OUTER = HIDDEN * TXT       # flattened bilinear feature = 1024 (lane dense)
FC2_OUT = 250
OUT_CLASS = 5
OUT_PAD = 128              # lane-dense padding of the final (folded) logits


# --------------------------- single fused kernel -----------------------------
def _fused_kernel(pic_ref, txt_ref, w1_ref, exp_ref, w23_ref, bias_ref, o_ref):
    b1 = bias_ref[0:1, 0:HIDDEN]     # (1, HIDDEN)  f32  -- static slice, free
    b23 = bias_ref[1:2, :]           # (1, OUT_PAD) f32

    # fc1 with the 4x4 average pooling folded into the weight (bf16 MXU, f32 acc).
    pic_emb = jnp.dot(pic_ref[...].astype(jnp.bfloat16), w1_ref[...],
                      preferred_element_type=jnp.float32) + b1          # (TB, HIDDEN)

    # Exact 0/1 column expansion: pe_exp[b, h*TXT + t] = pic_emb[b, h]
    # (builds the flattened outer-product layout without any in-kernel reshape).
    pe_exp = jnp.dot(pic_emb.astype(jnp.bfloat16), exp_ref[...],
                     preferred_element_type=jnp.float32)                # (TB, OUTER)

    # torch.ger per sample, flattened: outer[b, h*TXT+t] = pic_emb[b,h]*txt[b,t]
    # (elementwise multiply kept in f32: v5e has no bf16 VALU).
    outer = pe_exp * txt_ref[...].astype(jnp.float32)                   # (TB, OUTER)

    # fc2 and the final head folded into one weight (no nonlinearity between them).
    o_ref[...] = jnp.dot(outer.astype(jnp.bfloat16), w23_ref[...],
                         preferred_element_type=jnp.float32) + b23      # (TB, OUT_PAD)


def fused_forward_call(pic_flat_f32, txt_tiled_bf16, pp):
    grid = (B // TB,)
    return pl.pallas_call(
        _fused_kernel,
        out_shape=jax.ShapeDtypeStruct((B, OUT_PAD), jnp.float32),
        grid_spec=pltpu.PrefetchScalarGridSpec(
            num_scalar_prefetch=0,
            grid=grid,
            in_specs=[
                # batch-tiled activations
                pl.BlockSpec((TB, CHW), lambda i: (i, 0)),
                pl.BlockSpec((TB, OUTER), lambda i: (i, 0)),
                # weights: constant index_map -> DMA'd once, resident across steps
                pl.BlockSpec((CHW, HIDDEN), lambda i: (0, 0)),
                pl.BlockSpec((HIDDEN, OUTER), lambda i: (0, 0)),
                pl.BlockSpec((OUTER, OUT_PAD), lambda i: (0, 0)),
                pl.BlockSpec((2, OUT_PAD), lambda i: (0, 0)),
            ],
            out_specs=pl.BlockSpec((TB, OUT_PAD), lambda i: (i, 0)),
        ),
        compiler_params=pltpu.CompilerParams(
            dimension_semantics=("parallel",)),
    )(pic_flat_f32, txt_tiled_bf16, pp["w1"], pp["expand"], pp["w23"], pp["bias"])


# --------------------- parameter construction / folding ----------------------
def prepare_params(raw):
    """Fold avg_pool2d(4) into fc1, fold the head into fc2, pack biases."""
    # avg_pool2d(4) is linear: w1_eff[c*H*W + h*W + w, :] = w1[c,hp,wp,:] / 16
    w1r = raw["w1"].reshape(C, HP, WP, HIDDEN)
    w1full = jnp.broadcast_to(
        w1r[:, :, None, :, None, :],
        (C, HP, POOL, WP, POOL, HIDDEN)) / float(POOL * POOL)
    w1eff = w1full.reshape(CHW, HIDDEN).astype(jnp.bfloat16)

    # 0/1 column-expansion matrix: expand[h, h*TXT : (h+1)*TXT] = 1
    expand = jnp.kron(jnp.eye(HIDDEN, dtype=jnp.float32),
                      jnp.ones((1, TXT), jnp.float32)).astype(jnp.bfloat16)

    # Fold the head into fc2 (exact: there is no activation between them),
    # then zero-pad the class dim 5 -> 128 for a lane-dense output slab.
    w23 = raw["w2"] @ raw["w3"]                    # (OUTER, OUT_CLASS) f32
    b23 = raw["b2"] @ raw["w3"] + raw["b3"]        # (1, OUT_CLASS)     f32
    w23p = jnp.zeros((OUTER, OUT_PAD), jnp.float32)
    w23p = w23p.at[:, :OUT_CLASS].set(w23).astype(jnp.bfloat16)

    # Pack b1 (padded into the first 128 lanes) and b23 into one (2, 128) block.
    bias = jnp.zeros((2, OUT_PAD), jnp.float32)
    bias = bias.at[0, :HIDDEN].set(raw["b1"][0])
    bias = bias.at[1, :OUT_CLASS].set(b23[0])

    return {"w1": w1eff, "expand": expand, "w23": w23p, "bias": bias}


# ------------------------------- forward --------------------------------------
@jax.jit
def multimodal_bilinear_forward(pic_features, text_pooler, prepped):
    # Contiguous reshape is free; bf16 cast of the picture happens in-kernel.
    pic_flat = pic_features.reshape(B, CHW)                            # (B, 2048) f32
    txt_tiled = jnp.tile(text_pooler.astype(jnp.bfloat16), (1, HIDDEN))  # (B, 1024) bf16
    out_pad = fused_forward_call(pic_flat, txt_tiled, prepped)         # (B, 128)
    return out_pad[:, :OUT_CLASS]                                      # (B, 5)


# ------------------------- pure-JAX reference checks --------------------------
def reference_matched(pic_features, text_pooler, pp):
    """Same math / same bf16 cast points as the kernel, but with the literal
    per-sample outer-product formulation (validates the expansion-matrix trick
    and the folded w23)."""
    pic_flat = pic_features.reshape(B, CHW).astype(jnp.bfloat16)
    b1 = pp["bias"][0:1, :HIDDEN]
    b23 = pp["bias"][1:2, :]
    pe = jnp.dot(pic_flat, pp["w1"], preferred_element_type=jnp.float32) + b1
    pe_b = pe.astype(jnp.bfloat16).astype(jnp.float32)
    txt_b = text_pooler.astype(jnp.bfloat16).astype(jnp.float32)
    outer = (pe_b[:, :, None] * txt_b[:, None, :]).reshape(B, OUTER)
    out = jnp.dot(outer.astype(jnp.bfloat16), pp["w23"],
                  preferred_element_type=jnp.float32) + b23
    return out[:, :OUT_CLASS]


def reference_f32(pic_features, text_pooler, raw):
    """Full-precision reference of the original torch semantics (loose check)."""
    pooled = pic_features.reshape(B, C, HP, POOL, WP, POOL).mean(axis=(3, 5))
    pe = pooled.reshape(B, FEAT) @ raw["w1"] + raw["b1"]
    outer = jnp.einsum("bh,bt->bht", pe, text_pooler).reshape(B, OUTER)
    h2 = outer @ raw["w2"] + raw["b2"]
    return h2 @ raw["w3"] + raw["b3"]


def make_params(key):
    ks = jax.random.split(key, 6)

    def lin(kw, kb, fan_in, fan_out):
        s = 1.0 / jnp.sqrt(fan_in)
        w = jax.random.uniform(kw, (fan_in, fan_out), jnp.float32, -s, s)
        b = jax.random.uniform(kb, (1, fan_out), jnp.float32, -s, s)
        return w, b

    w1, b1 = lin(ks[0], ks[1], FEAT, HIDDEN)
    w2, b2 = lin(ks[2], ks[3], HIDDEN * TXT, FC2_OUT)
    w3, b3 = lin(ks[4], ks[5], FC2_OUT, OUT_CLASS)
    return {"w1": w1, "b1": b1, "w2": w2, "b2": b2, "w3": w3, "b3": b3}


if __name__ == "__main__":
    key = jax.random.PRNGKey(0)
    k_pic, k_txt, k_par = jax.random.split(key, 3)

    # Stand-ins for pic_model(pictures) and BertModel(...)['pooler_output'].
    pic_features = jax.random.normal(k_pic, (B, C, H, W), jnp.float32)
    text_pooler = jax.random.normal(k_txt, (B, TXT), jnp.float32)
    raw_params = make_params(k_par)
    prepped = prepare_params(raw_params)

    out = multimodal_bilinear_forward(pic_features, text_pooler, prepped)
    out = jax.block_until_ready(out)
    assert out.shape == (B, OUT_CLASS)

    # tight check vs a precision-matched reference (same bf16 cast points / folds)
    ref_m = reference_matched(pic_features, text_pooler, prepped)
    assert jnp.allclose(out, ref_m, atol=1e-3, rtol=1e-3), "mismatch vs matched ref"

    # loose check vs the full-f32 original-semantics reference (bf16 tolerance)
    ref_f = reference_f32(pic_features, text_pooler, raw_params)
    assert jnp.allclose(out, ref_f, atol=2e-2, rtol=2e-2), "mismatch vs f32 ref"

    print("KERNEL_OK")
</pallas_src>

<mosaic_0001>
module attributes {stable_mosaic.version = 11 : i64} {
  func.func @_fused_kernel(%arg0: i32, %arg1: memref<8x2048xf32, #tpu.memory_space<vmem>>, %arg2: memref<8x1024xbf16, #tpu.memory_space<vmem>>, %arg3: memref<2048x32xbf16, #tpu.memory_space<vmem>>, %arg4: memref<32x1024xbf16, #tpu.memory_space<vmem>>, %arg5: memref<1024x128xbf16, #tpu.memory_space<vmem>>, %arg6: memref<2x128xf32, #tpu.memory_space<vmem>>, %arg7: memref<8x128xf32, #tpu.memory_space<vmem>>) attributes {dimension_semantics = [#tpu.dimension_semantics<parallel>], iteration_bounds = array<i64: 2>, scalar_prefetch = 0 : i64, scratch_operands = 0 : i64, tpu.core_type = #tpu.core_type<tc>, window_params = [{transform_indices = @transform_0, window_bounds = array<i64: 8, 2048>}, {transform_indices = @transform_1, window_bounds = array<i64: 8, 1024>}, {pipeline_mode = #tpu.pipeline_mode<synchronous>, transform_indices = @transform_2, window_bounds = array<i64: 2048, 32>}, {pipeline_mode = #tpu.pipeline_mode<synchronous>, transform_indices = @transform_3, window_bounds = array<i64: 32, 1024>}, {pipeline_mode = #tpu.pipeline_mode<synchronous>, transform_indices = @transform_4, window_bounds = array<i64: 1024, 128>}, {pipeline_mode = #tpu.pipeline_mode<synchronous>, transform_indices = @transform_5, window_bounds = array<i64: 2, 128>}, {transform_indices = @transform_6, window_bounds = array<i64: 8, 128>}]} {
    %c0 = arith.constant 0 : index
    %c0_0 = arith.constant 0 : index
    %0 = vector.load %arg6[%c0, %c0_0] : memref<2x128xf32, #tpu.memory_space<vmem>>, vector<1x32xf32>
    %c1 = arith.constant 1 : index
    %c0_1 = arith.constant 0 : index
    %1 = vector.load %arg6[%c1, %c0_1] : memref<2x128xf32, #tpu.memory_space<vmem>>, vector<1x128xf32>
    %c0_2 = arith.constant 0 : index
    %c0_3 = arith.constant 0 : index
    %2 = vector.load %arg1[%c0_2, %c0_3] : memref<8x2048xf32, #tpu.memory_space<vmem>>, vector<8x2048xf32>
    %3 = arith.truncf %2 : vector<8x2048xf32> to vector<8x2048xbf16>
    %c0_4 = arith.constant 0 : index
    %c0_5 = arith.constant 0 : index
    %4 = vector.load %arg3[%c0_4, %c0_5] : memref<2048x32xbf16, #tpu.memory_space<vmem>>, vector<2048x32xbf16>
    %cst = arith.constant dense<0.000000e+00> : vector<8x32xf32>
    %5 = tpu.matmul %3, %4, %cst {dimension_numbers = #tpu.dot_dimension_numbers<[1], [0], [0], [1], [0, 0, 1, 1], [], []>} : vector<8x2048xbf16>, vector<2048x32xbf16>, vector<8x32xf32> -> vector<8x32xf32>
    %6 = vector.broadcast %0 : vector<1x32xf32> to vector<8x32xf32>
    %7 = arith.addf %5, %6 : vector<8x32xf32>
    %8 = arith.truncf %7 : vector<8x32xf32> to vector<8x32xbf16>
    %c0_6 = arith.constant 0 : index
    %c0_7 = arith.constant 0 : index
    %9 = vector.load %arg4[%c0_6, %c0_7] : memref<32x1024xbf16, #tpu.memory_space<vmem>>, vector<32x1024xbf16>
    %cst_8 = arith.constant dense<0.000000e+00> : vector<8x1024xf32>
    %10 = tpu.matmul %8, %9, %cst_8 {dimension_numbers = #tpu.dot_dimension_numbers<[1], [0], [0], [1], [0, 0, 1, 1], [], []>} : vector<8x32xbf16>, vector<32x1024xbf16>, vector<8x1024xf32> -> vector<8x1024xf32>
    %c0_9 = arith.constant 0 : index
    %c0_10 = arith.constant 0 : index
    %11 = vector.load %arg2[%c0_9, %c0_10] : memref<8x1024xbf16, #tpu.memory_space<vmem>>, vector<8x1024xbf16>
    %12 = arith.extf %11 : vector<8x1024xbf16> to vector<8x1024xf32>
    %13 = arith.mulf %10, %12 : vector<8x1024xf32>
    %14 = arith.truncf %13 : vector<8x1024xf32> to vector<8x1024xbf16>
    %c0_11 = arith.constant 0 : index
    %c0_12 = arith.constant 0 : index
    %15 = vector.load %arg5[%c0_11, %c0_12] : memref<1024x128xbf16, #tpu.memory_space<vmem>>, vector<1024x128xbf16>
    %cst_13 = arith.constant dense<0.000000e+00> : vector<8x128xf32>
    %16 = tpu.matmul %14, %15, %cst_13 {dimension_numbers = #tpu.dot_dimension_numbers<[1], [0], [0], [1], [0, 0, 1, 1], [], []>} : vector<8x1024xbf16>, vector<1024x128xbf16>, vector<8x128xf32> -> vector<8x128xf32>
    %17 = vector.broadcast %1 : vector<1x128xf32> to vector<8x128xf32>
    %18 = arith.addf %16, %17 : vector<8x128xf32>
    %c0_14 = arith.constant 0 : index
    %c0_15 = arith.constant 0 : index
    %19 = vector.load %arg7[%c0_14, %c0_15] : memref<8x128xf32, #tpu.memory_space<vmem>>, vector<8x128xf32>
    tpu.vector_store %arg7[%c0_14, %c0_15], %18 {strides = array<i32>} : memref<8x128xf32, #tpu.memory_space<vmem>>, vector<8x128xf32>,
    return
  }
  func.func @transform_0(%arg0: i32) -> (i32, i32) {
    %c0_i32 = arith.constant 0 : i32
    %c0_i32_0 = arith.constant 0 : i32
    return %arg0, %c0_i32 : i32, i32
  }
  func.func @transform_1(%arg0: i32) -> (i32, i32) {
    %c0_i32 = arith.constant 0 : i32
    %c0_i32_0 = arith.constant 0 : i32
    return %arg0, %c0_i32 : i32, i32
  }
  func.func @transform_2(%arg0: i32) -> (i32, i32) {
    %c0_i32 = arith.constant 0 : i32
    %c0_i32_0 = arith.constant 0 : i32
    %c0_i32_1 = arith.constant 0 : i32
    return %c0_i32, %c0_i32_0 : i32, i32
  }
  func.func @transform_3(%arg0: i32) -> (i32, i32) {
    %c0_i32 = arith.constant 0 : i32
    %c0_i32_0 = arith.constant 0 : i32
    %c0_i32_1 = arith.constant 0 : i32
    return %c0_i32, %c0_i32_0 : i32, i32
  }
  func.func @transform_4(%arg0: i32) -> (i32, i32) {
    %c0_i32 = arith.constant 0 : i32
    %c0_i32_0 = arith.constant 0 : i32
    %c0_i32_1 = arith.constant 0 : i32
    return %c0_i32, %c0_i32_0 : i32, i32
  }
  func.func @transform_5(%arg0: i32) -> (i32, i32) {
    %c0_i32 = arith.constant 0 : i32
    %c0_i32_0 = arith.constant 0 : i32
    %c0_i32_1 = arith.constant 0 : i32
    return %c0_i32, %c0_i32_0 : i32, i32
  }
  func.func @transform_6(%arg0: i32) -> (i32, i32) {
    %c0_i32 = arith.constant 0 : i32
    %c0_i32_0 = arith.constant 0 : i32
    return %arg0, %c0_i32 : i32, i32
  }
}

</mosaic_0001>

<llo_original>
// kernel: tile.9
$region0: #{tile.9}
  %s0 = inlined_call_operand.vmem [shape: bf16[16,32,32], index: 0, kind: input, shape index: {}]
  %s1 = inlined_call_operand.vmem [shape: bf16[16,1024], index: 1, kind: output, shape index: {}]
  $region1: #{tile.9} parent=0
    #allocation0 [shape = 'u8[65536]{0}', space=vmem, size = 0x10000, scoped, tag = 'scoped mem for output reshape']
    #allocation1 [shape = 'u8[262144]{0}', space=vmem, size = 0x40000, scoped, tag = 'scoped mem for input reshape']
    %s3 = ssub.s32 256, 1
    %s4 = scalar_lea.vmem %s0, 252
    %s5 = sshrl.u32 %s3, 1
    %s6 = sor.u32 %s3, %s5
    %s7 = sand.u32 %s6, 85
    %s8 = sshrl.u32 %s7, 1
    %s9 = sor.u32 %s7, %s8
    %s10 = sand.u32 51, %s9
    %s11 = sshrl.u32 %s10, 2
    %s12 = sor.u32 %s10, %s11
    %s13 = sand.u32 15, %s12
    %v14 = vld [vmem:[%s4] sm:%s13]
    %v15 = vunpack.c.l.bf16 %v14
    %v16 = vunpack.c.h.bf16 %v14
    %s17 = scalar_lea.vmem [#allocation1], 504
    %18 = vst [vmem:[%s17] sm:%s3] %v15
    %s19 = scalar_lea.vmem %s0, 248
    %s20 = sshrl.u32 %s3, 1
    %s21 = sor.u32 %s3, %s20
    %s22 = sand.u32 %s21, 85
    %s23 = sshrl.u32 %s22, 1
    %s24 = sor.u32 %s22, %s23
    %s25 = sand.u32 51, %s24
    %s26 = sshrl.u32 %s25, 2
    %s27 = sor.u32 %s25, %s26
    %s28 = sand.u32 15, %s27
    %v29 = vld [vmem:[%s19] sm:%s28]
    %v30 = vunpack.c.l.bf16 %v29
    %v31 = vunpack.c.h.bf16 %v29
    %s32 = scalar_lea.vmem [#allocation1], 496
    %33 = vst [vmem:[%s32] sm:%s3] %v30
    %s34 = scalar_lea.vmem %s0, 244
    %s35 = sshrl.u32 %s3, 1
    %s36 = sor.u32 %s3, %s35
    %s37 = sand.u32 %s36, 85
    %s38 = sshrl.u32 %s37, 1
    %s39 = sor.u32 %s37, %s38
    %s40 = sand.u32 51, %s39
    %s41 = sshrl.u32 %s40, 2
    %s42 = sor.u32 %s40, %s41
    %s43 = sand.u32 15, %s42
    %v44 = vld [vmem:[%s34] sm:%s43]
    %v45 = vunpack.c.l.bf16 %v44
    %v46 = vunpack.c.h.bf16 %v44
    %s47 = scalar_lea.vmem [#allocation1], 488
    %48 = vst [vmem:[%s47] sm:%s3] %v45
    %s49 = scalar_lea.vmem %s0, 240
    %s50 = sshrl.u32 %s3, 1
    %s51 = sor.u32 %s3, %s50
    %s52 = sand.u32 %s51, 85
    %s53 = sshrl.u32 %s52, 1
    %s54 = sor.u32 %s52, %s53
    %s55 = sand.u32 51, %s54
    %s56 = sshrl.u32 %s55, 2
    %s57 = sor.u32 %s55, %s56
    %s58 = sand.u32 15, %s57
    %v59 = vld [vmem:[%s49] sm:%s58]
    %v60 = vunpack.c.l.bf16 %v59
    %v61 = vunpack.c.h.bf16 %v59
    %s62 = scalar_lea.vmem [#allocation1], 480
    %63 = vst [vmem:[%s62] sm:%s3] %v60
    %s64 = scalar_lea.vmem %s0, 236
    %s65 = sshrl.u32 %s3, 1
    %s66 = sor.u32 %s3, %s65
    %s67 = sand.u32 %s66, 85
    %s68 = sshrl.u32 %s67, 1
    %s69 = sor.u32 %s67, %s68
    %s70 = sand.u32 51, %s69
    %s71 = sshrl.u32 %s70, 2
    %s72 = sor.u32 %s70, %s71
    %s73 = sand.u32 15, %s72
    %v74 = vld [vmem:[%s64] sm:%s73]
    %v75 = vunpack.c.l.bf16 %v74
    %v76 = vunpack.c.h.bf16 %v74
    %s77 = scalar_lea.vmem [#allocation1], 472
    %78 = vst [vmem:[%s77] sm:%s3] %v75
    %s79 = scalar_lea.vmem %s0, 232
    %s80 = sshrl.u32 %s3, 1
    %s81 = sor.u32 %s3, %s80
    %s82 = sand.u32 %s81, 85
    %s83 = sshrl.u32 %s82, 1
    %s84 = sor.u32 %s82, %s83
    %s85 = sand.u32 51, %s84
    %s86 = sshrl.u32 %s85, 2
    %s87 = sor.u32 %s85, %s86
    %s88 = sand.u32 15, %s87
    %v89 = vld [vmem:[%s79] sm:%s88]
    %v90 = vunpack.c.l.bf16 %v89
    %v91 = vunpack.c.h.bf16 %v89
    %s92 = scalar_lea.vmem [#allocation1], 464
    %93 = vst [vmem:[%s92] sm:%s3] %v90
    %s94 = scalar_lea.vmem %s0, 228
    %s95 = sshrl.u32 %s3, 1
    %s96 = sor.u32 %s3, %s95
    %s97 = sand.u32 %s96, 85
    %s98 = sshrl.u32 %s97, 1
    %s99 = sor.u32 %s97, %s98
    %s100 = sand.u32 51, %s99
    %s101 = sshrl.u32 %s100, 2
    %s102 = sor.u32 %s100, %s101
    %s103 = sand.u32 15, %s102
    %v104 = vld [vmem:[%s94] sm:%s103]
    %v105 = vunpack.c.l.bf16 %v104
    %v106 = vunpack.c.h.bf16 %v104
    %s107 = scalar_lea.vmem [#allocation1], 456
    %108 = vst [vmem:[%s107] sm:%s3] %v105
    %s109 = scalar_lea.vmem %s0, 224
    %s110 = sshrl.u32 %s3, 1
    %s111 = sor.u32 %s3, %s110
    %s112 = sand.u32 %s111, 85
    %s113 = sshrl.u32 %s112, 1
    %s114 = sor.u32 %s112, %s113
    %s115 = sand.u32 51, %s114
    %s116 = sshrl.u32 %s115, 2
    %s117 = sor.u32 %s115, %s116
    %s118 = sand.u32 15, %s117
    %v119 = vld [vmem:[%s109] sm:%s118]
    %v120 = vunpack.c.l.bf16 %v119
    %v121 = vunpack.c.h.bf16 %v119
    %s122 = scalar_lea.vmem [#allocation1], 448
    %123 = vst [vmem:[%s122] sm:%s3] %v120
    %s124 = scalar_lea.vmem %s0, 220
    %s125 = sshrl.u32 %s3, 1
    %s126 = sor.u32 %s3, %s125
    %s127 = sand.u32 %s126, 85
    %s128 = sshrl.u32 %s127, 1
    %s129 = sor.u32 %s127, %s128
    %s130 = sand.u32 51, %s129
    %s131 = sshrl.u32 %s130, 2
    %s132 = sor.u32 %s130, %s131
    %s133 = sand.u32 15, %s132
    %v134 = vld [vmem:[%s124] sm:%s133]
    %v135 = vunpack.c.l.bf16 %v134
    %v136 = vunpack.c.h.bf16 %v134
    %s137 = scalar_lea.vmem [#allocation1], 440
    %138 = vst [vmem:[%s137] sm:%s3] %v135
    %s139 = scalar_lea.vmem %s0, 216
    %s140 = sshrl.u32 %s3, 1
    %s141 = sor.u32 %s3, %s140
    %s142 = sand.u32 %s141, 85
    %s143 = sshrl.u32 %s142, 1
    %s144 = sor.u32 %s142, %s143
    %s145 = sand.u32 51, %s144
    %s146 = sshrl.u32 %s145, 2
    %s147 = sor.u32 %s145, %s146
    %s148 = sand.u32 15, %s147
    %v149 = vld [vmem:[%s139] sm:%s148]
    %v150 = vunpack.c.l.bf16 %v149
    %v151 = vunpack.c.h.bf16 %v149
    %s152 = scalar_lea.vmem [#allocation1], 432
    %153 = vst [vmem:[%s152] sm:%s3] %v150
    %s154 = scalar_lea.vmem %s0, 212
    %s155 = sshrl.u32 %s3, 1
    %s156 = sor.u32 %s3, %s155
    %s157 = sand.u32 %s156, 85
    %s158 = sshrl.u32 %s157, 1
    %s159 = sor.u32 %s157, %s158
    %s160 = sand.u32 51, %s159
    %s161 = sshrl.u32 %s160, 2
    %s162 = sor.u32 %s160, %s161
    %s163 = sand.u32 15, %s162
    %v164 = vld [vmem:[%s154] sm:%s163]
    %v165 = vunpack.c.l.bf16 %v164
    %v166 = vunpack.c.h.bf16 %v164
    %s167 = scalar_lea.vmem [#allocation1], 424
    %168 = vst [vmem:[%s167] sm:%s3] %v165
    %s169 = scalar_lea.vmem %s0, 208
    %s170 = sshrl.u32 %s3, 1
    %s171 = sor.u32 %s3, %s170
    %s172 = sand.u32 %s171, 85
    %s173 = sshrl.u32 %s172, 1
    %s174 = sor.u32 %s172, %s173
    %s175 = sand.u32 51, %s174
    %s176 = sshrl.u32 %s175, 2
    %s177 = sor.u32 %s175, %s176
    %s178 = sand.u32 15, %s177
    %v179 = vld [vmem:[%s169] sm:%s178]
    %v180 = vunpack.c.l.bf16 %v179
    %v181 = vunpack.c.h.bf16 %v179
    %s182 = scalar_lea.vmem [#allocation1], 416
    %183 = vst [vmem:[%s182] sm:%s3] %v180
    %s184 = scalar_lea.vmem %s0, 204
    %s185 = sshrl.u32 %s3, 1
    %s186 = sor.u32 %s3, %s185
    %s187 = sand.u32 %s186, 85
    %s188 = sshrl.u32 %s187, 1
    %s189 = sor.u32 %s187, %s188
    %s190 = sand.u32 51, %s189
    %s191 = sshrl.u32 %s190, 2
    %s192 = sor.u32 %s190, %s191
    %s193 = sand.u32 15, %s192
    %v194 = vld [vmem:[%s184] sm:%s193]
    %v195 = vunpack.c.l.bf16 %v194
    %v196 = vunpack.c.h.bf16 %v194
    %s197 = scalar_lea.vmem [#allocation1], 408
    %198 = vst [vmem:[%s197] sm:%s3] %v195
    %s199 = scalar_lea.vmem %s0, 200
    %s200 = sshrl.u32 %s3, 1
    %s201 = sor.u32 %s3, %s200
    %s202 = sand.u32 %s201, 85
    %s203 = sshrl.u32 %s202, 1
    %s204 = sor.u32 %s202, %s203
    %s205 = sand.u32 51, %s204
    %s206 = sshrl.u32 %s205, 2
    %s207 = sor.u32 %s205, %s206
    %s208 = sand.u32 15, %s207
    %v209 = vld [vmem:[%s199] sm:%s208]
    %v210 = vunpack.c.l.bf16 %v209
    %v211 = vunpack.c.h.bf16 %v209
    %s212 = scalar_lea.vmem [#allocation1], 400
    %213 = vst [vmem:[%s212] sm:%s3] %v210
    %s214 = scalar_lea.vmem %s0, 196
    %s215 = sshrl.u32 %s3, 1
    %s216 = sor.u32 %s3, %s215
    %s217 = sand.u32 %s216, 85
    %s218 = sshrl.u32 %s217, 1
    %s219 = sor.u32 %s217, %s218
    %s220 = sand.u32 51, %s219
    %s221 = sshrl.u32 %s220, 2
    %s222 = sor.u32 %s220, %s221
    %s223 = sand.u32 15, %s222
    %v224 = vld [vmem:[%s214] sm:%s223]
    %v225 = vunpack.c.l.bf16 %v224
    %v226 = vunpack.c.h.bf16 %v224
    %s227 = scalar_lea.vmem [#allocation1], 392
    %228 = vst [vmem:[%s227] sm:%s3] %v225
    %s229 = scalar_lea.vmem %s0, 192
    %s230 = sshrl.u32 %s3, 1
    %s231 = sor.u32 %s3, %s230
    %s232 = sand.u32 %s231, 85
    %s233 = sshrl.u32 %s232, 1
    %s234 = sor.u32 %s232, %s233
    %s235 = sand.u32 51, %s234
    %s236 = sshrl.u32 %s235, 2
    %s237 = sor.u32 %s235, %s236
    %s238 = sand.u32 15, %s237
    %v239 = vld [vmem:[%s229] sm:%s238]
    %v240 = vunpack.c.l.bf16 %v239
    %v241 = vunpack.c.h.bf16 %v239
    %s242 = scalar_lea.vmem [#allocation1], 384
    %243 = vst [vmem:[%s242] sm:%s3] %v240
    %s244 = scalar_lea.vmem %s0, 188
    %s245 = sshrl.u32 %s3, 1
    %s246 = sor.u32 %s3, %s245
    %s247 = sand.u32 %s246, 85
    %s248 = sshrl.u32 %s247, 1
    %s249 = sor.u32 %s247, %s248
    %s250 = sand.u32 51, %s249
    %s251 = sshrl.u32 %s250, 2
    %s252 = sor.u32 %s250, %s251
    %s253 = sand.u32 15, %s252
    %v254 = vld [vmem:[%s244] sm:%s253]
    %v255 = vunpack.c.l.bf16 %v254
    %v256 = vunpack.c.h.bf16 %v254
    %s257 = scalar_lea.vmem [#allocation1], 376
    %258 = vst [vmem:[%s257] sm:%s3] %v255
    %s259 = scalar_lea.vmem %s0, 184
    %s260 = sshrl.u32 %s3, 1
    %s261 = sor.u32 %s3, %s260
    %s262 = sand.u32 %s261, 85
    %s263 = sshrl.u32 %s262, 1
    %s264 = sor.u32 %s262, %s263
    %s265 = sand.u32 51, %s264
    %s266 = sshrl.u32 %s265, 2
    %s267 = sor.u32 %s265, %s266
    %s268 = sand.u32 15, %s267
    %v269 = vld [vmem:[%s259] sm:%s268]
    %v270 = vunpack.c.l.bf16 %v269
    %v271 = vunpack.c.h.bf16 %v269
    %s272 = scalar_lea.vmem [#allocation1], 368
    %273 = vst [vmem:[%s272] sm:%s3] %v270
    %s274 = scalar_lea.vmem %s0, 180
    %s275 = sshrl.u32 %s3, 1
    %s276 = sor.u32 %s3, %s275
    %s277 = sand.u32 %s276, 85
    %s278 = sshrl.u32 %s277, 1
    %s279 = sor.u32 %s277, %s278
    %s280 = sand.u32 51, %s279
    %s281 = sshrl.u32 %s280, 2
    %s282 = sor.u32 %s280, %s281
    %s283 = sand.u32 15, %s282
    %v284 = vld [vmem:[%s274] sm:%s283]
    %v285 = vunpack.c.l.bf16 %v284
    %v286 = vunpack.c.h.bf16 %v284
    %s287 = scalar_lea.vmem [#allocation1], 360
    %288 = vst [vmem:[%s287] sm:%s3] %v285
    %s289 = scalar_lea.vmem %s0, 176
    %s290 = sshrl.u32 %s3, 1
    %s291 = sor.u32 %s3, %s290
    %s292 = sand.u32 %s291, 85
    %s293 = sshrl.u32 %s292, 1
    %s294 = sor.u32 %s292, %s293
    %s295 = sand.u32 51, %s294
    %s296 = sshrl.u32 %s295, 2
    %s297 = sor.u32 %s295, %s296
    %s298 = sand.u32 15, %s297
    %v299 = vld [vmem:[%s289] sm:%s298]
    %v300 = vunpack.c.l.bf16 %v299
    %v301 = vunpack.c.h.bf16 %v299
    %s302 = scalar_lea.vmem [#allocation1], 352
    %303 = vst [vmem:[%s302] sm:%s3] %v300
    %s304 = scalar_lea.vmem %s0, 172
    %s305 = sshrl.u32 %s3, 1
    %s306 = sor.u32 %s3, %s305
    %s307 = sand.u32 %s306, 85
    %s308 = sshrl.u32 %s307, 1
    %s309 = sor.u32 %s307, %s308
    %s310 = sand.u32 51, %s309
    %s311 = sshrl.u32 %s310, 2
    %s312 = sor.u32 %s310, %s311
    %s313 = sand.u32 15, %s312
    %v314 = vld [vmem:[%s304] sm:%s313]
    %v315 = vunpack.c.l.bf16 %v314
    %v316 = vunpack.c.h.bf16 %v314
    %s317 = scalar_lea.vmem [#allocation1], 344
    %318 = vst [vmem:[%s317] sm:%s3] %v315
    %s319 = scalar_lea.vmem %s0, 168
    %s320 = sshrl.u32 %s3, 1
    %s321 = sor.u32 %s3, %s320
    %s322 = sand.u32 %s321, 85
    %s323 = sshrl.u32 %s322, 1
    %s324 = sor.u32 %s322, %s323
    %s325 = sand.u32 51, %s324
    %s326 = sshrl.u32 %s325, 2
    %s327 = sor.u32 %s325, %s326
    %s328 = sand.u32 15, %s327
    %v329 = vld [vmem:[%s319] sm:%s328]
    %v330 = vunpack.c.l.bf16 %v329
    %v331 = vunpack.c.h.bf16 %v329
    %s332 = scalar_lea.vmem [#allocation1], 336
    %333 = vst [vmem:[%s332] sm:%s3] %v330
    %s334 = scalar_lea.vmem %s0, 164
    %s335 = sshrl.u32 %s3, 1
    %s336 = sor.u32 %s3, %s335
    %s337 = sand.u32 %s336, 85
    %s338 = sshrl.u32 %s337, 1
    %s339 = sor.u32 %s337, %s338
    %s340 = sand.u32 51, %s339
    %s341 = sshrl.u32 %s340, 2
    %s342 = sor.u32 %s340, %s341
    %s343 = sand.u32 15, %s342
    %v344 = vld [vmem:[%s334] sm:%s343]
    %v345 = vunpack.c.l.bf16 %v344
    %v346 = vunpack.c.h.bf16 %v344
    %s347 = scalar_lea.vmem [#allocation1], 328
    %348 = vst [vmem:[%s347] sm:%s3] %v345
    %s349 = scalar_lea.vmem %s0, 160
    %s350 = sshrl.u32 %s3, 1
    %s351 = sor.u32 %s3, %s350
    %s352 = sand.u32 %s351, 85
    %s353 = sshrl.u32 %s352, 1
    %s354 = sor.u32 %s352, %s353
    %s355 = sand.u32 51, %s354
    %s356 = sshrl.u32 %s355, 2
    %s357 = sor.u32 %s355, %s356
    %s358 = sand.u32 15, %s357
    %v359 = vld [vmem:[%s349] sm:%s358]
    %v360 = vunpack.c.l.bf16 %v359
    %v361 = vunpack.c.h.bf16 %v359
    %s362 = scalar_lea.vmem [#allocation1], 320
    %363 = vst [vmem:[%s362] sm:%s3] %v360
    %s364 = scalar_lea.vmem %s0, 156
    %s365 = sshrl.u32 %s3, 1
    %s366 = sor.u32 %s3, %s365
    %s367 = sand.u32 %s366, 85
    %s368 = sshrl.u32 %s367, 1
    %s369 = sor.u32 %s367, %s368
    %s370 = sand.u32 51, %s369
    %s371 = sshrl.u32 %s370, 2
    %s372 = sor.u32 %s370, %s371
    %s373 = sand.u32 15, %s372
    %v374 = vld [vmem:[%s364] sm:%s373]
    %v375 = vunpack.c.l.bf16 %v374
    %v376 = vunpack.c.h.bf16 %v374
    %s377 = scalar_lea.vmem [#allocation1], 312
    %378 = vst [vmem:[%s377] sm:%s3] %v375
    %s379 = scalar_lea.vmem %s0, 152
    %s380 = sshrl.u32 %s3, 1
    %s381 = sor.u32 %s3, %s380
    %s382 = sand.u32 %s381, 85
    %s383 = sshrl.u32 %s382, 1
    %s384 = sor.u32 %s382, %s383
    %s385 = sand.u32 51, %s384
    %s386 = sshrl.u32 %s385, 2
    %s387 = sor.u32 %s385, %s386
    %s388 = sand.u32 15, %s387
    %v389 = vld [vmem:[%s379] sm:%s388]
    %v390 = vunpack.c.l.bf16 %v389
    %v391 = vunpack.c.h.bf16 %v389
    %s392 = scalar_lea.vmem [#allocation1], 304
    %393 = vst [vmem:[%s392] sm:%s3] %v390
    %s394 = scalar_lea.vmem %s0, 148
    %s395 = sshrl.u32 %s3, 1
    %s396 = sor.u32 %s3, %s395
    %s397 = sand.u32 %s396, 85
    %s398 = sshrl.u32 %s397, 1
    %s399 = sor.u32 %s397, %s398
    %s400 = sand.u32 51, %s399
    %s401 = sshrl.u32 %s400, 2
    %s402 = sor.u32 %s400, %s401
    %s403 = sand.u32 15, %s402
    %v404 = vld [vmem:[%s394] sm:%s403]
    %v405 = vunpack.c.l.bf16 %v404
    %v406 = vunpack.c.h.bf16 %v404
    %s407 = scalar_lea.vmem [#allocation1], 296
    %408 = vst [vmem:[%s407] sm:%s3] %v405
    %s409 = scalar_lea.vmem %s0, 144
    %s410 = sshrl.u32 %s3, 1
    %s411 = sor.u32 %s3, %s410
    %s412 = sand.u32 %s411, 85
    %s413 = sshrl.u32 %s412, 1
    %s414 = sor.u32 %s412, %s413
    %s415 = sand.u32 51, %s414
    %s416 = sshrl.u32 %s415, 2
    %s417 = sor.u32 %s415, %s416
    %s418 = sand.u32 15, %s417
    %v419 = vld [vmem:[%s409] sm:%s418]
    %v420 = vunpack.c.l.bf16 %v419
    %v421 = vunpack.c.h.bf16 %v419
    %s422 = scalar_lea.vmem [#allocation1], 288
    %423 = vst [vmem:[%s422] sm:%s3] %v420
    %s424 = scalar_lea.vmem %s0, 140
    %s425 = sshrl.u32 %s3, 1
    %s426 = sor.u32 %s3, %s425
    %s427 = sand.u32 %s426, 85
    %s428 = sshrl.u32 %s427, 1
    %s429 = sor.u32 %s427, %s428
    %s430 = sand.u32 51, %s429
    %s431 = sshrl.u32 %s430, 2
    %s432 = sor.u32 %s430, %s431
    %s433 = sand.u32 15, %s432
    %v434 = vld [vmem:[%s424] sm:%s433]
    %v435 = vunpack.c.l.bf16 %v434
    %v436 = vunpack.c.h.bf16 %v434
    %s437 = scalar_lea.vmem [#allocation1], 280
    %438 = vst [vmem:[%s437] sm:%s3] %v435
    %s439 = scalar_lea.vmem %s0, 136
    %s440 = sshrl.u32 %s3, 1
    %s441 = sor.u32 %s3, %s440
    %s442 = sand.u32 %s441, 85
    %s443 = sshrl.u32 %s442, 1
    %s444 = sor.u32 %s442, %s443
    %s445 = sand.u32 51, %s444
    %s446 = sshrl.u32 %s445, 2
    %s447 = sor.u32 %s445, %s446
    %s448 = sand.u32 15, %s447
    %v449 = vld [vmem:[%s439] sm:%s448]
    %v450 = vunpack.c.l.bf16 %v449
    %v451 = vunpack.c.h.bf16 %v449
    %s452 = scalar_lea.vmem [#allocation1], 272
    %453 = vst [vmem:[%s452] sm:%s3] %v450
    %s454 = scalar_lea.vmem %s0, 132
    %s455 = sshrl.u32 %s3, 1
    %s456 = sor.u32 %s3, %s455
    %s457 = sand.u32 %s456, 85
    %s458 = sshrl.u32 %s457, 1
    %s459 = sor.u32 %s457, %s458
    %s460 = sand.u32 51, %s459
    %s461 = sshrl.u32 %s460, 2
    %s462 = sor.u32 %s460, %s461
    %s463 = sand.u32 15, %s462
    %v464 = vld [vmem:[%s454] sm:%s463]
    %v465 = vunpack.c.l.bf16 %v464
    %v466 = vunpack.c.h.bf16 %v464
    %s467 = scalar_lea.vmem [#allocation1], 264
    %468 = vst [vmem:[%s467] sm:%s3] %v465
    %s469 = scalar_lea.vmem %s0, 128
    %s470 = sshrl.u32 %s3, 1
    %s471 = sor.u32 %s3, %s470
    %s472 = sand.u32 %s471, 85
    %s473 = sshrl.u32 %s472, 1
    %s474 = sor.u32 %s472, %s473
    %s475 = sand.u32 51, %s474
    %s476 = sshrl.u32 %s475, 2
    %s477 = sor.u32 %s475, %s476
    %s478 = sand.u32 15, %s477
    %v479 = vld [vmem:[%s469] sm:%s478]
    %v480 = vunpack.c.l.bf16 %v479
    %v481 = vunpack.c.h.bf16 %v479
    %s482 = scalar_lea.vmem [#allocation1], 256
    %483 = vst [vmem:[%s482] sm:%s3] %v480
    %s484 = scalar_lea.vmem %s0, 124
    %s485 = sshrl.u32 %s3, 1
    %s486 = sor.u32 %s3, %s485
    %s487 = sand.u32 %s486, 85
    %s488 = sshrl.u32 %s487, 1
    %s489 = sor.u32 %s487, %s488
    %s490 = sand.u32 51, %s489
    %s491 = sshrl.u32 %s490, 2
    %s492 = sor.u32 %s490, %s491
    %s493 = sand.u32 15, %s492
    %v494 = vld [vmem:[%s484] sm:%s493]
    %v495 = vunpack.c.l.bf16 %v494
    %v496 = vunpack.c.h.bf16 %v494
    %s497 = scalar_lea.vmem [#allocation1], 248
    %498 = vst [vmem:[%s497] sm:%s3] %v495
    %s499 = scalar_lea.vmem %s0, 120
    %s500 = sshrl.u32 %s3, 1
    %s501 = sor.u32 %s3, %s500
    %s502 = sand.u32 %s501, 85
    %s503 = sshrl.u32 %s502, 1
    %s504 = sor.u32 %s502, %s503
    %s505 = sand.u32 51, %s504
    %s506 = sshrl.u32 %s505, 2
    %s507 = sor.u32 %s505, %s506
    %s508 = sand.u32 15, %s507
    %v509 = vld [vmem:[%s499] sm:%s508]
    %v510 = vunpack.c.l.bf16 %v509
    %v511 = vunpack.c.h.bf16 %v509
    %s512 = scalar_lea.vmem [#allocation1], 240
    %513 = vst [vmem:[%s512] sm:%s3] %v510
    %s514 = scalar_lea.vmem %s0, 116
    %s515 = sshrl.u32 %s3, 1
    %s516 = sor.u32 %s3, %s515
    %s517 = sand.u32 %s516, 85
    %s518 = sshrl.u32 %s517, 1
    %s519 = sor.u32 %s517, %s518
    %s520 = sand.u32 51, %s519
    %s521 = sshrl.u32 %s520, 2
    %s522 = sor.u32 %s520, %s521
    %s523 = sand.u32 15, %s522
    %v524 = vld [vmem:[%s514] sm:%s523]
    %v525 = vunpack.c.l.bf16 %v524
    %v526 = vunpack.c.h.bf16 %v524
    %s527 = scalar_lea.vmem [#allocation1], 232
    %528 = vst [vmem:[%s527] sm:%s3] %v525
    %s529 = scalar_lea.vmem %s0, 112
    %s530 = sshrl.u32 %s3, 1
    %s531 = sor.u32 %s3, %s530
    %s532 = sand.u32 %s531, 85
    %s533 = sshrl.u32 %s532, 1
    %s534 = sor.u32 %s532, %s533
    %s535 = sand.u32 51, %s534
    %s536 = sshrl.u32 %s535, 2
    %s537 = sor.u32 %s535, %s536
    %s538 = sand.u32 15, %s537
    %v539 = vld [vmem:[%s529] sm:%s538]
    %v540 = vunpack.c.l.bf16 %v539
    %v541 = vunpack.c.h.bf16 %v539
    %s542 = scalar_lea.vmem [#allocation1], 224
    %543 = vst [vmem:[%s542] sm:%s3] %v540
    %s544 = scalar_lea.vmem %s0, 108
    %s545 = sshrl.u32 %s3, 1
    %s546 = sor.u32 %s3, %s545
    %s547 = sand.u32 %s546, 85
    %s548 = sshrl.u32 %s547, 1
    %s549 = sor.u32 %s547, %s548
    %s550 = sand.u32 51, %s549
    %s551 = sshrl.u32 %s550, 2
    %s552 = sor.u32 %s550, %s551
    %s553 = sand.u32 15, %s552
    %v554 = vld [vmem:[%s544] sm:%s553]
    %v555 = vunpack.c.l.bf16 %v554
    %v556 = vunpack.c.h.bf16 %v554
    %s557 = scalar_lea.vmem [#allocation1], 216
    %558 = vst [vmem:[%s557] sm:%s3] %v555
    %s559 = scalar_lea.vmem %s0, 104
    %s560 = sshrl.u32 %s3, 1
    %s561 = sor.u32 %s3, %s560
    %s562 = sand.u32 %s561, 85
    %s563 = sshrl.u32 %s562, 1
    %s564 = sor.u32 %s562, %s563
    %s565 = sand.u32 51, %s564
    %s566 = sshrl.u32 %s565, 2
    %s567 = sor.u32 %s565, %s566
    %s568 = sand.u32 15, %s567
    %v569 = vld [vmem:[%s559] sm:%s568]
    %v570 = vunpack.c.l.bf16 %v569
    %v571 = vunpack.c.h.bf16 %v569
    %s572 = scalar_lea.vmem [#allocation1], 208
    %573 = vst [vmem:[%s572] sm:%s3] %v570
    %s574 = scalar_lea.vmem %s0, 100
    %s575 = sshrl.u32 %s3, 1
    %s576 = sor.u32 %s3, %s575
    %s577 = sand.u32 %s576, 85
    %s578 = sshrl.u32 %s577, 1
    %s579 = sor.u32 %s577, %s578
    %s580 = sand.u32 51, %s579
    %s581 = sshrl.u32 %s580, 2
    %s582 = sor.u32 %s580, %s581
    %s583 = sand.u32 15, %s582
    %v584 = vld [vmem:[%s574] sm:%s583]
    %v585 = vunpack.c.l.bf16 %v584
    %v586 = vunpack.c.h.bf16 %v584
    %s587 = scalar_lea.vmem [#allocation1], 200
    %588 = vst [vmem:[%s587] sm:%s3] %v585
    %s589 = scalar_lea.vmem %s0, 96
    %s590 = sshrl.u32 %s3, 1
    %s591 = sor.u32 %s3, %s590
    %s592 = sand.u32 %s591, 85
    %s593 = sshrl.u32 %s592, 1
    %s594 = sor.u32 %s592, %s593
    %s595 = sand.u32 51, %s594
    %s596 = sshrl.u32 %s595, 2
    %s597 = sor.u32 %s595, %s596
    %s598 = sand.u32 15, %s597
    %v599 = vld [vmem:[%s589] sm:%s598]
    %v600 = vunpack.c.l.bf16 %v599
    %v601 = vunpack.c.h.bf16 %v599
    %s602 = scalar_lea.vmem [#allocation1], 192
    %603 = vst [vmem:[%s602] sm:%s3] %v600
    %s604 = scalar_lea.vmem %s0, 92
    %s605 = sshrl.u32 %s3, 1
    %s606 = sor.u32 %s3, %s605
    %s607 = sand.u32 %s606, 85
    %s608 = sshrl.u32 %s607, 1
    %s609 = sor.u32 %s607, %s608
    %s610 = sand.u32 51, %s609
    %s611 = sshrl.u32 %s610, 2
    %s612 = sor.u32 %s610, %s611
    %s613 = sand.u32 15, %s612
    %v614 = vld [vmem:[%s604] sm:%s613]
    %v615 = vunpack.c.l.bf16 %v614
    %v616 = vunpack.c.h.bf16 %v614
    %s617 = scalar_lea.vmem [#allocation1], 184
    %618 = vst [vmem:[%s617] sm:%s3] %v615
    %s619 = scalar_lea.vmem %s0, 88
    %s620 = sshrl.u32 %s3, 1
    %s621 = sor.u32 %s3, %s620
    %s622 = sand.u32 %s621, 85
    %s623 = sshrl.u32 %s622, 1
    %s624 = sor.u32 %s622, %s623
    %s625 = sand.u32 51, %s624
    %s626 = sshrl.u32 %s625, 2
    %s627 = sor.u32 %s625, %s626
    %s628 = sand.u32 15, %s627
    %v629 = vld [vmem:[%s619] sm:%s628]
    %v630 = vunpack.c.l.bf16 %v629
    %v631 = vunpack.c.h.bf16 %v629
    %s632 = scalar_lea.vmem [#allocation1], 176
    %633 = vst [vmem:[%s632] sm:%s3] %v630
    %s634 = scalar_lea.vmem %s0, 84
    %s635 = sshrl.u32 %s3, 1
    %s636 = sor.u32 %s3, %s635
    %s637 = sand.u32 %s636, 85
    %s638 = sshrl.u32 %s637, 1
    %s639 = sor.u32 %s637, %s638
    %s640 = sand.u32 51, %s639
    %s641 = sshrl.u32 %s640, 2
    %s642 = sor.u32 %s640, %s641
    %s643 = sand.u32 15, %s642
    %v644 = vld [vmem:[%s634] sm:%s643]
    %v645 = vunpack.c.l.bf16 %v644
    %v646 = vunpack.c.h.bf16 %v644
    %s647 = scalar_lea.vmem [#allocation1], 168
    %648 = vst [vmem:[%s647] sm:%s3] %v645
    %s649 = scalar_lea.vmem %s0, 80
    %s650 = sshrl.u32 %s3, 1
    %s651 = sor.u32 %s3, %s650
    %s652 = sand.u32 %s651, 85
    %s653 = sshrl.u32 %s652, 1
    %s654 = sor.u32 %s652, %s653
    %s655 = sand.u32 51, %s654
    %s656 = sshrl.u32 %s655, 2
    %s657 = sor.u32 %s655, %s656
    %s658 = sand.u32 15, %s657
    %v659 = vld [vmem:[%s649] sm:%s658]
    %v660 = vunpack.c.l.bf16 %v659
    %v661 = vunpack.c.h.bf16 %v659
    %s662 = scalar_lea.vmem [#allocation1], 160
    %663 = vst [vmem:[%s662] sm:%s3] %v660
    %s664 = scalar_lea.vmem %s0, 76
    %s665 = sshrl.u32 %s3, 1
    %s666 = sor.u32 %s3, %s665
    %s667 = sand.u32 %s666, 85
    %s668 = sshrl.u32 %s667, 1
    %s669 = sor.u32 %s667, %s668
    %s670 = sand.u32 51, %s669
    %s671 = sshrl.u32 %s670, 2
    %s672 = sor.u32 %s670, %s671
    %s673 = sand.u32 15, %s672
    %v674 = vld [vmem:[%s664] sm:%s673]
    %v675 = vunpack.c.l.bf16 %v674
    %v676 = vunpack.c.h.bf16 %v674
    %s677 = scalar_lea.vmem [#allocation1], 152
    %678 = vst [vmem:[%s677] sm:%s3] %v675
    %s679 = scalar_lea.vmem %s0, 72
    %s680 = sshrl.u32 %s3, 1
    %s681 = sor.u32 %s3, %s680
    %s682 = sand.u32 %s681, 85
    %s683 = sshrl.u32 %s682, 1
    %s684 = sor.u32 %s682, %s683
    %s685 = sand.u32 51, %s684
    %s686 = sshrl.u32 %s685, 2
    %s687 = sor.u32 %s685, %s686
    %s688 = sand.u32 15, %s687
    %v689 = vld [vmem:[%s679] sm:%s688]
    %v690 = vunpack.c.l.bf16 %v689
    %v691 = vunpack.c.h.bf16 %v689
    %s692 = scalar_lea.vmem [#allocation1], 144
    %693 = vst [vmem:[%s692] sm:%s3] %v690
    %s694 = scalar_lea.vmem %s0, 68
    %s695 = sshrl.u32 %s3, 1
    %s696 = sor.u32 %s3, %s695
    %s697 = sand.u32 %s696, 85
    %s698 = sshrl.u32 %s697, 1
    %s699 = sor.u32 %s697, %s698
    %s700 = sand.u32 51, %s699
    %s701 = sshrl.u32 %s700, 2
    %s702 = sor.u32 %s700, %s701
    %s703 = sand.u32 15, %s702
    %v704 = vld [vmem:[%s694] sm:%s703]
    %v705 = vunpack.c.l.bf16 %v704
    %v706 = vunpack.c.h.bf16 %v704
    %s707 = scalar_lea.vmem [#allocation1], 136
    %708 = vst [vmem:[%s707] sm:%s3] %v705
    %s709 = scalar_lea.vmem %s0, 64
    %s710 = sshrl.u32 %s3, 1
    %s711 = sor.u32 %s3, %s710
    %s712 = sand.u32 %s711, 85
    %s713 = sshrl.u32 %s712, 1
    %s714 = sor.u32 %s712, %s713
    %s715 = sand.u32 51, %s714
    %s716 = sshrl.u32 %s715, 2
    %s717 = sor.u32 %s715, %s716
    %s718 = sand.u32 15, %s717
    %v719 = vld [vmem:[%s709] sm:%s718]
    %v720 = vunpack.c.l.bf16 %v719
    %v721 = vunpack.c.h.bf16 %v719
    %s722 = scalar_lea.vmem [#allocation1], 128
    %723 = vst [vmem:[%s722] sm:%s3] %v720
    %s724 = scalar_lea.vmem %s0, 60
    %s725 = sshrl.u32 %s3, 1
    %s726 = sor.u32 %s3, %s725
    %s727 = sand.u32 %s726, 85
    %s728 = sshrl.u32 %s727, 1
    %s729 = sor.u32 %s727, %s728
    %s730 = sand.u32 51, %s729
    %s731 = sshrl.u32 %s730, 2
    %s732 = sor.u32 %s730, %s731
    %s733 = sand.u32 15, %s732
    %v734 = vld [vmem:[%s724] sm:%s733]
    %v735 = vunpack.c.l.bf16 %v734
    %v736 = vunpack.c.h.bf16 %v734
    %s737 = scalar_lea.vmem [#allocation1], 120
    %738 = vst [vmem:[%s737] sm:%s3] %v735
    %s739 = scalar_lea.vmem %s0, 56
    %s740 = sshrl.u32 %s3, 1
    %s741 = sor.u32 %s3, %s740
    %s742 = sand.u32 %s741, 85
    %s743 = sshrl.u32 %s742, 1
    %s744 = sor.u32 %s742, %s743
    %s745 = sand.u32 51, %s744
    %s746 = sshrl.u32 %s745, 2
    %s747 = sor.u32 %s745, %s746
    %s748 = sand.u32 15, %s747
    %v749 = vld [vmem:[%s739] sm:%s748]
    %v750 = vunpack.c.l.bf16 %v749
    %v751 = vunpack.c.h.bf16 %v749
    %s752 = scalar_lea.vmem [#allocation1], 112
    %753 = vst [vmem:[%s752] sm:%s3] %v750
    %s754 = scalar_lea.vmem %s0, 52
    %s755 = sshrl.u32 %s3, 1
    %s756 = sor.u32 %s3, %s755
    %s757 = sand.u32 %s756, 85
    %s758 = sshrl.u32 %s757, 1
    %s759 = sor.u32 %s757, %s758
    %s760 = sand.u32 51, %s759
    %s761 = sshrl.u32 %s760, 2
    %s762 = sor.u32 %s760, %s761
    %s763 = sand.u32 15, %s762
    %v764 = vld [vmem:[%s754] sm:%s763]
    %v765 = vunpack.c.l.bf16 %v764
    %v766 = vunpack.c.h.bf16 %v764
    %s767 = scalar_lea.vmem [#allocation1], 104
    %768 = vst [vmem:[%s767] sm:%s3] %v765
    %s769 = scalar_lea.vmem %s0, 48
    %s770 = sshrl.u32 %s3, 1
    %s771 = sor.u32 %s3, %s770
    %s772 = sand.u32 %s771, 85
    %s773 = sshrl.u32 %s772, 1
    %s774 = sor.u32 %s772, %s773
    %s775 = sand.u32 51, %s774
    %s776 = sshrl.u32 %s775, 2
    %s777 = sor.u32 %s775, %s776
    %s778 = sand.u32 15, %s777
    %v779 = vld [vmem:[%s769] sm:%s778]
    %v780 = vunpack.c.l.bf16 %v779
    %v781 = vunpack.c.h.bf16 %v779
    %s782 = scalar_lea.vmem [#allocation1], 96
    %783 = vst [vmem:[%s782] sm:%s3] %v780
    %s784 = scalar_lea.vmem %s0, 44
    %s785 = sshrl.u32 %s3, 1
    %s786 = sor.u32 %s3, %s785
    %s787 = sand.u32 %s786, 85
    %s788 = sshrl.u32 %s787, 1
    %s789 = sor.u32 %s787, %s788
    %s790 = sand.u32 51, %s789
    %s791 = sshrl.u32 %s790, 2
    %s792 = sor.u32 %s790, %s791
    %s793 = sand.u32 15, %s792
    %v794 = vld [vmem:[%s784] sm:%s793]
    %v795 = vunpack.c.l.bf16 %v794
    %v796 = vunpack.c.h.bf16 %v794
    %s797 = scalar_lea.vmem [#allocation1], 88
    %798 = vst [vmem:[%s797] sm:%s3] %v795
    %s799 = scalar_lea.vmem %s0, 40
    %s800 = sshrl.u32 %s3, 1
    %s801 = sor.u32 %s3, %s800
    %s802 = sand.u32 %s801, 85
    %s803 = sshrl.u32 %s802, 1
    %s804 = sor.u32 %s802, %s803
    %s805 = sand.u32 51, %s804
    %s806 = sshrl.u32 %s805, 2
    %s807 = sor.u32 %s805, %s806
    %s808 = sand.u32 15, %s807
    %v809 = vld [vmem:[%s799] sm:%s808]
    %v810 = vunpack.c.l.bf16 %v809
    %v811 = vunpack.c.h.bf16 %v809
    %s812 = scalar_lea.vmem [#allocation1], 80
    %813 = vst [vmem:[%s812] sm:%s3] %v810
    %s814 = scalar_lea.vmem %s0, 36
    %s815 = sshrl.u32 %s3, 1
    %s816 = sor.u32 %s3, %s815
    %s817 = sand.u32 %s816, 85
    %s818 = sshrl.u32 %s817, 1
    %s819 = sor.u32 %s817, %s818
    %s820 = sand.u32 51, %s819
    %s821 = sshrl.u32 %s820, 2
    %s822 = sor.u32 %s820, %s821
    %s823 = sand.u32 15, %s822
    %v824 = vld [vmem:[%s814] sm:%s823]
    %v825 = vunpack.c.l.bf16 %v824
    %v826 = vunpack.c.h.bf16 %v824
    %s827 = scalar_lea.vmem [#allocation1], 72
    %828 = vst [vmem:[%s827] sm:%s3] %v825
    %s829 = scalar_lea.vmem %s0, 32
    %s830 = sshrl.u32 %s3, 1
    %s831 = sor.u32 %s3, %s830
    %s832 = sand.u32 %s831, 85
    %s833 = sshrl.u32 %s832, 1
    %s834 = sor.u32 %s832, %s833
    %s835 = sand.u32 51, %s834
    %s836 = sshrl.u32 %s835, 2
    %s837 = sor.u32 %s835, %s836
    %s838 = sand.u32 15, %s837
    %v839 = vld [vmem:[%s829] sm:%s838]
    %v840 = vunpack.c.l.bf16 %v839
    %v841 = vunpack.c.h.bf16 %v839
    %s842 = scalar_lea.vmem [#allocation1], 64
    %843 = vst [vmem:[%s842] sm:%s3] %v840
    %s844 = scalar_lea.vmem %s0, 28
    %s845 = sshrl.u32 %s3, 1
    %s846 = sor.u32 %s3, %s845
    %s847 = sand.u32 %s846, 85
    %s848 = sshrl.u32 %s847, 1
    %s849 = sor.u32 %s847, %s848
    %s850 = sand.u32 51, %s849
    %s851 = sshrl.u32 %s850, 2
    %s852 = sor.u32 %s850, %s851
    %s853 = sand.u32 15, %s852
    %v854 = vld [vmem:[%s844] sm:%s853]
    %v855 = vunpack.c.l.bf16 %v854
    %v856 = vunpack.c.h.bf16 %v854
    %s857 = scalar_lea.vmem [#allocation1], 56
    %858 = vst [vmem:[%s857] sm:%s3] %v855
    %s859 = scalar_lea.vmem %s0, 24
    %s860 = sshrl.u32 %s3, 1
    %s861 = sor.u32 %s3, %s860
    %s862 = sand.u32 %s861, 85
    %s863 = sshrl.u32 %s862, 1
    %s864 = sor.u32 %s862, %s863
    %s865 = sand.u32 51, %s864
    %s866 = sshrl.u32 %s865, 2
    %s867 = sor.u32 %s865, %s866
    %s868 = sand.u32 15, %s867
    %v869 = vld [vmem:[%s859] sm:%s868]
    %v870 = vunpack.c.l.bf16 %v869
    %v871 = vunpack.c.h.bf16 %v869
    %s872 = scalar_lea.vmem [#allocation1], 48
    %873 = vst [vmem:[%s872] sm:%s3] %v870
    %s874 = scalar_lea.vmem %s0, 20
    %s875 = sshrl.u32 %s3, 1
    %s876 = sor.u32 %s3, %s875
    %s877 = sand.u32 %s876, 85
    %s878 = sshrl.u32 %s877, 1
    %s879 = sor.u32 %s877, %s878
    %s880 = sand.u32 51, %s879
    %s881 = sshrl.u32 %s880, 2
    %s882 = sor.u32 %s880, %s881
    %s883 = sand.u32 15, %s882
    %v884 = vld [vmem:[%s874] sm:%s883]
    %v885 = vunpack.c.l.bf16 %v884
    %v886 = vunpack.c.h.bf16 %v884
    %s887 = scalar_lea.vmem [#allocation1], 40
    %888 = vst [vmem:[%s887] sm:%s3] %v885
    %s889 = scalar_lea.vmem %s0, 16
    %s890 = sshrl.u32 %s3, 1
    %s891 = sor.u32 %s3, %s890
    %s892 = sand.u32 %s891, 85
    %s893 = sshrl.u32 %s892, 1
    %s894 = sor.u32 %s892, %s893
    %s895 = sand.u32 51, %s894
    %s896 = sshrl.u32 %s895, 2
    %s897 = sor.u32 %s895, %s896
    %s898 = sand.u32 15, %s897
    %v899 = vld [vmem:[%s889] sm:%s898]
    %v900 = vunpack.c.l.bf16 %v899
    %v901 = vunpack.c.h.bf16 %v899
    %s902 = scalar_lea.vmem [#allocation1], 32
    %903 = vst [vmem:[%s902] sm:%s3] %v900
    %s904 = scalar_lea.vmem %s0, 12
    %s905 = sshrl.u32 %s3, 1
    %s906 = sor.u32 %s3, %s905
    %s907 = sand.u32 %s906, 85
    %s908 = sshrl.u32 %s907, 1
    %s909 = sor.u32 %s907, %s908
    %s910 = sand.u32 51, %s909
    %s911 = sshrl.u32 %s910, 2
    %s912 = sor.u32 %s910, %s911
    %s913 = sand.u32 15, %s912
    %v914 = vld [vmem:[%s904] sm:%s913]
    %v915 = vunpack.c.l.bf16 %v914
    %v916 = vunpack.c.h.bf16 %v914
    %s917 = scalar_lea.vmem [#allocation1], 24
    %918 = vst [vmem:[%s917] sm:%s3] %v915
    %s919 = scalar_lea.vmem %s0, 8
    %s920 = sshrl.u32 %s3, 1
    %s921 = sor.u32 %s3, %s920
    %s922 = sand.u32 %s921, 85
    %s923 = sshrl.u32 %s922, 1
    %s924 = sor.u32 %s922, %s923
    %s925 = sand.u32 51, %s924
    %s926 = sshrl.u32 %s925, 2
    %s927 = sor.u32 %s925, %s926
    %s928 = sand.u32 15, %s927
    %v929 = vld [vmem:[%s919] sm:%s928]
    %v930 = vunpack.c.l.bf16 %v929
    %v931 = vunpack.c.h.bf16 %v929
    %s932 = scalar_lea.vmem [#allocation1], 16
    %933 = vst [vmem:[%s932] sm:%s3] %v930
    %s934 = scalar_lea.vmem %s0, 4
    %s935 = sshrl.u32 %s3, 1
    %s936 = sor.u32 %s3, %s935
    %s937 = sand.u32 %s936, 85
    %s938 = sshrl.u32 %s937, 1
    %s939 = sor.u32 %s937, %s938
    %s940 = sand.u32 51, %s939
    %s941 = sshrl.u32 %s940, 2
    %s942 = sor.u32 %s940, %s941
    %s943 = sand.u32 15, %s942
    %v944 = vld [vmem:[%s934] sm:%s943]
    %v945 = vunpack.c.l.bf16 %v944
    %v946 = vunpack.c.h.bf16 %v944
    %s947 = scalar_lea.vmem [#allocation1], 8
    %948 = vst [vmem:[%s947] sm:%s3] %v945
    %s949 = sshrl.u32 %s3, 1
    %s950 = sor.u32 %s3, %s949
    %s951 = sand.u32 %s950, 85
    %s952 = sshrl.u32 %s951, 1
    %s953 = sor.u32 %s951, %s952
    %s954 = sand.u32 51, %s953
    %s955 = sshrl.u32 %s954, 2
    %s956 = sor.u32 %s954, %s955
    %s957 = sand.u32 15, %s956
    %v958 = vld [vmem:[%s0] sm:%s957]
    %v959 = vunpack.c.l.bf16 %v958
    %v960 = vunpack.c.h.bf16 %v958
    %961 = vst [vmem:[#allocation1] sm:%s3] %v959
    %v962 = vld [vmem:[#allocation1] ss:$4 sm:$0xff]
    %vm963 = vcmask 261120
    %964 = vst.msk [vmem:[#allocation0] ss:$8 sm:$0xf] %vm963, %v962
    %965 = vst.msk [vmem:[#allocation0] ss:$8 sm:$0xf0] %vm963, %v962
    %s966 = scalar_lea.vmem [#allocation1], 32
    %v967 = vld [vmem:[%s966] ss:$4 sm:$0xff]
    %vm968 = vcmask 261120
    %s969 = scalar_lea.vmem [#allocation0], 1
    %970 = vst.msk [vmem:[%s969] ss:$8 sm:$0xf] %vm968, %v967
    %s971 = scalar_lea.vmem [#allocation0], 1
    %972 = vst.msk [vmem:[%s971] ss:$8 sm:$0xf0] %vm968, %v967
    %s973 = scalar_lea.vmem [#allocation1], 64
    %v974 = vld [vmem:[%s973] ss:$4 sm:$0xff]
    %vm975 = vcmask 261120
    %s976 = scalar_lea.vmem [#allocation0], 2
    %977 = vst.msk [vmem:[%s976] ss:$8 sm:$0xf] %vm975, %v974
    %s978 = scalar_lea.vmem [#allocation0], 2
    %979 = vst.msk [vmem:[%s978] ss:$8 sm:$0xf0] %vm975, %v974
    %s980 = scalar_lea.vmem [#allocation1], 96
    %v981 = vld [vmem:[%s980] ss:$4 sm:$0xff]
    %vm982 = vcmask 261120
    %s983 = scalar_lea.vmem [#allocation0], 3
    %984 = vst.msk [vmem:[%s983] ss:$8 sm:$0xf] %vm982, %v981
    %s985 = scalar_lea.vmem [#allocation0], 3
    %986 = vst.msk [vmem:[%s985] ss:$8 sm:$0xf0] %vm982, %v981
    %s987 = scalar_lea.vmem [#allocation1], 128
    %v988 = vld [vmem:[%s987] ss:$4 sm:$0xff]
    %vm989 = vcmask 261120
    %s990 = scalar_lea.vmem [#allocation0], 4
    %991 = vst.msk [vmem:[%s990] ss:$8 sm:$0xf] %vm989, %v988
    %s992 = scalar_lea.vmem [#allocation0], 4
    %993 = vst.msk [vmem:[%s992] ss:$8 sm:$0xf0] %vm989, %v988
    %s994 = scalar_lea.vmem [#allocation1], 160
    %v995 = vld [vmem:[%s994] ss:$4 sm:$0xff]
    %vm996 = vcmask 261120
    %s997 = scalar_lea.vmem [#allocation0], 5
    %998 = vst.msk [vmem:[%s997] ss:$8 sm:$0xf] %vm996, %v995
    %s999 = scalar_lea.vmem [#allocation0], 5
    %1000 = vst.msk [vmem:[%s999] ss:$8 sm:$0xf0] %vm996, %v995
    %s1001 = scalar_lea.vmem [#allocation1], 192
    %v1002 = vld [vmem:[%s1001] ss:$4 sm:$0xff]
    %vm1003 = vcmask 261120
    %s1004 = scalar_lea.vmem [#allocation0], 6
    %1005 = vst.msk [vmem:[%s1004] ss:$8 sm:$0xf] %vm1003, %v1002
    %s1006 = scalar_lea.vmem [#allocation0], 6
    %1007 = vst.msk [vmem:[%s1006] ss:$8 sm:$0xf0] %vm1003, %v1002
    %s1008 = scalar_lea.vmem [#allocation1], 224
    %v1009 = vld [vmem:[%s1008] ss:$4 sm:$0xff]
    %vm1010 = vcmask 261120
    %s1011 = scalar_lea.vmem [#allocation0], 7
    %1012 = vst.msk [vmem:[%s1011] ss:$8 sm:$0xf] %vm1010, %v1009
    %s1013 = scalar_lea.vmem [#allocation0], 7
    %1014 = vst.msk [vmem:[%s1013] ss:$8 sm:$0xf0] %vm1010, %v1009
    %s1015 = scalar_lea.vmem [#allocation1], 256
    %v1016 = vld [vmem:[%s1015] ss:$4 sm:$0xff]
    %vm1017 = vcmask 261120
    %s1018 = scalar_lea.vmem [#allocation0], 64
    %1019 = vst.msk [vmem:[%s1018] ss:$8 sm:$0xf] %vm1017, %v1016
    %s1020 = scalar_lea.vmem [#allocation0], 64
    %1021 = vst.msk [vmem:[%s1020] ss:$8 sm:$0xf0] %vm1017, %v1016
    %s1022 = scalar_lea.vmem [#allocation1], 288
    %v1023 = vld [vmem:[%s1022] ss:$4 sm:$0xff]
    %vm1024 = vcmask 261120
    %s1025 = scalar_lea.vmem [#allocation0], 65
    %1026 = vst.msk [vmem:[%s1025] ss:$8 sm:$0xf] %vm1024, %v1023
    %s1027 = scalar_lea.vmem [#allocation0], 65
    %1028 = vst.msk [vmem:[%s1027] ss:$8 sm:$0xf0] %vm1024, %v1023
    %s1029 = scalar_lea.vmem [#allocation1], 320
    %v1030 = vld [vmem:[%s1029] ss:$4 sm:$0xff]
    %vm1031 = vcmask 261120
    %s1032 = scalar_lea.vmem [#allocation0], 66
    %1033 = vst.msk [vmem:[%s1032] ss:$8 sm:$0xf] %vm1031, %v1030
    %s1034 = scalar_lea.vmem [#allocation0], 66
    %1035 = vst.msk [vmem:[%s1034] ss:$8 sm:$0xf0] %vm1031, %v1030
    %s1036 = scalar_lea.vmem [#allocation1], 352
    %v1037 = vld [vmem:[%s1036] ss:$4 sm:$0xff]
    %vm1038 = vcmask 261120
    %s1039 = scalar_lea.vmem [#allocation0], 67
    %1040 = vst.msk [vmem:[%s1039] ss:$8 sm:$0xf] %vm1038, %v1037
    %s1041 = scalar_lea.vmem [#allocation0], 67
    %1042 = vst.msk [vmem:[%s1041] ss:$8 sm:$0xf0] %vm1038, %v1037
    %s1043 = scalar_lea.vmem [#allocation1], 384
    %v1044 = vld [vmem:[%s1043] ss:$4 sm:$0xff]
    %vm1045 = vcmask 261120
    %s1046 = scalar_lea.vmem [#allocation0], 68
    %1047 = vst.msk [vmem:[%s1046] ss:$8 sm:$0xf] %vm1045, %v1044
    %s1048 = scalar_lea.vmem [#allocation0], 68
    %1049 = vst.msk [vmem:[%s1048] ss:$8 sm:$0xf0] %vm1045, %v1044
    %s1050 = scalar_lea.vmem [#allocation1], 416
    %v1051 = vld [vmem:[%s1050] ss:$4 sm:$0xff]
    %vm1052 = vcmask 261120
    %s1053 = scalar_lea.vmem [#allocation0], 69
    %1054 = vst.msk [vmem:[%s1053] ss:$8 sm:$0xf] %vm1052, %v1051
    %s1055 = scalar_lea.vmem [#allocation0], 69
    %1056 = vst.msk [vmem:[%s1055] ss:$8 sm:$0xf0] %vm1052, %v1051
    %s1057 = scalar_lea.vmem [#allocation1], 448
    %v1058 = vld [vmem:[%s1057] ss:$4 sm:$0xff]
    %vm1059 = vcmask 261120
    %s1060 = scalar_lea.vmem [#allocation0], 70
    %1061 = vst.msk [vmem:[%s1060] ss:$8 sm:$0xf] %vm1059, %v1058
    %s1062 = scalar_lea.vmem [#allocation0], 70
    %1063 = vst.msk [vmem:[%s1062] ss:$8 sm:$0xf0] %vm1059, %v1058
    %s1064 = scalar_lea.vmem [#allocation1], 480
    %v1065 = vld [vmem:[%s1064] ss:$4 sm:$0xff]
    %vm1066 = vcmask 261120
    %s1067 = scalar_lea.vmem [#allocation0], 71
    %1068 = vst.msk [vmem:[%s1067] ss:$8 sm:$0xf] %vm1066, %v1065
    %s1069 = scalar_lea.vmem [#allocation0], 71
    %1070 = vst.msk [vmem:[%s1069] ss:$8 sm:$0xf0] %vm1066, %v1065
    %s1071 = scalar_lea.vmem [#allocation1], 3
    %v1072 = vld [vmem:[%s1071] sm:$0x1]
    %s1073 = scalar_lea.vmem [#allocation1], 34
    %v1074 = vld [vmem:[%s1073] sm:$0x2]
    %vm1075 = vcmask 1041409
    %v1076 = vsel %vm1075, %v1074, %v1072
    %s1077 = scalar_lea.vmem [#allocation1], 65
    %v1078 = vld [vmem:[%s1077] sm:$0x4]
    %vm1079 = vcmask 1042434
    %v1080 = vsel %vm1079, %v1078, %v1076
    %s1081 = scalar_lea.vmem [#allocation1], 96
    %v1082 = vld [vmem:[%s1081] sm:$0x8]
    %vm1083 = vcmask 1043459
    %v1084 = vsel %vm1083, %v1082, %v1080
    %s1085 = scalar_lea.vmem [#allocation1], 127
    %v1086 = vld [vmem:[%s1085] sm:$0x10]
    %vm1087 = vcmask 1044484
    %v1088 = vsel %vm1087, %v1086, %v1084
    %s1089 = scalar_lea.vmem [#allocation1], 158
    %v1090 = vld [vmem:[%s1089] sm:$0x20]
    %vm1091 = vcmask 1045509
    %v1092 = vsel %vm1091, %v1090, %v1088
    %s1093 = scalar_lea.vmem [#allocation1], 189
    %v1094 = vld [vmem:[%s1093] sm:$0x40]
    %vm1095 = vcmask 1046534
    %v1096 = vsel %vm1095, %v1094, %v1092
    %s1097 = scalar_lea.vmem [#allocation1], 220
    %v1098 = vld [vmem:[%s1097] sm:$0x80]
    %vm1099 = vcmask 1047559
    %v1100 = vsel %vm1099, %v1098, %v1096
    %1101 = vrot.lane.b32.xlu0 %v1100, 96
    %v1102 = vpop.permute.xlu0 %1101
    %vm1103 = vcmask 1048320
    %1104 = vst.msk [vmem:[#allocation0] sm:$0xff] %vm1103, %v1102
    %s1105 = scalar_lea.vmem [#allocation1], 19
    %v1106 = vld [vmem:[%s1105] sm:$0x1]
    %s1107 = scalar_lea.vmem [#allocation1], 50
    %v1108 = vld [vmem:[%s1107] sm:$0x2]
    %vm1109 = vcmask 1041409
    %v1110 = vsel %vm1109, %v1108, %v1106
    %s1111 = scalar_lea.vmem [#allocation1], 81
    %v1112 = vld [vmem:[%s1111] sm:$0x4]
    %vm1113 = vcmask 1042434
    %v1114 = vsel %vm1113, %v1112, %v1110
    %s1115 = scalar_lea.vmem [#allocation1], 112
    %v1116 = vld [vmem:[%s1115] sm:$0x8]
    %vm1117 = vcmask 1043459
    %v1118 = vsel %vm1117, %v1116, %v1114
    %s1119 = scalar_lea.vmem [#allocation1], 143
    %v1120 = vld [vmem:[%s1119] sm:$0x10]
    %vm1121 = vcmask 1044484
    %v1122 = vsel %vm1121, %v1120, %v1118
    %s1123 = scalar_lea.vmem [#allocation1], 174
    %v1124 = vld [vmem:[%s1123] sm:$0x20]
    %vm1125 = vcmask 1045509
    %v1126 = vsel %vm1125, %v1124, %v1122
    %s1127 = scalar_lea.vmem [#allocation1], 205
    %v1128 = vld [vmem:[%s1127] sm:$0x40]
    %vm1129 = vcmask 1046534
    %v1130 = vsel %vm1129, %v1128, %v1126
    %s1131 = scalar_lea.vmem [#allocation1], 236
    %v1132 = vld [vmem:[%s1131] sm:$0x80]
    %vm1133 = vcmask 1047559
    %v1134 = vsel %vm1133, %v1132, %v1130
    %1135 = vrot.lane.b32.xlu0 %v1134, 96
    %v1136 = vpop.permute.xlu0 %1135
    %vm1137 = vcmask 1048320
    %s1138 = scalar_lea.vmem [#allocation0], 32
    %1139 = vst.msk [vmem:[%s1138] sm:$0xff] %vm1137, %v1136
    %s1140 = scalar_lea.vmem [#allocation1], 259
    %v1141 = vld [vmem:[%s1140] sm:$0x1]
    %s1142 = scalar_lea.vmem [#allocation1], 290
    %v1143 = vld [vmem:[%s1142] sm:$0x2]
    %vm1144 = vcmask 1041409
    %v1145 = vsel %vm1144, %v1143, %v1141
    %s1146 = scalar_lea.vmem [#allocation1], 321
    %v1147 = vld [vmem:[%s1146] sm:$0x4]
    %vm1148 = vcmask 1042434
    %v1149 = vsel %vm1148, %v1147, %v1145
    %s1150 = scalar_lea.vmem [#allocation1], 352
    %v1151 = vld [vmem:[%s1150] sm:$0x8]
    %vm1152 = vcmask 1043459
    %v1153 = vsel %vm1152, %v1151, %v1149
    %s1154 = scalar_lea.vmem [#allocation1], 383
    %v1155 = vld [vmem:[%s1154] sm:$0x10]
    %vm1156 = vcmask 1044484
    %v1157 = vsel %vm1156, %v1155, %v1153
    %s1158 = scalar_lea.vmem [#allocation1], 414
    %v1159 = vld [vmem:[%s1158] sm:$0x20]
    %vm1160 = vcmask 1045509
    %v1161 = vsel %vm1160, %v1159, %v1157
    %s1162 = scalar_lea.vmem [#allocation1], 445
    %v1163 = vld [vmem:[%s1162] sm:$0x40]
    %vm1164 = vcmask 1046534
    %v1165 = vsel %vm1164, %v1163, %v1161
    %s1166 = scalar_lea.vmem [#allocation1], 476
    %v1167 = vld [vmem:[%s1166] sm:$0x80]
    %vm1168 = vcmask 1047559
    %v1169 = vsel %vm1168, %v1167, %v1165
    %1170 = vrot.lane.b32.xlu0 %v1169, 96
    %v1171 = vpop.permute.xlu0 %1170
    %vm1172 = vcmask 1048320
    %s1173 = scalar_lea.vmem [#allocation0], 64
    %1174 = vst.msk [vmem:[%s1173] sm:$0xff] %vm1172, %v1171
    %s1175 = scalar_lea.vmem [#allocation1], 275
    %v1176 = vld [vmem:[%s1175] sm:$0x1]
    %s1177 = scalar_lea.vmem [#allocation1], 306
    %v1178 = vld [vmem:[%s1177] sm:$0x2]
    %vm1179 = vcmask 1041409
    %v1180 = vsel %vm1179, %v1178, %v1176
    %s1181 = scalar_lea.vmem [#allocation1], 337
    %v1182 = vld [vmem:[%s1181] sm:$0x4]
    %vm1183 = vcmask 1042434
    %v1184 = vsel %vm1183, %v1182, %v1180
    %s1185 = scalar_lea.vmem [#allocation1], 368
    %v1186 = vld [vmem:[%s1185] sm:$0x8]
    %vm1187 = vcmask 1043459
    %v1188 = vsel %vm1187, %v1186, %v1184
    %s1189 = scalar_lea.vmem [#allocation1], 399
    %v1190 = vld [vmem:[%s1189] sm:$0x10]
    %vm1191 = vcmask 1044484
    %v1192 = vsel %vm1191, %v1190, %v1188
    %s1193 = scalar_lea.vmem [#allocation1], 430
    %v1194 = vld [vmem:[%s1193] sm:$0x20]
    %vm1195 = vcmask 1045509
    %v1196 = vsel %vm1195, %v1194, %v1192
    %s1197 = scalar_lea.vmem [#allocation1], 461
    %v1198 = vld [vmem:[%s1197] sm:$0x40]
    %vm1199 = vcmask 1046534
    %v1200 = vsel %vm1199, %v1198, %v1196
    %s1201 = scalar_lea.vmem [#allocation1], 492
    %v1202 = vld [vmem:[%s1201] sm:$0x80]
    %vm1203 = vcmask 1047559
    %v1204 = vsel %vm1203, %v1202, %v1200
    %1205 = vrot.lane.b32.xlu0 %v1204, 96
    %v1206 = vpop.permute.xlu0 %1205
    %vm1207 = vcmask 1048320
    %s1208 = scalar_lea.vmem [#allocation0], 96
    %1209 = vst.msk [vmem:[%s1208] sm:$0xff] %vm1207, %v1206
    %s1210 = scalar_lea.vmem [#allocation1], 7
    %v1211 = vld [vmem:[%s1210] sm:$0x1]
    %s1212 = scalar_lea.vmem [#allocation1], 38
    %v1213 = vld [vmem:[%s1212] sm:$0x2]
    %vm1214 = vcmask 1041409
    %v1215 = vsel %vm1214, %v1213, %v1211
    %s1216 = scalar_lea.vmem [#allocation1], 69
    %v1217 = vld [vmem:[%s1216] sm:$0x4]
    %vm1218 = vcmask 1042434
    %v1219 = vsel %vm1218, %v1217, %v1215
    %s1220 = scalar_lea.vmem [#allocation1], 100
    %v1221 = vld [vmem:[%s1220] sm:$0x8]
    %vm1222 = vcmask 1043459
    %v1223 = vsel %vm1222, %v1221, %v1219
    %s1224 = scalar_lea.vmem [#allocation1], 131
    %v1225 = vld [vmem:[%s1224] sm:$0x10]
    %vm1226 = vcmask 1044484
    %v1227 = vsel %vm1226, %v1225, %v1223
    %s1228 = scalar_lea.vmem [#allocation1], 162
    %v1229 = vld [vmem:[%s1228] sm:$0x20]
    %vm1230 = vcmask 1045509
    %v1231 = vsel %vm1230, %v1229, %v1227
    %s1232 = scalar_lea.vmem [#allocation1], 193
    %v1233 = vld [vmem:[%s1232] sm:$0x40]
    %vm1234 = vcmask 1046534
    %v1235 = vsel %vm1234, %v1233, %v1231
    %s1236 = scalar_lea.vmem [#allocation1], 224
    %v1237 = vld [vmem:[%s1236] sm:$0x80]
    %vm1238 = vcmask 1047559
    %v1239 = vsel %vm1238, %v1237, %v1235
    %1240 = vrot.lane.b32.xlu0 %v1239, 96
    %v1241 = vpop.permute.xlu0 %1240
    %vm1242 = vcmask 1048320
    %s1243 = scalar_lea.vmem [#allocation0], 8
    %1244 = vst.msk [vmem:[%s1243] sm:$0xff] %vm1242, %v1241
    %s1245 = scalar_lea.vmem [#allocation1], 23
    %v1246 = vld [vmem:[%s1245] sm:$0x1]
    %s1247 = scalar_lea.vmem [#allocation1], 54
    %v1248 = vld [vmem:[%s1247] sm:$0x2]
    %vm1249 = vcmask 1041409
    %v1250 = vsel %vm1249, %v1248, %v1246
    %s1251 = scalar_lea.vmem [#allocation1], 85
    %v1252 = vld [vmem:[%s1251] sm:$0x4]
    %vm1253 = vcmask 1042434
    %v1254 = vsel %vm1253, %v1252, %v1250
    %s1255 = scalar_lea.vmem [#allocation1], 116
    %v1256 = vld [vmem:[%s1255] sm:$0x8]
    %vm1257 = vcmask 1043459
    %v1258 = vsel %vm1257, %v1256, %v1254
    %s1259 = scalar_lea.vmem [#allocation1], 147
    %v1260 = vld [vmem:[%s1259] sm:$0x10]
    %vm1261 = vcmask 1044484
    %v1262 = vsel %vm1261, %v1260, %v1258
    %s1263 = scalar_lea.vmem [#allocation1], 178
    %v1264 = vld [vmem:[%s1263] sm:$0x20]
    %vm1265 = vcmask 1045509
    %v1266 = vsel %vm1265, %v1264, %v1262
    %s1267 = scalar_lea.vmem [#allocation1], 209
    %v1268 = vld [vmem:[%s1267] sm:$0x40]
    %vm1269 = vcmask 1046534
    %v1270 = vsel %vm1269, %v1268, %v1266
    %s1271 = scalar_lea.vmem [#allocation1], 240
    %v1272 = vld [vmem:[%s1271] sm:$0x80]
    %vm1273 = vcmask 1047559
    %v1274 = vsel %vm1273, %v1272, %v1270
    %1275 = vrot.lane.b32.xlu0 %v1274, 96
    %v1276 = vpop.permute.xlu0 %1275
    %vm1277 = vcmask 1048320
    %s1278 = scalar_lea.vmem [#allocation0], 40
    %1279 = vst.msk [vmem:[%s1278] sm:$0xff] %vm1277, %v1276
    %s1280 = scalar_lea.vmem [#allocation1], 263
    %v1281 = vld [vmem:[%s1280] sm:$0x1]
    %s1282 = scalar_lea.vmem [#allocation1], 294
    %v1283 = vld [vmem:[%s1282] sm:$0x2]
    %vm1284 = vcmask 1041409
    %v1285 = vsel %vm1284, %v1283, %v1281
    %s1286 = scalar_lea.vmem [#allocation1], 325
    %v1287 = vld [vmem:[%s1286] sm:$0x4]
    %vm1288 = vcmask 1042434
    %v1289 = vsel %vm1288, %v1287, %v1285
    %s1290 = scalar_lea.vmem [#allocation1], 356
    %v1291 = vld [vmem:[%s1290] sm:$0x8]
    %vm1292 = vcmask 1043459
    %v1293 = vsel %vm1292, %v1291, %v1289
    %s1294 = scalar_lea.vmem [#allocation1], 387
    %v1295 = vld [vmem:[%s1294] sm:$0x10]
    %vm1296 = vcmask 1044484
    %v1297 = vsel %vm1296, %v1295, %v1293
    %s1298 = scalar_lea.vmem [#allocation1], 418
    %v1299 = vld [vmem:[%s1298] sm:$0x20]
    %vm1300 = vcmask 1045509
    %v1301 = vsel %vm1300, %v1299, %v1297
    %s1302 = scalar_lea.vmem [#allocation1], 449
    %v1303 = vld [vmem:[%s1302] sm:$0x40]
    %vm1304 = vcmask 1046534
    %v1305 = vsel %vm1304, %v1303, %v1301
    %s1306 = scalar_lea.vmem [#allocation1], 480
    %v1307 = vld [vmem:[%s1306] sm:$0x80]
    %vm1308 = vcmask 1047559
    %v1309 = vsel %vm1308, %v1307, %v1305
    %1310 = vrot.lane.b32.xlu0 %v1309, 96
    %v1311 = vpop.permute.xlu0 %1310
    %vm1312 = vcmask 1048320
    %s1313 = scalar_lea.vmem [#allocation0], 72
    %1314 = vst.msk [vmem:[%s1313] sm:$0xff] %vm1312, %v1311
    %s1315 = scalar_lea.vmem [#allocation1], 279
    %v1316 = vld [vmem:[%s1315] sm:$0x1]
    %s1317 = scalar_lea.vmem [#allocation1], 310
    %v1318 = vld [vmem:[%s1317] sm:$0x2]
    %vm1319 = vcmask 1041409
    %v1320 = vsel %vm1319, %v1318, %v1316
    %s1321 = scalar_lea.vmem [#allocation1], 341
    %v1322 = vld [vmem:[%s1321] sm:$0x4]
    %vm1323 = vcmask 1042434
    %v1324 = vsel %vm1323, %v1322, %v1320
    %s1325 = scalar_lea.vmem [#allocation1], 372
    %v1326 = vld [vmem:[%s1325] sm:$0x8]
    %vm1327 = vcmask 1043459
    %v1328 = vsel %vm1327, %v1326, %v1324
    %s1329 = scalar_lea.vmem [#allocation1], 403
    %v1330 = vld [vmem:[%s1329] sm:$0x10]
    %vm1331 = vcmask 1044484
    %v1332 = vsel %vm1331, %v1330, %v1328
    %s1333 = scalar_lea.vmem [#allocation1], 434
    %v1334 = vld [vmem:[%s1333] sm:$0x20]
    %vm1335 = vcmask 1045509
    %v1336 = vsel %vm1335, %v1334, %v1332
    %s1337 = scalar_lea.vmem [#allocation1], 465
    %v1338 = vld [vmem:[%s1337] sm:$0x40]
    %vm1339 = vcmask 1046534
    %v1340 = vsel %vm1339, %v1338, %v1336
    %s1341 = scalar_lea.vmem [#allocation1], 496
    %v1342 = vld [vmem:[%s1341] sm:$0x80]
    %vm1343 = vcmask 1047559
    %v1344 = vsel %vm1343, %v1342, %v1340
    %1345 = vrot.lane.b32.xlu0 %v1344, 96
    %v1346 = vpop.permute.xlu0 %1345
    %vm1347 = vcmask 1048320
    %s1348 = scalar_lea.vmem [#allocation0], 104
    %1349 = vst.msk [vmem:[%s1348] sm:$0xff] %vm1347, %v1346
    %s1350 = scalar_lea.vmem [#allocation1], 11
    %v1351 = vld [vmem:[%s1350] sm:$0x1]
    %s1352 = scalar_lea.vmem [#allocation1], 42
    %v1353 = vld [vmem:[%s1352] sm:$0x2]
    %vm1354 = vcmask 1041409
    %v1355 = vsel %vm1354, %v1353, %v1351
    %s1356 = scalar_lea.vmem [#allocation1], 73
    %v1357 = vld [vmem:[%s1356] sm:$0x4]
    %vm1358 = vcmask 1042434
    %v1359 = vsel %vm1358, %v1357, %v1355
    %s1360 = scalar_lea.vmem [#allocation1], 104
    %v1361 = vld [vmem:[%s1360] sm:$0x8]
    %vm1362 = vcmask 1043459
    %v1363 = vsel %vm1362, %v1361, %v1359
    %s1364 = scalar_lea.vmem [#allocation1], 135
    %v1365 = vld [vmem:[%s1364] sm:$0x10]
    %vm1366 = vcmask 1044484
    %v1367 = vsel %vm1366, %v1365, %v1363
    %s1368 = scalar_lea.vmem [#allocation1], 166
    %v1369 = vld [vmem:[%s1368] sm:$0x20]
    %vm1370 = vcmask 1045509
    %v1371 = vsel %vm1370, %v1369, %v1367
    %s1372 = scalar_lea.vmem [#allocation1], 197
    %v1373 = vld [vmem:[%s1372] sm:$0x40]
    %vm1374 = vcmask 1046534
    %v1375 = vsel %vm1374, %v1373, %v1371
    %s1376 = scalar_lea.vmem [#allocation1], 228
    %v1377 = vld [vmem:[%s1376] sm:$0x80]
    %vm1378 = vcmask 1047559
    %v1379 = vsel %vm1378, %v1377, %v1375
    %1380 = vrot.lane.b32.xlu0 %v1379, 96
    %v1381 = vpop.permute.xlu0 %1380
    %vm1382 = vcmask 1048320
    %s1383 = scalar_lea.vmem [#allocation0], 16
    %1384 = vst.msk [vmem:[%s1383] sm:$0xff] %vm1382, %v1381
    %s1385 = scalar_lea.vmem [#allocation1], 27
    %v1386 = vld [vmem:[%s1385] sm:$0x1]
    %s1387 = scalar_lea.vmem [#allocation1], 58
    %v1388 = vld [vmem:[%s1387] sm:$0x2]
    %vm1389 = vcmask 1041409
    %v1390 = vsel %vm1389, %v1388, %v1386
    %s1391 = scalar_lea.vmem [#allocation1], 89
    %v1392 = vld [vmem:[%s1391] sm:$0x4]
    %vm1393 = vcmask 1042434
    %v1394 = vsel %vm1393, %v1392, %v1390
    %s1395 = scalar_lea.vmem [#allocation1], 120
    %v1396 = vld [vmem:[%s1395] sm:$0x8]
    %vm1397 = vcmask 1043459
    %v1398 = vsel %vm1397, %v1396, %v1394
    %s1399 = scalar_lea.vmem [#allocation1], 151
    %v1400 = vld [vmem:[%s1399] sm:$0x10]
    %vm1401 = vcmask 1044484
    %v1402 = vsel %vm1401, %v1400, %v1398
    %s1403 = scalar_lea.vmem [#allocation1], 182
    %v1404 = vld [vmem:[%s1403] sm:$0x20]
    %vm1405 = vcmask 1045509
    %v1406 = vsel %vm1405, %v1404, %v1402
    %s1407 = scalar_lea.vmem [#allocation1], 213
    %v1408 = vld [vmem:[%s1407] sm:$0x40]
    %vm1409 = vcmask 1046534
    %v1410 = vsel %vm1409, %v1408, %v1406
    %s1411 = scalar_lea.vmem [#allocation1], 244
    %v1412 = vld [vmem:[%s1411] sm:$0x80]
    %vm1413 = vcmask 1047559
    %v1414 = vsel %vm1413, %v1412, %v1410
    %1415 = vrot.lane.b32.xlu0 %v1414, 96
    %v1416 = vpop.permute.xlu0 %1415
    %vm1417 = vcmask 1048320
    %s1418 = scalar_lea.vmem [#allocation0], 48
    %1419 = vst.msk [vmem:[%s1418] sm:$0xff] %vm1417, %v1416
    %s1420 = scalar_lea.vmem [#allocation1], 267
    %v1421 = vld [vmem:[%s1420] sm:$0x1]
    %s1422 = scalar_lea.vmem [#allocation1], 298
    %v1423 = vld [vmem:[%s1422] sm:$0x2]
    %vm1424 = vcmask 1041409
    %v1425 = vsel %vm1424, %v1423, %v1421
    %s1426 = scalar_lea.vmem [#allocation1], 329
    %v1427 = vld [vmem:[%s1426] sm:$0x4]
    %vm1428 = vcmask 1042434
    %v1429 = vsel %vm1428, %v1427, %v1425
    %s1430 = scalar_lea.vmem [#allocation1], 360
    %v1431 = vld [vmem:[%s1430] sm:$0x8]
    %vm1432 = vcmask 1043459
    %v1433 = vsel %vm1432, %v1431, %v1429
    %s1434 = scalar_lea.vmem [#allocation1], 391
    %v1435 = vld [vmem:[%s1434] sm:$0x10]
    %vm1436 = vcmask 1044484
    %v1437 = vsel %vm1436, %v1435, %v1433
    %s1438 = scalar_lea.vmem [#allocation1], 422
    %v1439 = vld [vmem:[%s1438] sm:$0x20]
    %vm1440 = vcmask 1045509
    %v1441 = vsel %vm1440, %v1439, %v1437
    %s1442 = scalar_lea.vmem [#allocation1], 453
    %v1443 = vld [vmem:[%s1442] sm:$0x40]
    %vm1444 = vcmask 1046534
    %v1445 = vsel %vm1444, %v1443, %v1441
    %s1446 = scalar_lea.vmem [#allocation1], 484
    %v1447 = vld [vmem:[%s1446] sm:$0x80]
    %vm1448 = vcmask 1047559
    %v1449 = vsel %vm1448, %v1447, %v1445
    %1450 = vrot.lane.b32.xlu0 %v1449, 96
    %v1451 = vpop.permute.xlu0 %1450
    %vm1452 = vcmask 1048320
    %s1453 = scalar_lea.vmem [#allocation0], 80
    %1454 = vst.msk [vmem:[%s1453] sm:$0xff] %vm1452, %v1451
    %s1455 = scalar_lea.vmem [#allocation1], 283
    %v1456 = vld [vmem:[%s1455] sm:$0x1]
    %s1457 = scalar_lea.vmem [#allocation1], 314
    %v1458 = vld [vmem:[%s1457] sm:$0x2]
    %vm1459 = vcmask 1041409
    %v1460 = vsel %vm1459, %v1458, %v1456
    %s1461 = scalar_lea.vmem [#allocation1], 345
    %v1462 = vld [vmem:[%s1461] sm:$0x4]
    %vm1463 = vcmask 1042434
    %v1464 = vsel %vm1463, %v1462, %v1460
    %s1465 = scalar_lea.vmem [#allocation1], 376
    %v1466 = vld [vmem:[%s1465] sm:$0x8]
    %vm1467 = vcmask 1043459
    %v1468 = vsel %vm1467, %v1466, %v1464
    %s1469 = scalar_lea.vmem [#allocation1], 407
    %v1470 = vld [vmem:[%s1469] sm:$0x10]
    %vm1471 = vcmask 1044484
    %v1472 = vsel %vm1471, %v1470, %v1468
    %s1473 = scalar_lea.vmem [#allocation1], 438
    %v1474 = vld [vmem:[%s1473] sm:$0x20]
    %vm1475 = vcmask 1045509
    %v1476 = vsel %vm1475, %v1474, %v1472
    %s1477 = scalar_lea.vmem [#allocation1], 469
    %v1478 = vld [vmem:[%s1477] sm:$0x40]
    %vm1479 = vcmask 1046534
    %v1480 = vsel %vm1479, %v1478, %v1476
    %s1481 = scalar_lea.vmem [#allocation1], 500
    %v1482 = vld [vmem:[%s1481] sm:$0x80]
    %vm1483 = vcmask 1047559
    %v1484 = vsel %vm1483, %v1482, %v1480
    %1485 = vrot.lane.b32.xlu0 %v1484, 96
    %v1486 = vpop.permute.xlu0 %1485
    %vm1487 = vcmask 1048320
    %s1488 = scalar_lea.vmem [#allocation0], 112
    %1489 = vst.msk [vmem:[%s1488] sm:$0xff] %vm1487, %v1486
    %s1490 = scalar_lea.vmem [#allocation1], 15
    %v1491 = vld [vmem:[%s1490] sm:$0x1]
    %s1492 = scalar_lea.vmem [#allocation1], 46
    %v1493 = vld [vmem:[%s1492] sm:$0x2]
    %vm1494 = vcmask 1041409
    %v1495 = vsel %vm1494, %v1493, %v1491
    %s1496 = scalar_lea.vmem [#allocation1], 77
    %v1497 = vld [vmem:[%s1496] sm:$0x4]
    %vm1498 = vcmask 1042434
    %v1499 = vsel %vm1498, %v1497, %v1495
    %s1500 = scalar_lea.vmem [#allocation1], 108
    %v1501 = vld [vmem:[%s1500] sm:$0x8]
    %vm1502 = vcmask 1043459
    %v1503 = vsel %vm1502, %v1501, %v1499
    %s1504 = scalar_lea.vmem [#allocation1], 139
    %v1505 = vld [vmem:[%s1504] sm:$0x10]
    %vm1506 = vcmask 1044484
    %v1507 = vsel %vm1506, %v1505, %v1503
    %s1508 = scalar_lea.vmem [#allocation1], 170
    %v1509 = vld [vmem:[%s1508] sm:$0x20]
    %vm1510 = vcmask 1045509
    %v1511 = vsel %vm1510, %v1509, %v1507
    %s1512 = scalar_lea.vmem [#allocation1], 201
    %v1513 = vld [vmem:[%s1512] sm:$0x40]
    %vm1514 = vcmask 1046534
    %v1515 = vsel %vm1514, %v1513, %v1511
    %s1516 = scalar_lea.vmem [#allocation1], 232
    %v1517 = vld [vmem:[%s1516] sm:$0x80]
    %vm1518 = vcmask 1047559
    %v1519 = vsel %vm1518, %v1517, %v1515
    %1520 = vrot.lane.b32.xlu0 %v1519, 96
    %v1521 = vpop.permute.xlu0 %1520
    %vm1522 = vcmask 1048320
    %s1523 = scalar_lea.vmem [#allocation0], 24
    %1524 = vst.msk [vmem:[%s1523] sm:$0xff] %vm1522, %v1521
    %s1525 = scalar_lea.vmem [#allocation1], 31
    %v1526 = vld [vmem:[%s1525] sm:$0x1]
    %s1527 = scalar_lea.vmem [#allocation1], 62
    %v1528 = vld [vmem:[%s1527] sm:$0x2]
    %vm1529 = vcmask 1041409
    %v1530 = vsel %vm1529, %v1528, %v1526
    %s1531 = scalar_lea.vmem [#allocation1], 93
    %v1532 = vld [vmem:[%s1531] sm:$0x4]
    %vm1533 = vcmask 1042434
    %v1534 = vsel %vm1533, %v1532, %v1530
    %s1535 = scalar_lea.vmem [#allocation1], 124
    %v1536 = vld [vmem:[%s1535] sm:$0x8]
    %vm1537 = vcmask 1043459
    %v1538 = vsel %vm1537, %v1536, %v1534
    %s1539 = scalar_lea.vmem [#allocation1], 155
    %v1540 = vld [vmem:[%s1539] sm:$0x10]
    %vm1541 = vcmask 1044484
    %v1542 = vsel %vm1541, %v1540, %v1538
    %s1543 = scalar_lea.vmem [#allocation1], 186
    %v1544 = vld [vmem:[%s1543] sm:$0x20]
    %vm1545 = vcmask 1045509
    %v1546 = vsel %vm1545, %v1544, %v1542
    %s1547 = scalar_lea.vmem [#allocation1], 217
    %v1548 = vld [vmem:[%s1547] sm:$0x40]
    %vm1549 = vcmask 1046534
    %v1550 = vsel %vm1549, %v1548, %v1546
    %s1551 = scalar_lea.vmem [#allocation1], 248
    %v1552 = vld [vmem:[%s1551] sm:$0x80]
    %vm1553 = vcmask 1047559
    %v1554 = vsel %vm1553, %v1552, %v1550
    %1555 = vrot.lane.b32.xlu0 %v1554, 96
    %v1556 = vpop.permute.xlu0 %1555
    %vm1557 = vcmask 1048320
    %s1558 = scalar_lea.vmem [#allocation0], 56
    %1559 = vst.msk [vmem:[%s1558] sm:$0xff] %vm1557, %v1556
    %s1560 = scalar_lea.vmem [#allocation1], 271
    %v1561 = vld [vmem:[%s1560] sm:$0x1]
    %s1562 = scalar_lea.vmem [#allocation1], 302
    %v1563 = vld [vmem:[%s1562] sm:$0x2]
    %vm1564 = vcmask 1041409
    %v1565 = vsel %vm1564, %v1563, %v1561
    %s1566 = scalar_lea.vmem [#allocation1], 333
    %v1567 = vld [vmem:[%s1566] sm:$0x4]
    %vm1568 = vcmask 1042434
    %v1569 = vsel %vm1568, %v1567, %v1565
    %s1570 = scalar_lea.vmem [#allocation1], 364
    %v1571 = vld [vmem:[%s1570] sm:$0x8]
    %vm1572 = vcmask 1043459
    %v1573 = vsel %vm1572, %v1571, %v1569
    %s1574 = scalar_lea.vmem [#allocation1], 395
    %v1575 = vld [vmem:[%s1574] sm:$0x10]
    %vm1576 = vcmask 1044484
    %v1577 = vsel %vm1576, %v1575, %v1573
    %s1578 = scalar_lea.vmem [#allocation1], 426
    %v1579 = vld [vmem:[%s1578] sm:$0x20]
    %vm1580 = vcmask 1045509
    %v1581 = vsel %vm1580, %v1579, %v1577
    %s1582 = scalar_lea.vmem [#allocation1], 457
    %v1583 = vld [vmem:[%s1582] sm:$0x40]
    %vm1584 = vcmask 1046534
    %v1585 = vsel %vm1584, %v1583, %v1581
    %s1586 = scalar_lea.vmem [#allocation1], 488
    %v1587 = vld [vmem:[%s1586] sm:$0x80]
    %vm1588 = vcmask 1047559
    %v1589 = vsel %vm1588, %v1587, %v1585
    %1590 = vrot.lane.b32.xlu0 %v1589, 96
    %v1591 = vpop.permute.xlu0 %1590
    %vm1592 = vcmask 1048320
    %s1593 = scalar_lea.vmem [#allocation0], 88
    %1594 = vst.msk [vmem:[%s1593] sm:$0xff] %vm1592, %v1591
    %s1595 = scalar_lea.vmem [#allocation1], 287
    %v1596 = vld [vmem:[%s1595] sm:$0x1]
    %s1597 = scalar_lea.vmem [#allocation1], 318
    %v1598 = vld [vmem:[%s1597] sm:$0x2]
    %vm1599 = vcmask 1041409
    %v1600 = vsel %vm1599, %v1598, %v1596
    %s1601 = scalar_lea.vmem [#allocation1], 349
    %v1602 = vld [vmem:[%s1601] sm:$0x4]
    %vm1603 = vcmask 1042434
    %v1604 = vsel %vm1603, %v1602, %v1600
    %s1605 = scalar_lea.vmem [#allocation1], 380
    %v1606 = vld [vmem:[%s1605] sm:$0x8]
    %vm1607 = vcmask 1043459
    %v1608 = vsel %vm1607, %v1606, %v1604
    %s1609 = scalar_lea.vmem [#allocation1], 411
    %v1610 = vld [vmem:[%s1609] sm:$0x10]
    %vm1611 = vcmask 1044484
    %v1612 = vsel %vm1611, %v1610, %v1608
    %s1613 = scalar_lea.vmem [#allocation1], 442
    %v1614 = vld [vmem:[%s1613] sm:$0x20]
    %vm1615 = vcmask 1045509
    %v1616 = vsel %vm1615, %v1614, %v1612
    %s1617 = scalar_lea.vmem [#allocation1], 473
    %v1618 = vld [vmem:[%s1617] sm:$0x40]
    %vm1619 = vcmask 1046534
    %v1620 = vsel %vm1619, %v1618, %v1616
    %s1621 = scalar_lea.vmem [#allocation1], 504
    %v1622 = vld [vmem:[%s1621] sm:$0x80]
    %vm1623 = vcmask 1047559
    %v1624 = vsel %vm1623, %v1622, %v1620
    %1625 = vrot.lane.b32.xlu0 %v1624, 96
    %v1626 = vpop.permute.xlu0 %1625
    %vm1627 = vcmask 1048320
    %s1628 = scalar_lea.vmem [#allocation0], 120
    %1629 = vst.msk [vmem:[%s1628] sm:$0xff] %vm1627, %v1626
    %s1630 = scalar_lea.vmem [#allocation1], 2
    %v1631 = vld [vmem:[%s1630] sm:$0x1]
    %s1632 = scalar_lea.vmem [#allocation1], 33
    %v1633 = vld [vmem:[%s1632] sm:$0x2]
    %vm1634 = vcmask 1041409
    %v1635 = vsel %vm1634, %v1633, %v1631
    %s1636 = scalar_lea.vmem [#allocation1], 64
    %v1637 = vld [vmem:[%s1636] sm:$0x4]
    %vm1638 = vcmask 1042434
    %v1639 = vsel %vm1638, %v1637, %v1635
    %s1640 = scalar_lea.vmem [#allocation1], 95
    %v1641 = vld [vmem:[%s1640] sm:$0x8]
    %vm1642 = vcmask 1043459
    %v1643 = vsel %vm1642, %v1641, %v1639
    %s1644 = scalar_lea.vmem [#allocation1], 126
    %v1645 = vld [vmem:[%s1644] sm:$0x10]
    %vm1646 = vcmask 1044484
    %v1647 = vsel %vm1646, %v1645, %v1643
    %s1648 = scalar_lea.vmem [#allocation1], 157
    %v1649 = vld [vmem:[%s1648] sm:$0x20]
    %vm1650 = vcmask 1045509
    %v1651 = vsel %vm1650, %v1649, %v1647
    %s1652 = scalar_lea.vmem [#allocation1], 188
    %v1653 = vld [vmem:[%s1652] sm:$0x40]
    %vm1654 = vcmask 1046534
    %v1655 = vsel %vm1654, %v1653, %v1651
    %s1656 = scalar_lea.vmem [#allocation1], 219
    %v1657 = vld [vmem:[%s1656] sm:$0x80]
    %vm1658 = vcmask 1047559
    %v1659 = vsel %vm1658, %v1657, %v1655
    %1660 = vrot.lane.b32.xlu0 %v1659, 64
    %v1661 = vpop.permute.xlu0 %1660
    %vm1662 = vcmask 785920
    %1663 = vst.msk [vmem:[#allocation0] sm:$0xff] %vm1662, %v1661
    %s1664 = scalar_lea.vmem [#allocation1], 18
    %v1665 = vld [vmem:[%s1664] sm:$0x1]
    %s1666 = scalar_lea.vmem [#allocation1], 49
    %v1667 = vld [vmem:[%s1666] sm:$0x2]
    %vm1668 = vcmask 1041409
    %v1669 = vsel %vm1668, %v1667, %v1665
    %s1670 = scalar_lea.vmem [#allocation1], 80
    %v1671 = vld [vmem:[%s1670] sm:$0x4]
    %vm1672 = vcmask 1042434
    %v1673 = vsel %vm1672, %v1671, %v1669
    %s1674 = scalar_lea.vmem [#allocation1], 111
    %v1675 = vld [vmem:[%s1674] sm:$0x8]
    %vm1676 = vcmask 1043459
    %v1677 = vsel %vm1676, %v1675, %v1673
    %s1678 = scalar_lea.vmem [#allocation1], 142
    %v1679 = vld [vmem:[%s1678] sm:$0x10]
    %vm1680 = vcmask 1044484
    %v1681 = vsel %vm1680, %v1679, %v1677
    %s1682 = scalar_lea.vmem [#allocation1], 173
    %v1683 = vld [vmem:[%s1682] sm:$0x20]
    %vm1684 = vcmask 1045509
    %v1685 = vsel %vm1684, %v1683, %v1681
    %s1686 = scalar_lea.vmem [#allocation1], 204
    %v1687 = vld [vmem:[%s1686] sm:$0x40]
    %vm1688 = vcmask 1046534
    %v1689 = vsel %vm1688, %v1687, %v1685
    %s1690 = scalar_lea.vmem [#allocation1], 235
    %v1691 = vld [vmem:[%s1690] sm:$0x80]
    %vm1692 = vcmask 1047559
    %v1693 = vsel %vm1692, %v1691, %v1689
    %1694 = vrot.lane.b32.xlu0 %v1693, 64
    %v1695 = vpop.permute.xlu0 %1694
    %vm1696 = vcmask 785920
    %s1697 = scalar_lea.vmem [#allocation0], 32
    %1698 = vst.msk [vmem:[%s1697] sm:$0xff] %vm1696, %v1695
    %s1699 = scalar_lea.vmem [#allocation1], 258
    %v1700 = vld [vmem:[%s1699] sm:$0x1]
    %s1701 = scalar_lea.vmem [#allocation1], 289
    %v1702 = vld [vmem:[%s1701] sm:$0x2]
    %vm1703 = vcmask 1041409
    %v1704 = vsel %vm1703, %v1702, %v1700
    %s1705 = scalar_lea.vmem [#allocation1], 320
    %v1706 = vld [vmem:[%s1705] sm:$0x4]
    %vm1707 = vcmask 1042434
    %v1708 = vsel %vm1707, %v1706, %v1704
    %s1709 = scalar_lea.vmem [#allocation1], 351
    %v1710 = vld [vmem:[%s1709] sm:$0x8]
    %vm1711 = vcmask 1043459
    %v1712 = vsel %vm1711, %v1710, %v1708
    %s1713 = scalar_lea.vmem [#allocation1], 382
    %v1714 = vld [vmem:[%s1713] sm:$0x10]
    %vm1715 = vcmask 1044484
    %v1716 = vsel %vm1715, %v1714, %v1712
    %s1717 = scalar_lea.vmem [#allocation1], 413
    %v1718 = vld [vmem:[%s1717] sm:$0x20]
    %vm1719 = vcmask 1045509
    %v1720 = vsel %vm1719, %v1718, %v1716
    %s1721 = scalar_lea.vmem [#allocation1], 444
    %v1722 = vld [vmem:[%s1721] sm:$0x40]
    %vm1723 = vcmask 1046534
    %v1724 = vsel %vm1723, %v1722, %v1720
    %s1725 = scalar_lea.vmem [#allocation1], 475
    %v1726 = vld [vmem:[%s1725] sm:$0x80]
    %vm1727 = vcmask 1047559
    %v1728 = vsel %vm1727, %v1726, %v1724
    %1729 = vrot.lane.b32.xlu0 %v1728, 64
    %v1730 = vpop.permute.xlu0 %1729
    %vm1731 = vcmask 785920
    %s1732 = scalar_lea.vmem [#allocation0], 64
    %1733 = vst.msk [vmem:[%s1732] sm:$0xff] %vm1731, %v1730
    %s1734 = scalar_lea.vmem [#allocation1], 274
    %v1735 = vld [vmem:[%s1734] sm:$0x1]
    %s1736 = scalar_lea.vmem [#allocation1], 305
    %v1737 = vld [vmem:[%s1736] sm:$0x2]
    %vm1738 = vcmask 1041409
    %v1739 = vsel %vm1738, %v1737, %v1735
    %s1740 = scalar_lea.vmem [#allocation1], 336
    %v1741 = vld [vmem:[%s1740] sm:$0x4]
    %vm1742 = vcmask 1042434
    %v1743 = vsel %vm1742, %v1741, %v1739
    %s1744 = scalar_lea.vmem [#allocation1], 367
    %v1745 = vld [vmem:[%s1744] sm:$0x8]
    %vm1746 = vcmask 1043459
    %v1747 = vsel %vm1746, %v1745, %v1743
    %s1748 = scalar_lea.vmem [#allocation1], 398
    %v1749 = vld [vmem:[%s1748] sm:$0x10]
    %vm1750 = vcmask 1044484
    %v1751 = vsel %vm1750, %v1749, %v1747
    %s1752 = scalar_lea.vmem [#allocation1], 429
    %v1753 = vld [vmem:[%s1752] sm:$0x20]
    %vm1754 = vcmask 1045509
    %v1755 = vsel %vm1754, %v1753, %v1751
    %s1756 = scalar_lea.vmem [#allocation1], 460
    %v1757 = vld [vmem:[%s1756] sm:$0x40]
    %vm1758 = vcmask 1046534
    %v1759 = vsel %vm1758, %v1757, %v1755
    %s1760 = scalar_lea.vmem [#allocation1], 491
    %v1761 = vld [vmem:[%s1760] sm:$0x80]
    %vm1762 = vcmask 1047559
    %v1763 = vsel %vm1762, %v1761, %v1759
    %1764 = vrot.lane.b32.xlu0 %v1763, 64
    %v1765 = vpop.permute.xlu0 %1764
    %vm1766 = vcmask 785920
    %s1767 = scalar_lea.vmem [#allocation0], 96
    %1768 = vst.msk [vmem:[%s1767] sm:$0xff] %vm1766, %v1765
    %s1769 = scalar_lea.vmem [#allocation1], 6
    %v1770 = vld [vmem:[%s1769] sm:$0x1]
    %s1771 = scalar_lea.vmem [#allocation1], 37
    %v1772 = vld [vmem:[%s1771] sm:$0x2]
    %vm1773 = vcmask 1041409
    %v1774 = vsel %vm1773, %v1772, %v1770
    %s1775 = scalar_lea.vmem [#allocation1], 68
    %v1776 = vld [vmem:[%s1775] sm:$0x4]
    %vm1777 = vcmask 1042434
    %v1778 = vsel %vm1777, %v1776, %v1774
    %s1779 = scalar_lea.vmem [#allocation1], 99
    %v1780 = vld [vmem:[%s1779] sm:$0x8]
    %vm1781 = vcmask 1043459
    %v1782 = vsel %vm1781, %v1780, %v1778
    %s1783 = scalar_lea.vmem [#allocation1], 130
    %v1784 = vld [vmem:[%s1783] sm:$0x10]
    %vm1785 = vcmask 1044484
    %v1786 = vsel %vm1785, %v1784, %v1782
    %s1787 = scalar_lea.vmem [#allocation1], 161
    %v1788 = vld [vmem:[%s1787] sm:$0x20]
    %vm1789 = vcmask 1045509
    %v1790 = vsel %vm1789, %v1788, %v1786
    %s1791 = scalar_lea.vmem [#allocation1], 192
    %v1792 = vld [vmem:[%s1791] sm:$0x40]
    %vm1793 = vcmask 1046534
    %v1794 = vsel %vm1793, %v1792, %v1790
    %s1795 = scalar_lea.vmem [#allocation1], 223
    %v1796 = vld [vmem:[%s1795] sm:$0x80]
    %vm1797 = vcmask 1047559
    %v1798 = vsel %vm1797, %v1796, %v1794
    %1799 = vrot.lane.b32.xlu0 %v1798, 64
    %v1800 = vpop.permute.xlu0 %1799
    %vm1801 = vcmask 785920
    %s1802 = scalar_lea.vmem [#allocation0], 8
    %1803 = vst.msk [vmem:[%s1802] sm:$0xff] %vm1801, %v1800
    %s1804 = scalar_lea.vmem [#allocation1], 22
    %v1805 = vld [vmem:[%s1804] sm:$0x1]
    %s1806 = scalar_lea.vmem [#allocation1], 53
    %v1807 = vld [vmem:[%s1806] sm:$0x2]
    %vm1808 = vcmask 1041409
    %v1809 = vsel %vm1808, %v1807, %v1805
    %s1810 = scalar_lea.vmem [#allocation1], 84
    %v1811 = vld [vmem:[%s1810] sm:$0x4]
    %vm1812 = vcmask 1042434
    %v1813 = vsel %vm1812, %v1811, %v1809
    %s1814 = scalar_lea.vmem [#allocation1], 115
    %v1815 = vld [vmem:[%s1814] sm:$0x8]
    %vm1816 = vcmask 1043459
    %v1817 = vsel %vm1816, %v1815, %v1813
    %s1818 = scalar_lea.vmem [#allocation1], 146
    %v1819 = vld [vmem:[%s1818] sm:$0x10]
    %vm1820 = vcmask 1044484
    %v1821 = vsel %vm1820, %v1819, %v1817
    %s1822 = scalar_lea.vmem [#allocation1], 177
    %v1823 = vld [vmem:[%s1822] sm:$0x20]
    %vm1824 = vcmask 1045509
    %v1825 = vsel %vm1824, %v1823, %v1821
    %s1826 = scalar_lea.vmem [#allocation1], 208
    %v1827 = vld [vmem:[%s1826] sm:$0x40]
    %vm1828 = vcmask 1046534
    %v1829 = vsel %vm1828, %v1827, %v1825
    %s1830 = scalar_lea.vmem [#allocation1], 239
    %v1831 = vld [vmem:[%s1830] sm:$0x80]
    %vm1832 = vcmask 1047559
    %v1833 = vsel %vm1832, %v1831, %v1829
    %1834 = vrot.lane.b32.xlu0 %v1833, 64
    %v1835 = vpop.permute.xlu0 %1834
    %vm1836 = vcmask 785920
    %s1837 = scalar_lea.vmem [#allocation0], 40
    %1838 = vst.msk [vmem:[%s1837] sm:$0xff] %vm1836, %v1835
    %s1839 = scalar_lea.vmem [#allocation1], 262
    %v1840 = vld [vmem:[%s1839] sm:$0x1]
    %s1841 = scalar_lea.vmem [#allocation1], 293
    %v1842 = vld [vmem:[%s1841] sm:$0x2]
    %vm1843 = vcmask 1041409
    %v1844 = vsel %vm1843, %v1842, %v1840
    %s1845 = scalar_lea.vmem [#allocation1], 324
    %v1846 = vld [vmem:[%s1845] sm:$0x4]
    %vm1847 = vcmask 1042434
    %v1848 = vsel %vm1847, %v1846, %v1844
    %s1849 = scalar_lea.vmem [#allocation1], 355
    %v1850 = vld [vmem:[%s1849] sm:$0x8]
    %vm1851 = vcmask 1043459
    %v1852 = vsel %vm1851, %v1850, %v1848
    %s1853 = scalar_lea.vmem [#allocation1], 386
    %v1854 = vld [vmem:[%s1853] sm:$0x10]
    %vm1855 = vcmask 1044484
    %v1856 = vsel %vm1855, %v1854, %v1852
    %s1857 = scalar_lea.vmem [#allocation1], 417
    %v1858 = vld [vmem:[%s1857] sm:$0x20]
    %vm1859 = vcmask 1045509
    %v1860 = vsel %vm1859, %v1858, %v1856
    %s1861 = scalar_lea.vmem [#allocation1], 448
    %v1862 = vld [vmem:[%s1861] sm:$0x40]
    %vm1863 = vcmask 1046534
    %v1864 = vsel %vm1863, %v1862, %v1860
    %s1865 = scalar_lea.vmem [#allocation1], 479
    %v1866 = vld [vmem:[%s1865] sm:$0x80]
    %vm1867 = vcmask 1047559
    %v1868 = vsel %vm1867, %v1866, %v1864
    %1869 = vrot.lane.b32.xlu0 %v1868, 64
    %v1870 = vpop.permute.xlu0 %1869
    %vm1871 = vcmask 785920
    %s1872 = scalar_lea.vmem [#allocation0], 72
    %1873 = vst.msk [vmem:[%s1872] sm:$0xff] %vm1871, %v1870
    %s1874 = scalar_lea.vmem [#allocation1], 278
    %v1875 = vld [vmem:[%s1874] sm:$0x1]
    %s1876 = scalar_lea.vmem [#allocation1], 309
    %v1877 = vld [vmem:[%s1876] sm:$0x2]
    %vm1878 = vcmask 1041409
    %v1879 = vsel %vm1878, %v1877, %v1875
    %s1880 = scalar_lea.vmem [#allocation1], 340
    %v1881 = vld [vmem:[%s1880] sm:$0x4]
    %vm1882 = vcmask 1042434
    %v1883 = vsel %vm1882, %v1881, %v1879
    %s1884 = scalar_lea.vmem [#allocation1], 371
    %v1885 = vld [vmem:[%s1884] sm:$0x8]
    %vm1886 = vcmask 1043459
    %v1887 = vsel %vm1886, %v1885, %v1883
    %s1888 = scalar_lea.vmem [#allocation1], 402
    %v1889 = vld [vmem:[%s1888] sm:$0x10]
    %vm1890 = vcmask 1044484
    %v1891 = vsel %vm1890, %v1889, %v1887
    %s1892 = scalar_lea.vmem [#allocation1], 433
    %v1893 = vld [vmem:[%s1892] sm:$0x20]
    %vm1894 = vcmask 1045509
    %v1895 = vsel %vm1894, %v1893, %v1891
    %s1896 = scalar_lea.vmem [#allocation1], 464
    %v1897 = vld [vmem:[%s1896] sm:$0x40]
    %vm1898 = vcmask 1046534
    %v1899 = vsel %vm1898, %v1897, %v1895
    %s1900 = scalar_lea.vmem [#allocation1], 495
    %v1901 = vld [vmem:[%s1900] sm:$0x80]
    %vm1902 = vcmask 1047559
    %v1903 = vsel %vm1902, %v1901, %v1899
    %1904 = vrot.lane.b32.xlu0 %v1903, 64
    %v1905 = vpop.permute.xlu0 %1904
    %vm1906 = vcmask 785920
    %s1907 = scalar_lea.vmem [#allocation0], 104
    %1908 = vst.msk [vmem:[%s1907] sm:$0xff] %vm1906, %v1905
    %s1909 = scalar_lea.vmem [#allocation1], 10
    %v1910 = vld [vmem:[%s1909] sm:$0x1]
    %s1911 = scalar_lea.vmem [#allocation1], 41
    %v1912 = vld [vmem:[%s1911] sm:$0x2]
    %vm1913 = vcmask 1041409
    %v1914 = vsel %vm1913, %v1912, %v1910
    %s1915 = scalar_lea.vmem [#allocation1], 72
    %v1916 = vld [vmem:[%s1915] sm:$0x4]
    %vm1917 = vcmask 1042434
    %v1918 = vsel %vm1917, %v1916, %v1914
    %s1919 = scalar_lea.vmem [#allocation1], 103
    %v1920 = vld [vmem:[%s1919] sm:$0x8]
    %vm1921 = vcmask 1043459
    %v1922 = vsel %vm1921, %v1920, %v1918
    %s1923 = scalar_lea.vmem [#allocation1], 134
    %v1924 = vld [vmem:[%s1923] sm:$0x10]
    %vm1925 = vcmask 1044484
    %v1926 = vsel %vm1925, %v1924, %v1922
    %s1927 = scalar_lea.vmem [#allocation1], 165
    %v1928 = vld [vmem:[%s1927] sm:$0x20]
    %vm1929 = vcmask 1045509
    %v1930 = vsel %vm1929, %v1928, %v1926
    %s1931 = scalar_lea.vmem [#allocation1], 196
    %v1932 = vld [vmem:[%s1931] sm:$0x40]
    %vm1933 = vcmask 1046534
    %v1934 = vsel %vm1933, %v1932, %v1930
    %s1935 = scalar_lea.vmem [#allocation1], 227
    %v1936 = vld [vmem:[%s1935] sm:$0x80]
    %vm1937 = vcmask 1047559
    %v1938 = vsel %vm1937, %v1936, %v1934
    %1939 = vrot.lane.b32.xlu0 %v1938, 64
    %v1940 = vpop.permute.xlu0 %1939
    %vm1941 = vcmask 785920
    %s1942 = scalar_lea.vmem [#allocation0], 16
    %1943 = vst.msk [vmem:[%s1942] sm:$0xff] %vm1941, %v1940
    %s1944 = scalar_lea.vmem [#allocation1], 26
    %v1945 = vld [vmem:[%s1944] sm:$0x1]
    %s1946 = scalar_lea.vmem [#allocation1], 57
    %v1947 = vld [vmem:[%s1946] sm:$0x2]
    %vm1948 = vcmask 1041409
    %v1949 = vsel %vm1948, %v1947, %v1945
    %s1950 = scalar_lea.vmem [#allocation1], 88
    %v1951 = vld [vmem:[%s1950] sm:$0x4]
    %vm1952 = vcmask 1042434
    %v1953 = vsel %vm1952, %v1951, %v1949
    %s1954 = scalar_lea.vmem [#allocation1], 119
    %v1955 = vld [vmem:[%s1954] sm:$0x8]
    %vm1956 = vcmask 1043459
    %v1957 = vsel %vm1956, %v1955, %v1953
    %s1958 = scalar_lea.vmem [#allocation1], 150
    %v1959 = vld [vmem:[%s1958] sm:$0x10]
    %vm1960 = vcmask 1044484
    %v1961 = vsel %vm1960, %v1959, %v1957
    %s1962 = scalar_lea.vmem [#allocation1], 181
    %v1963 = vld [vmem:[%s1962] sm:$0x20]
    %vm1964 = vcmask 1045509
    %v1965 = vsel %vm1964, %v1963, %v1961
    %s1966 = scalar_lea.vmem [#allocation1], 212
    %v1967 = vld [vmem:[%s1966] sm:$0x40]
    %vm1968 = vcmask 1046534
    %v1969 = vsel %vm1968, %v1967, %v1965
    %s1970 = scalar_lea.vmem [#allocation1], 243
    %v1971 = vld [vmem:[%s1970] sm:$0x80]
    %vm1972 = vcmask 1047559
    %v1973 = vsel %vm1972, %v1971, %v1969
    %1974 = vrot.lane.b32.xlu0 %v1973, 64
    %v1975 = vpop.permute.xlu0 %1974
    %vm1976 = vcmask 785920
    %s1977 = scalar_lea.vmem [#allocation0], 48
    %1978 = vst.msk [vmem:[%s1977] sm:$0xff] %vm1976, %v1975
    %s1979 = scalar_lea.vmem [#allocation1], 266
    %v1980 = vld [vmem:[%s1979] sm:$0x1]
    %s1981 = scalar_lea.vmem [#allocation1], 297
    %v1982 = vld [vmem:[%s1981] sm:$0x2]
    %vm1983 = vcmask 1041409
    %v1984 = vsel %vm1983, %v1982, %v1980
    %s1985 = scalar_lea.vmem [#allocation1], 328
    %v1986 = vld [vmem:[%s1985] sm:$0x4]
    %vm1987 = vcmask 1042434
    %v1988 = vsel %vm1987, %v1986, %v1984
    %s1989 = scalar_lea.vmem [#allocation1], 359
    %v1990 = vld [vmem:[%s1989] sm:$0x8]
    %vm1991 = vcmask 1043459
    %v1992 = vsel %vm1991, %v1990, %v1988
    %s1993 = scalar_lea.vmem [#allocation1], 390
    %v1994 = vld [vmem:[%s1993] sm:$0x10]
    %vm1995 = vcmask 1044484
    %v1996 = vsel %vm1995, %v1994, %v1992
    %s1997 = scalar_lea.vmem [#allocation1], 421
    %v1998 = vld [vmem:[%s1997] sm:$0x20]
    %vm1999 = vcmask 1045509
    %v2000 = vsel %vm1999, %v1998, %v1996
    %s2001 = scalar_lea.vmem [#allocation1], 452
    %v2002 = vld [vmem:[%s2001] sm:$0x40]
    %vm2003 = vcmask 1046534
    %v2004 = vsel %vm2003, %v2002, %v2000
    %s2005 = scalar_lea.vmem [#allocation1], 483
    %v2006 = vld [vmem:[%s2005] sm:$0x80]
    %vm2007 = vcmask 1047559
    %v2008 = vsel %vm2007, %v2006, %v2004
    %2009 = vrot.lane.b32.xlu0 %v2008, 64
    %v2010 = vpop.permute.xlu0 %2009
    %vm2011 = vcmask 785920
    %s2012 = scalar_lea.vmem [#allocation0], 80
    %2013 = vst.msk [vmem:[%s2012] sm:$0xff] %vm2011, %v2010
    %s2014 = scalar_lea.vmem [#allocation1], 282
    %v2015 = vld [vmem:[%s2014] sm:$0x1]
    %s2016 = scalar_lea.vmem [#allocation1], 313
    %v2017 = vld [vmem:[%s2016] sm:$0x2]
    %vm2018 = vcmask 1041409
    %v2019 = vsel %vm2018, %v2017, %v2015
    %s2020 = scalar_lea.vmem [#allocation1], 344
    %v2021 = vld [vmem:[%s2020] sm:$0x4]
    %vm2022 = vcmask 1042434
    %v2023 = vsel %vm2022, %v2021, %v2019
    %s2024 = scalar_lea.vmem [#allocation1], 375
    %v2025 = vld [vmem:[%s2024] sm:$0x8]
    %vm2026 = vcmask 1043459
    %v2027 = vsel %vm2026, %v2025, %v2023
    %s2028 = scalar_lea.vmem [#allocation1], 406
    %v2029 = vld [vmem:[%s2028] sm:$0x10]
    %vm2030 = vcmask 1044484
    %v2031 = vsel %vm2030, %v2029, %v2027
    %s2032 = scalar_lea.vmem [#allocation1], 437
    %v2033 = vld [vmem:[%s2032] sm:$0x20]
    %vm2034 = vcmask 1045509
    %v2035 = vsel %vm2034, %v2033, %v2031
    %s2036 = scalar_lea.vmem [#allocation1], 468
    %v2037 = vld [vmem:[%s2036] sm:$0x40]
    %vm2038 = vcmask 1046534
    %v2039 = vsel %vm2038, %v2037, %v2035
    %s2040 = scalar_lea.vmem [#allocation1], 499
    %v2041 = vld [vmem:[%s2040] sm:$0x80]
    %vm2042 = vcmask 1047559
    %v2043 = vsel %vm2042, %v2041, %v2039
    %2044 = vrot.lane.b32.xlu0 %v2043, 64
    %v2045 = vpop.permute.xlu0 %2044
    %vm2046 = vcmask 785920
    %s2047 = scalar_lea.vmem [#allocation0], 112
    %2048 = vst.msk [vmem:[%s2047] sm:$0xff] %vm2046, %v2045
    %s2049 = scalar_lea.vmem [#allocation1], 14
    %v2050 = vld [vmem:[%s2049] sm:$0x1]
    %s2051 = scalar_lea.vmem [#allocation1], 45
    %v2052 = vld [vmem:[%s2051] sm:$0x2]
    %vm2053 = vcmask 1041409
    %v2054 = vsel %vm2053, %v2052, %v2050
    %s2055 = scalar_lea.vmem [#allocation1], 76
    %v2056 = vld [vmem:[%s2055] sm:$0x4]
    %vm2057 = vcmask 1042434
    %v2058 = vsel %vm2057, %v2056, %v2054
    %s2059 = scalar_lea.vmem [#allocation1], 107
    %v2060 = vld [vmem:[%s2059] sm:$0x8]
    %vm2061 = vcmask 1043459
    %v2062 = vsel %vm2061, %v2060, %v2058
    %s2063 = scalar_lea.vmem [#allocation1], 138
    %v2064 = vld [vmem:[%s2063] sm:$0x10]
    %vm2065 = vcmask 1044484
    %v2066 = vsel %vm2065, %v2064, %v2062
    %s2067 = scalar_lea.vmem [#allocation1], 169
    %v2068 = vld [vmem:[%s2067] sm:$0x20]
    %vm2069 = vcmask 1045509
    %v2070 = vsel %vm2069, %v2068, %v2066
    %s2071 = scalar_lea.vmem [#allocation1], 200
    %v2072 = vld [vmem:[%s2071] sm:$0x40]
    %vm2073 = vcmask 1046534
    %v2074 = vsel %vm2073, %v2072, %v2070
    %s2075 = scalar_lea.vmem [#allocation1], 231
    %v2076 = vld [vmem:[%s2075] sm:$0x80]
    %vm2077 = vcmask 1047559
    %v2078 = vsel %vm2077, %v2076, %v2074
    %2079 = vrot.lane.b32.xlu0 %v2078, 64
    %v2080 = vpop.permute.xlu0 %2079
    %vm2081 = vcmask 785920
    %s2082 = scalar_lea.vmem [#allocation0], 24
    %2083 = vst.msk [vmem:[%s2082] sm:$0xff] %vm2081, %v2080
    %s2084 = scalar_lea.vmem [#allocation1], 30
    %v2085 = vld [vmem:[%s2084] sm:$0x1]
    %s2086 = scalar_lea.vmem [#allocation1], 61
    %v2087 = vld [vmem:[%s2086] sm:$0x2]
    %vm2088 = vcmask 1041409
    %v2089 = vsel %vm2088, %v2087, %v2085
    %s2090 = scalar_lea.vmem [#allocation1], 92
    %v2091 = vld [vmem:[%s2090] sm:$0x4]
    %vm2092 = vcmask 1042434
    %v2093 = vsel %vm2092, %v2091, %v2089
    %s2094 = scalar_lea.vmem [#allocation1], 123
    %v2095 = vld [vmem:[%s2094] sm:$0x8]
    %vm2096 = vcmask 1043459
    %v2097 = vsel %vm2096, %v2095, %v2093
    %s2098 = scalar_lea.vmem [#allocation1], 154
    %v2099 = vld [vmem:[%s2098] sm:$0x10]
    %vm2100 = vcmask 1044484
    %v2101 = vsel %vm2100, %v2099, %v2097
    %s2102 = scalar_lea.vmem [#allocation1], 185
    %v2103 = vld [vmem:[%s2102] sm:$0x20]
    %vm2104 = vcmask 1045509
    %v2105 = vsel %vm2104, %v2103, %v2101
    %s2106 = scalar_lea.vmem [#allocation1], 216
    %v2107 = vld [vmem:[%s2106] sm:$0x40]
    %vm2108 = vcmask 1046534
    %v2109 = vsel %vm2108, %v2107, %v2105
    %s2110 = scalar_lea.vmem [#allocation1], 247
    %v2111 = vld [vmem:[%s2110] sm:$0x80]
    %vm2112 = vcmask 1047559
    %v2113 = vsel %vm2112, %v2111, %v2109
    %2114 = vrot.lane.b32.xlu0 %v2113, 64
    %v2115 = vpop.permute.xlu0 %2114
    %vm2116 = vcmask 785920
    %s2117 = scalar_lea.vmem [#allocation0], 56
    %2118 = vst.msk [vmem:[%s2117] sm:$0xff] %vm2116, %v2115
    %s2119 = scalar_lea.vmem [#allocation1], 270
    %v2120 = vld [vmem:[%s2119] sm:$0x1]
    %s2121 = scalar_lea.vmem [#allocation1], 301
    %v2122 = vld [vmem:[%s2121] sm:$0x2]
    %vm2123 = vcmask 1041409
    %v2124 = vsel %vm2123, %v2122, %v2120
    %s2125 = scalar_lea.vmem [#allocation1], 332
    %v2126 = vld [vmem:[%s2125] sm:$0x4]
    %vm2127 = vcmask 1042434
    %v2128 = vsel %vm2127, %v2126, %v2124
    %s2129 = scalar_lea.vmem [#allocation1], 363
    %v2130 = vld [vmem:[%s2129] sm:$0x8]
    %vm2131 = vcmask 1043459
    %v2132 = vsel %vm2131, %v2130, %v2128
    %s2133 = scalar_lea.vmem [#allocation1], 394
    %v2134 = vld [vmem:[%s2133] sm:$0x10]
    %vm2135 = vcmask 1044484
    %v2136 = vsel %vm2135, %v2134, %v2132
    %s2137 = scalar_lea.vmem [#allocation1], 425
    %v2138 = vld [vmem:[%s2137] sm:$0x20]
    %vm2139 = vcmask 1045509
    %v2140 = vsel %vm2139, %v2138, %v2136
    %s2141 = scalar_lea.vmem [#allocation1], 456
    %v2142 = vld [vmem:[%s2141] sm:$0x40]
    %vm2143 = vcmask 1046534
    %v2144 = vsel %vm2143, %v2142, %v2140
    %s2145 = scalar_lea.vmem [#allocation1], 487
    %v2146 = vld [vmem:[%s2145] sm:$0x80]
    %vm2147 = vcmask 1047559
    %v2148 = vsel %vm2147, %v2146, %v2144
    %2149 = vrot.lane.b32.xlu0 %v2148, 64
    %v2150 = vpop.permute.xlu0 %2149
    %vm2151 = vcmask 785920
    %s2152 = scalar_lea.vmem [#allocation0], 88
    %2153 = vst.msk [vmem:[%s2152] sm:$0xff] %vm2151, %v2150
    %s2154 = scalar_lea.vmem [#allocation1], 286
    %v2155 = vld [vmem:[%s2154] sm:$0x1]
    %s2156 = scalar_lea.vmem [#allocation1], 317
    %v2157 = vld [vmem:[%s2156] sm:$0x2]
    %vm2158 = vcmask 1041409
    %v2159 = vsel %vm2158, %v2157, %v2155
    %s2160 = scalar_lea.vmem [#allocation1], 348
    %v2161 = vld [vmem:[%s2160] sm:$0x4]
    %vm2162 = vcmask 1042434
    %v2163 = vsel %vm2162, %v2161, %v2159
    %s2164 = scalar_lea.vmem [#allocation1], 379
    %v2165 = vld [vmem:[%s2164] sm:$0x8]
    %vm2166 = vcmask 1043459
    %v2167 = vsel %vm2166, %v2165, %v2163
    %s2168 = scalar_lea.vmem [#allocation1], 410
    %v2169 = vld [vmem:[%s2168] sm:$0x10]
    %vm2170 = vcmask 1044484
    %v2171 = vsel %vm2170, %v2169, %v2167
    %s2172 = scalar_lea.vmem [#allocation1], 441
    %v2173 = vld [vmem:[%s2172] sm:$0x20]
    %vm2174 = vcmask 1045509
    %v2175 = vsel %vm2174, %v2173, %v2171
    %s2176 = scalar_lea.vmem [#allocation1], 472
    %v2177 = vld [vmem:[%s2176] sm:$0x40]
    %vm2178 = vcmask 1046534
    %v2179 = vsel %vm2178, %v2177, %v2175
    %s2180 = scalar_lea.vmem [#allocation1], 503
    %v2181 = vld [vmem:[%s2180] sm:$0x80]
    %vm2182 = vcmask 1047559
    %v2183 = vsel %vm2182, %v2181, %v2179
    %2184 = vrot.lane.b32.xlu0 %v2183, 64
    %v2185 = vpop.permute.xlu0 %2184
    %vm2186 = vcmask 785920
    %s2187 = scalar_lea.vmem [#allocation0], 120
    %2188 = vst.msk [vmem:[%s2187] sm:$0xff] %vm2186, %v2185
    %s2189 = scalar_lea.vmem [#allocation1], 1
    %v2190 = vld [vmem:[%s2189] sm:$0x1]
    %s2191 = scalar_lea.vmem [#allocation1], 32
    %v2192 = vld [vmem:[%s2191] sm:$0x2]
    %vm2193 = vcmask 1041409
    %v2194 = vsel %vm2193, %v2192, %v2190
    %s2195 = scalar_lea.vmem [#allocation1], 63
    %v2196 = vld [vmem:[%s2195] sm:$0x4]
    %vm2197 = vcmask 1042434
    %v2198 = vsel %vm2197, %v2196, %v2194
    %s2199 = scalar_lea.vmem [#allocation1], 94
    %v2200 = vld [vmem:[%s2199] sm:$0x8]
    %vm2201 = vcmask 1043459
    %v2202 = vsel %vm2201, %v2200, %v2198
    %s2203 = scalar_lea.vmem [#allocation1], 125
    %v2204 = vld [vmem:[%s2203] sm:$0x10]
    %vm2205 = vcmask 1044484
    %v2206 = vsel %vm2205, %v2204, %v2202
    %s2207 = scalar_lea.vmem [#allocation1], 156
    %v2208 = vld [vmem:[%s2207] sm:$0x20]
    %vm2209 = vcmask 1045509
    %v2210 = vsel %vm2209, %v2208, %v2206
    %s2211 = scalar_lea.vmem [#allocation1], 187
    %v2212 = vld [vmem:[%s2211] sm:$0x40]
    %vm2213 = vcmask 1046534
    %v2214 = vsel %vm2213, %v2212, %v2210
    %s2215 = scalar_lea.vmem [#allocation1], 218
    %v2216 = vld [vmem:[%s2215] sm:$0x80]
    %vm2217 = vcmask 1047559
    %v2218 = vsel %vm2217, %v2216, %v2214
    %2219 = vrot.lane.b32.xlu0 %v2218, 32
    %v2220 = vpop.permute.xlu0 %2219
    %vm2221 = vcmask 523520
    %2222 = vst.msk [vmem:[#allocation0] sm:$0xff] %vm2221, %v2220
    %s2223 = scalar_lea.vmem [#allocation1], 17
    %v2224 = vld [vmem:[%s2223] sm:$0x1]
    %s2225 = scalar_lea.vmem [#allocation1], 48
    %v2226 = vld [vmem:[%s2225] sm:$0x2]
    %vm2227 = vcmask 1041409
    %v2228 = vsel %vm2227, %v2226, %v2224
    %s2229 = scalar_lea.vmem [#allocation1], 79
    %v2230 = vld [vmem:[%s2229] sm:$0x4]
    %vm2231 = vcmask 1042434
    %v2232 = vsel %vm2231, %v2230, %v2228
    %s2233 = scalar_lea.vmem [#allocation1], 110
    %v2234 = vld [vmem:[%s2233] sm:$0x8]
    %vm2235 = vcmask 1043459
    %v2236 = vsel %vm2235, %v2234, %v2232
    %s2237 = scalar_lea.vmem [#allocation1], 141
    %v2238 = vld [vmem:[%s2237] sm:$0x10]
    %vm2239 = vcmask 1044484
    %v2240 = vsel %vm2239, %v2238, %v2236
    %s2241 = scalar_lea.vmem [#allocation1], 172
    %v2242 = vld [vmem:[%s2241] sm:$0x20]
    %vm2243 = vcmask 1045509
    %v2244 = vsel %vm2243, %v2242, %v2240
    %s2245 = scalar_lea.vmem [#allocation1], 203
    %v2246 = vld [vmem:[%s2245] sm:$0x40]
    %vm2247 = vcmask 1046534
    %v2248 = vsel %vm2247, %v2246, %v2244
    %s2249 = scalar_lea.vmem [#allocation1], 234
    %v2250 = vld [vmem:[%s2249] sm:$0x80]
    %vm2251 = vcmask 1047559
    %v2252 = vsel %vm2251, %v2250, %v2248
    %2253 = vrot.lane.b32.xlu0 %v2252, 32
    %v2254 = vpop.permute.xlu0 %2253
    %vm2255 = vcmask 523520
    %s2256 = scalar_lea.vmem [#allocation0], 32
    %2257 = vst.msk [vmem:[%s2256] sm:$0xff] %vm2255, %v2254
    %s2258 = scalar_lea.vmem [#allocation1], 257
    %v2259 = vld [vmem:[%s2258] sm:$0x1]
    %s2260 = scalar_lea.vmem [#allocation1], 288
    %v2261 = vld [vmem:[%s2260] sm:$0x2]
    %vm2262 = vcmask 1041409
    %v2263 = vsel %vm2262, %v2261, %v2259
    %s2264 = scalar_lea.vmem [#allocation1], 319
    %v2265 = vld [vmem:[%s2264] sm:$0x4]
    %vm2266 = vcmask 1042434
    %v2267 = vsel %vm2266, %v2265, %v2263
    %s2268 = scalar_lea.vmem [#allocation1], 350
    %v2269 = vld [vmem:[%s2268] sm:$0x8]
    %vm2270 = vcmask 1043459
    %v2271 = vsel %vm2270, %v2269, %v2267
    %s2272 = scalar_lea.vmem [#allocation1], 381
    %v2273 = vld [vmem:[%s2272] sm:$0x10]
    %vm2274 = vcmask 1044484
    %v2275 = vsel %vm2274, %v2273, %v2271
    %s2276 = scalar_lea.vmem [#allocation1], 412
    %v2277 = vld [vmem:[%s2276] sm:$0x20]
    %vm2278 = vcmask 1045509
    %v2279 = vsel %vm2278, %v2277, %v2275
    %s2280 = scalar_lea.vmem [#allocation1], 443
    %v2281 = vld [vmem:[%s2280] sm:$0x40]
    %vm2282 = vcmask 1046534
    %v2283 = vsel %vm2282, %v2281, %v2279
    %s2284 = scalar_lea.vmem [#allocation1], 474
    %v2285 = vld [vmem:[%s2284] sm:$0x80]
    %vm2286 = vcmask 1047559
    %v2287 = vsel %vm2286, %v2285, %v2283
    %2288 = vrot.lane.b32.xlu0 %v2287, 32
    %v2289 = vpop.permute.xlu0 %2288
    %vm2290 = vcmask 523520
    %s2291 = scalar_lea.vmem [#allocation0], 64
    %2292 = vst.msk [vmem:[%s2291] sm:$0xff] %vm2290, %v2289
    %s2293 = scalar_lea.vmem [#allocation1], 273
    %v2294 = vld [vmem:[%s2293] sm:$0x1]
    %s2295 = scalar_lea.vmem [#allocation1], 304
    %v2296 = vld [vmem:[%s2295] sm:$0x2]
    %vm2297 = vcmask 1041409
    %v2298 = vsel %vm2297, %v2296, %v2294
    %s2299 = scalar_lea.vmem [#allocation1], 335
    %v2300 = vld [vmem:[%s2299] sm:$0x4]
    %vm2301 = vcmask 1042434
    %v2302 = vsel %vm2301, %v2300, %v2298
    %s2303 = scalar_lea.vmem [#allocation1], 366
    %v2304 = vld [vmem:[%s2303] sm:$0x8]
    %vm2305 = vcmask 1043459
    %v2306 = vsel %vm2305, %v2304, %v2302
    %s2307 = scalar_lea.vmem [#allocation1], 397
    %v2308 = vld [vmem:[%s2307] sm:$0x10]
    %vm2309 = vcmask 1044484
    %v2310 = vsel %vm2309, %v2308, %v2306
    %s2311 = scalar_lea.vmem [#allocation1], 428
    %v2312 = vld [vmem:[%s2311] sm:$0x20]
    %vm2313 = vcmask 1045509
    %v2314 = vsel %vm2313, %v2312, %v2310
    %s2315 = scalar_lea.vmem [#allocation1], 459
    %v2316 = vld [vmem:[%s2315] sm:$0x40]
    %vm2317 = vcmask 1046534
    %v2318 = vsel %vm2317, %v2316, %v2314
    %s2319 = scalar_lea.vmem [#allocation1], 490
    %v2320 = vld [vmem:[%s2319] sm:$0x80]
    %vm2321 = vcmask 1047559
    %v2322 = vsel %vm2321, %v2320, %v2318
    %2323 = vrot.lane.b32.xlu0 %v2322, 32
    %v2324 = vpop.permute.xlu0 %2323
    %vm2325 = vcmask 523520
    %s2326 = scalar_lea.vmem [#allocation0], 96
    %2327 = vst.msk [vmem:[%s2326] sm:$0xff] %vm2325, %v2324
    %s2328 = scalar_lea.vmem [#allocation1], 5
    %v2329 = vld [vmem:[%s2328] sm:$0x1]
    %s2330 = scalar_lea.vmem [#allocation1], 36
    %v2331 = vld [vmem:[%s2330] sm:$0x2]
    %vm2332 = vcmask 1041409
    %v2333 = vsel %vm2332, %v2331, %v2329
    %s2334 = scalar_lea.vmem [#allocation1], 67
    %v2335 = vld [vmem:[%s2334] sm:$0x4]
    %vm2336 = vcmask 1042434
    %v2337 = vsel %vm2336, %v2335, %v2333
    %s2338 = scalar_lea.vmem [#allocation1], 98
    %v2339 = vld [vmem:[%s2338] sm:$0x8]
    %vm2340 = vcmask 1043459
    %v2341 = vsel %vm2340, %v2339, %v2337
    %s2342 = scalar_lea.vmem [#allocation1], 129
    %v2343 = vld [vmem:[%s2342] sm:$0x10]
    %vm2344 = vcmask 1044484
    %v2345 = vsel %vm2344, %v2343, %v2341
    %s2346 = scalar_lea.vmem [#allocation1], 160
    %v2347 = vld [vmem:[%s2346] sm:$0x20]
    %vm2348 = vcmask 1045509
    %v2349 = vsel %vm2348, %v2347, %v2345
    %s2350 = scalar_lea.vmem [#allocation1], 191
    %v2351 = vld [vmem:[%s2350] sm:$0x40]
    %vm2352 = vcmask 1046534
    %v2353 = vsel %vm2352, %v2351, %v2349
    %s2354 = scalar_lea.vmem [#allocation1], 222
    %v2355 = vld [vmem:[%s2354] sm:$0x80]
    %vm2356 = vcmask 1047559
    %v2357 = vsel %vm2356, %v2355, %v2353
    %2358 = vrot.lane.b32.xlu0 %v2357, 32
    %v2359 = vpop.permute.xlu0 %2358
    %vm2360 = vcmask 523520
    %s2361 = scalar_lea.vmem [#allocation0], 8
    %2362 = vst.msk [vmem:[%s2361] sm:$0xff] %vm2360, %v2359
    %s2363 = scalar_lea.vmem [#allocation1], 21
    %v2364 = vld [vmem:[%s2363] sm:$0x1]
    %s2365 = scalar_lea.vmem [#allocation1], 52
    %v2366 = vld [vmem:[%s2365] sm:$0x2]
    %vm2367 = vcmask 1041409
    %v2368 = vsel %vm2367, %v2366, %v2364
    %s2369 = scalar_lea.vmem [#allocation1], 83
    %v2370 = vld [vmem:[%s2369] sm:$0x4]
    %vm2371 = vcmask 1042434
    %v2372 = vsel %vm2371, %v2370, %v2368
    %s2373 = scalar_lea.vmem [#allocation1], 114
    %v2374 = vld [vmem:[%s2373] sm:$0x8]
    %vm2375 = vcmask 1043459
    %v2376 = vsel %vm2375, %v2374, %v2372
    %s2377 = scalar_lea.vmem [#allocation1], 145
    %v2378 = vld [vmem:[%s2377] sm:$0x10]
    %vm2379 = vcmask 1044484
    %v2380 = vsel %vm2379, %v2378, %v2376
    %s2381 = scalar_lea.vmem [#allocation1], 176
    %v2382 = vld [vmem:[%s2381] sm:$0x20]
    %vm2383 = vcmask 1045509
    %v2384 = vsel %vm2383, %v2382, %v2380
    %s2385 = scalar_lea.vmem [#allocation1], 207
    %v2386 = vld [vmem:[%s2385] sm:$0x40]
    %vm2387 = vcmask 1046534
    %v2388 = vsel %vm2387, %v2386, %v2384
    %s2389 = scalar_lea.vmem [#allocation1], 238
    %v2390 = vld [vmem:[%s2389] sm:$0x80]
    %vm2391 = vcmask 1047559
    %v2392 = vsel %vm2391, %v2390, %v2388
    %2393 = vrot.lane.b32.xlu0 %v2392, 32
    %v2394 = vpop.permute.xlu0 %2393
    %vm2395 = vcmask 523520
    %s2396 = scalar_lea.vmem [#allocation0], 40
    %2397 = vst.msk [vmem:[%s2396] sm:$0xff] %vm2395, %v2394
    %s2398 = scalar_lea.vmem [#allocation1], 261
    %v2399 = vld [vmem:[%s2398] sm:$0x1]
    %s2400 = scalar_lea.vmem [#allocation1], 292
    %v2401 = vld [vmem:[%s2400] sm:$0x2]
    %vm2402 = vcmask 1041409
    %v2403 = vsel %vm2402, %v2401, %v2399
    %s2404 = scalar_lea.vmem [#allocation1], 323
    %v2405 = vld [vmem:[%s2404] sm:$0x4]
    %vm2406 = vcmask 1042434
    %v2407 = vsel %vm2406, %v2405, %v2403
    %s2408 = scalar_lea.vmem [#allocation1], 354
    %v2409 = vld [vmem:[%s2408] sm:$0x8]
    %vm2410 = vcmask 1043459
    %v2411 = vsel %vm2410, %v2409, %v2407
    %s2412 = scalar_lea.vmem [#allocation1], 385
    %v2413 = vld [vmem:[%s2412] sm:$0x10]
    %vm2414 = vcmask 1044484
    %v2415 = vsel %vm2414, %v2413, %v2411
    %s2416 = scalar_lea.vmem [#allocation1], 416
    %v2417 = vld [vmem:[%s2416] sm:$0x20]
    %vm2418 = vcmask 1045509
    %v2419 = vsel %vm2418, %v2417, %v2415
    %s2420 = scalar_lea.vmem [#allocation1], 447
    %v2421 = vld [vmem:[%s2420] sm:$0x40]
    %vm2422 = vcmask 1046534
    %v2423 = vsel %vm2422, %v2421, %v2419
    %s2424 = scalar_lea.vmem [#allocation1], 478
    %v2425 = vld [vmem:[%s2424] sm:$0x80]
    %vm2426 = vcmask 1047559
    %v2427 = vsel %vm2426, %v2425, %v2423
    %2428 = vrot.lane.b32.xlu0 %v2427, 32
    %v2429 = vpop.permute.xlu0 %2428
    %vm2430 = vcmask 523520
    %s2431 = scalar_lea.vmem [#allocation0], 72
    %2432 = vst.msk [vmem:[%s2431] sm:$0xff] %vm2430, %v2429
    %s2433 = scalar_lea.vmem [#allocation1], 277
    %v2434 = vld [vmem:[%s2433] sm:$0x1]
    %s2435 = scalar_lea.vmem [#allocation1], 308
    %v2436 = vld [vmem:[%s2435] sm:$0x2]
    %vm2437 = vcmask 1041409
    %v2438 = vsel %vm2437, %v2436, %v2434
    %s2439 = scalar_lea.vmem [#allocation1], 339
    %v2440 = vld [vmem:[%s2439] sm:$0x4]
    %vm2441 = vcmask 1042434
    %v2442 = vsel %vm2441, %v2440, %v2438
    %s2443 = scalar_lea.vmem [#allocation1], 370
    %v2444 = vld [vmem:[%s2443] sm:$0x8]
    %vm2445 = vcmask 1043459
    %v2446 = vsel %vm2445, %v2444, %v2442
    %s2447 = scalar_lea.vmem [#allocation1], 401
    %v2448 = vld [vmem:[%s2447] sm:$0x10]
    %vm2449 = vcmask 1044484
    %v2450 = vsel %vm2449, %v2448, %v2446
    %s2451 = scalar_lea.vmem [#allocation1], 432
    %v2452 = vld [vmem:[%s2451] sm:$0x20]
    %vm2453 = vcmask 1045509
    %v2454 = vsel %vm2453, %v2452, %v2450
    %s2455 = scalar_lea.vmem [#allocation1], 463
    %v2456 = vld [vmem:[%s2455] sm:$0x40]
    %vm2457 = vcmask 1046534
    %v2458 = vsel %vm2457, %v2456, %v2454
    %s2459 = scalar_lea.vmem [#allocation1], 494
    %v2460 = vld [vmem:[%s2459] sm:$0x80]
    %vm2461 = vcmask 1047559
    %v2462 = vsel %vm2461, %v2460, %v2458
    %2463 = vrot.lane.b32.xlu0 %v2462, 32
    %v2464 = vpop.permute.xlu0 %2463
    %vm2465 = vcmask 523520
    %s2466 = scalar_lea.vmem [#allocation0], 104
    %2467 = vst.msk [vmem:[%s2466] sm:$0xff] %vm2465, %v2464
    %s2468 = scalar_lea.vmem [#allocation1], 9
    %v2469 = vld [vmem:[%s2468] sm:$0x1]
    %s2470 = scalar_lea.vmem [#allocation1], 40
    %v2471 = vld [vmem:[%s2470] sm:$0x2]
    %vm2472 = vcmask 1041409
    %v2473 = vsel %vm2472, %v2471, %v2469
    %s2474 = scalar_lea.vmem [#allocation1], 71
    %v2475 = vld [vmem:[%s2474] sm:$0x4]
    %vm2476 = vcmask 1042434
    %v2477 = vsel %vm2476, %v2475, %v2473
    %s2478 = scalar_lea.vmem [#allocation1], 102
    %v2479 = vld [vmem:[%s2478] sm:$0x8]
    %vm2480 = vcmask 1043459
    %v2481 = vsel %vm2480, %v2479, %v2477
    %s2482 = scalar_lea.vmem [#allocation1], 133
    %v2483 = vld [vmem:[%s2482] sm:$0x10]
    %vm2484 = vcmask 1044484
    %v2485 = vsel %vm2484, %v2483, %v2481
    %s2486 = scalar_lea.vmem [#allocation1], 164
    %v2487 = vld [vmem:[%s2486] sm:$0x20]
    %vm2488 = vcmask 1045509
    %v2489 = vsel %vm2488, %v2487, %v2485
    %s2490 = scalar_lea.vmem [#allocation1], 195
    %v2491 = vld [vmem:[%s2490] sm:$0x40]
    %vm2492 = vcmask 1046534
    %v2493 = vsel %vm2492, %v2491, %v2489
    %s2494 = scalar_lea.vmem [#allocation1], 226
    %v2495 = vld [vmem:[%s2494] sm:$0x80]
    %vm2496 = vcmask 1047559
    %v2497 = vsel %vm2496, %v2495, %v2493
    %2498 = vrot.lane.b32.xlu0 %v2497, 32
    %v2499 = vpop.permute.xlu0 %2498
    %vm2500 = vcmask 523520
    %s2501 = scalar_lea.vmem [#allocation0], 16
    %2502 = vst.msk [vmem:[%s2501] sm:$0xff] %vm2500, %v2499
    %s2503 = scalar_lea.vmem [#allocation1], 25
    %v2504 = vld [vmem:[%s2503] sm:$0x1]
    %s2505 = scalar_lea.vmem [#allocation1], 56
    %v2506 = vld [vmem:[%s2505] sm:$0x2]
    %vm2507 = vcmask 1041409
    %v2508 = vsel %vm2507, %v2506, %v2504
    %s2509 = scalar_lea.vmem [#allocation1], 87
    %v2510 = vld [vmem:[%s2509] sm:$0x4]
    %vm2511 = vcmask 1042434
    %v2512 = vsel %vm2511, %v2510, %v2508
    %s2513 = scalar_lea.vmem [#allocation1], 118
    %v2514 = vld [vmem:[%s2513] sm:$0x8]
    %vm2515 = vcmask 1043459
    %v2516 = vsel %vm2515, %v2514, %v2512
    %s2517 = scalar_lea.vmem [#allocation1], 149
    %v2518 = vld [vmem:[%s2517] sm:$0x10]
    %vm2519 = vcmask 1044484
    %v2520 = vsel %vm2519, %v2518, %v2516
    %s2521 = scalar_lea.vmem [#allocation1], 180
    %v2522 = vld [vmem:[%s2521] sm:$0x20]
    %vm2523 = vcmask 1045509
    %v2524 = vsel %vm2523, %v2522, %v2520
    %s2525 = scalar_lea.vmem [#allocation1], 211
    %v2526 = vld [vmem:[%s2525] sm:$0x40]
    %vm2527 = vcmask 1046534
    %v2528 = vsel %vm2527, %v2526, %v2524
    %s2529 = scalar_lea.vmem [#allocation1], 242
    %v2530 = vld [vmem:[%s2529] sm:$0x80]
    %vm2531 = vcmask 1047559
    %v2532 = vsel %vm2531, %v2530, %v2528
    %2533 = vrot.lane.b32.xlu0 %v2532, 32
    %v2534 = vpop.permute.xlu0 %2533
    %vm2535 = vcmask 523520
    %s2536 = scalar_lea.vmem [#allocation0], 48
    %2537 = vst.msk [vmem:[%s2536] sm:$0xff] %vm2535, %v2534
    %s2538 = scalar_lea.vmem [#allocation1], 265
    %v2539 = vld [vmem:[%s2538] sm:$0x1]
    %s2540 = scalar_lea.vmem [#allocation1], 296
    %v2541 = vld [vmem:[%s2540] sm:$0x2]
    %vm2542 = vcmask 1041409
    %v2543 = vsel %vm2542, %v2541, %v2539
    %s2544 = scalar_lea.vmem [#allocation1], 327
    %v2545 = vld [vmem:[%s2544] sm:$0x4]
    %vm2546 = vcmask 1042434
    %v2547 = vsel %vm2546, %v2545, %v2543
    %s2548 = scalar_lea.vmem [#allocation1], 358
    %v2549 = vld [vmem:[%s2548] sm:$0x8]
    %vm2550 = vcmask 1043459
    %v2551 = vsel %vm2550, %v2549, %v2547
    %s2552 = scalar_lea.vmem [#allocation1], 389
    %v2553 = vld [vmem:[%s2552] sm:$0x10]
    %vm2554 = vcmask 1044484
    %v2555 = vsel %vm2554, %v2553, %v2551
    %s2556 = scalar_lea.vmem [#allocation1], 420
    %v2557 = vld [vmem:[%s2556] sm:$0x20]
    %vm2558 = vcmask 1045509
    %v2559 = vsel %vm2558, %v2557, %v2555
    %s2560 = scalar_lea.vmem [#allocation1], 451
    %v2561 = vld [vmem:[%s2560] sm:$0x40]
    %vm2562 = vcmask 1046534
    %v2563 = vsel %vm2562, %v2561, %v2559
    %s2564 = scalar_lea.vmem [#allocation1], 482
    %v2565 = vld [vmem:[%s2564] sm:$0x80]
    %vm2566 = vcmask 1047559
    %v2567 = vsel %vm2566, %v2565, %v2563
    %2568 = vrot.lane.b32.xlu0 %v2567, 32
    %v2569 = vpop.permute.xlu0 %2568
    %vm2570 = vcmask 523520
    %s2571 = scalar_lea.vmem [#allocation0], 80
    %2572 = vst.msk [vmem:[%s2571] sm:$0xff] %vm2570, %v2569
    %s2573 = scalar_lea.vmem [#allocation1], 281
    %v2574 = vld [vmem:[%s2573] sm:$0x1]
    %s2575 = scalar_lea.vmem [#allocation1], 312
    %v2576 = vld [vmem:[%s2575] sm:$0x2]
    %vm2577 = vcmask 1041409
    %v2578 = vsel %vm2577, %v2576, %v2574
    %s2579 = scalar_lea.vmem [#allocation1], 343
    %v2580 = vld [vmem:[%s2579] sm:$0x4]
    %vm2581 = vcmask 1042434
    %v2582 = vsel %vm2581, %v2580, %v2578
    %s2583 = scalar_lea.vmem [#allocation1], 374
    %v2584 = vld [vmem:[%s2583] sm:$0x8]
    %vm2585 = vcmask 1043459
    %v2586 = vsel %vm2585, %v2584, %v2582
    %s2587 = scalar_lea.vmem [#allocation1], 405
    %v2588 = vld [vmem:[%s2587] sm:$0x10]
    %vm2589 = vcmask 1044484
    %v2590 = vsel %vm2589, %v2588, %v2586
    %s2591 = scalar_lea.vmem [#allocation1], 436
    %v2592 = vld [vmem:[%s2591] sm:$0x20]
    %vm2593 = vcmask 1045509
    %v2594 = vsel %vm2593, %v2592, %v2590
    %s2595 = scalar_lea.vmem [#allocation1], 467
    %v2596 = vld [vmem:[%s2595] sm:$0x40]
    %vm2597 = vcmask 1046534
    %v2598 = vsel %vm2597, %v2596, %v2594
    %s2599 = scalar_lea.vmem [#allocation1], 498
    %v2600 = vld [vmem:[%s2599] sm:$0x80]
    %vm2601 = vcmask 1047559
    %v2602 = vsel %vm2601, %v2600, %v2598
    %2603 = vrot.lane.b32.xlu0 %v2602, 32
    %v2604 = vpop.permute.xlu0 %2603
    %vm2605 = vcmask 523520
    %s2606 = scalar_lea.vmem [#allocation0], 112
    %2607 = vst.msk [vmem:[%s2606] sm:$0xff] %vm2605, %v2604
    %s2608 = scalar_lea.vmem [#allocation1], 13
    %v2609 = vld [vmem:[%s2608] sm:$0x1]
    %s2610 = scalar_lea.vmem [#allocation1], 44
    %v2611 = vld [vmem:[%s2610] sm:$0x2]
    %vm2612 = vcmask 1041409
    %v2613 = vsel %vm2612, %v2611, %v2609
    %s2614 = scalar_lea.vmem [#allocation1], 75
    %v2615 = vld [vmem:[%s2614] sm:$0x4]
    %vm2616 = vcmask 1042434
    %v2617 = vsel %vm2616, %v2615, %v2613
    %s2618 = scalar_lea.vmem [#allocation1], 106
    %v2619 = vld [vmem:[%s2618] sm:$0x8]
    %vm2620 = vcmask 1043459
    %v2621 = vsel %vm2620, %v2619, %v2617
    %s2622 = scalar_lea.vmem [#allocation1], 137
    %v2623 = vld [vmem:[%s2622] sm:$0x10]
    %vm2624 = vcmask 1044484
    %v2625 = vsel %vm2624, %v2623, %v2621
    %s2626 = scalar_lea.vmem [#allocation1], 168
    %v2627 = vld [vmem:[%s2626] sm:$0x20]
    %vm2628 = vcmask 1045509
    %v2629 = vsel %vm2628, %v2627, %v2625
    %s2630 = scalar_lea.vmem [#allocation1], 199
    %v2631 = vld [vmem:[%s2630] sm:$0x40]
    %vm2632 = vcmask 1046534
    %v2633 = vsel %vm2632, %v2631, %v2629
    %s2634 = scalar_lea.vmem [#allocation1], 230
    %v2635 = vld [vmem:[%s2634] sm:$0x80]
    %vm2636 = vcmask 1047559
    %v2637 = vsel %vm2636, %v2635, %v2633
    %2638 = vrot.lane.b32.xlu0 %v2637, 32
    %v2639 = vpop.permute.xlu0 %2638
    %vm2640 = vcmask 523520
    %s2641 = scalar_lea.vmem [#allocation0], 24
    %2642 = vst.msk [vmem:[%s2641] sm:$0xff] %vm2640, %v2639
    %s2643 = scalar_lea.vmem [#allocation1], 29
    %v2644 = vld [vmem:[%s2643] sm:$0x1]
    %s2645 = scalar_lea.vmem [#allocation1], 60
    %v2646 = vld [vmem:[%s2645] sm:$0x2]
    %vm2647 = vcmask 1041409
    %v2648 = vsel %vm2647, %v2646, %v2644
    %s2649 = scalar_lea.vmem [#allocation1], 91
    %v2650 = vld [vmem:[%s2649] sm:$0x4]
    %vm2651 = vcmask 1042434
    %v2652 = vsel %vm2651, %v2650, %v2648
    %s2653 = scalar_lea.vmem [#allocation1], 122
    %v2654 = vld [vmem:[%s2653] sm:$0x8]
    %vm2655 = vcmask 1043459
    %v2656 = vsel %vm2655, %v2654, %v2652
    %s2657 = scalar_lea.vmem [#allocation1], 153
    %v2658 = vld [vmem:[%s2657] sm:$0x10]
    %vm2659 = vcmask 1044484
    %v2660 = vsel %vm2659, %v2658, %v2656
    %s2661 = scalar_lea.vmem [#allocation1], 184
    %v2662 = vld [vmem:[%s2661] sm:$0x20]
    %vm2663 = vcmask 1045509
    %v2664 = vsel %vm2663, %v2662, %v2660
    %s2665 = scalar_lea.vmem [#allocation1], 215
    %v2666 = vld [vmem:[%s2665] sm:$0x40]
    %vm2667 = vcmask 1046534
    %v2668 = vsel %vm2667, %v2666, %v2664
    %s2669 = scalar_lea.vmem [#allocation1], 246
    %v2670 = vld [vmem:[%s2669] sm:$0x80]
    %vm2671 = vcmask 1047559
    %v2672 = vsel %vm2671, %v2670, %v2668
    %2673 = vrot.lane.b32.xlu0 %v2672, 32
    %v2674 = vpop.permute.xlu0 %2673
    %vm2675 = vcmask 523520
    %s2676 = scalar_lea.vmem [#allocation0], 56
    %2677 = vst.msk [vmem:[%s2676] sm:$0xff] %vm2675, %v2674
    %s2678 = scalar_lea.vmem [#allocation1], 269
    %v2679 = vld [vmem:[%s2678] sm:$0x1]
    %s2680 = scalar_lea.vmem [#allocation1], 300
    %v2681 = vld [vmem:[%s2680] sm:$0x2]
    %vm2682 = vcmask 1041409
    %v2683 = vsel %vm2682, %v2681, %v2679
    %s2684 = scalar_lea.vmem [#allocation1], 331
    %v2685 = vld [vmem:[%s2684] sm:$0x4]
    %vm2686 = vcmask 1042434
    %v2687 = vsel %vm2686, %v2685, %v2683
    %s2688 = scalar_lea.vmem [#allocation1], 362
    %v2689 = vld [vmem:[%s2688] sm:$0x8]
    %vm2690 = vcmask 1043459
    %v2691 = vsel %vm2690, %v2689, %v2687
    %s2692 = scalar_lea.vmem [#allocation1], 393
    %v2693 = vld [vmem:[%s2692] sm:$0x10]
    %vm2694 = vcmask 1044484
    %v2695 = vsel %vm2694, %v2693, %v2691
    %s2696 = scalar_lea.vmem [#allocation1], 424
    %v2697 = vld [vmem:[%s2696] sm:$0x20]
    %vm2698 = vcmask 1045509
    %v2699 = vsel %vm2698, %v2697, %v2695
    %s2700 = scalar_lea.vmem [#allocation1], 455
    %v2701 = vld [vmem:[%s2700] sm:$0x40]
    %vm2702 = vcmask 1046534
    %v2703 = vsel %vm2702, %v2701, %v2699
    %s2704 = scalar_lea.vmem [#allocation1], 486
    %v2705 = vld [vmem:[%s2704] sm:$0x80]
    %vm2706 = vcmask 1047559
    %v2707 = vsel %vm2706, %v2705, %v2703
    %2708 = vrot.lane.b32.xlu0 %v2707, 32
    %v2709 = vpop.permute.xlu0 %2708
    %vm2710 = vcmask 523520
    %s2711 = scalar_lea.vmem [#allocation0], 88
    %2712 = vst.msk [vmem:[%s2711] sm:$0xff] %vm2710, %v2709
    %s2713 = scalar_lea.vmem [#allocation1], 285
    %v2714 = vld [vmem:[%s2713] sm:$0x1]
    %s2715 = scalar_lea.vmem [#allocation1], 316
    %v2716 = vld [vmem:[%s2715] sm:$0x2]
    %vm2717 = vcmask 1041409
    %v2718 = vsel %vm2717, %v2716, %v2714
    %s2719 = scalar_lea.vmem [#allocation1], 347
    %v2720 = vld [vmem:[%s2719] sm:$0x4]
    %vm2721 = vcmask 1042434
    %v2722 = vsel %vm2721, %v2720, %v2718
    %s2723 = scalar_lea.vmem [#allocation1], 378
    %v2724 = vld [vmem:[%s2723] sm:$0x8]
    %vm2725 = vcmask 1043459
    %v2726 = vsel %vm2725, %v2724, %v2722
    %s2727 = scalar_lea.vmem [#allocation1], 409
    %v2728 = vld [vmem:[%s2727] sm:$0x10]
    %vm2729 = vcmask 1044484
    %v2730 = vsel %vm2729, %v2728, %v2726
    %s2731 = scalar_lea.vmem [#allocation1], 440
    %v2732 = vld [vmem:[%s2731] sm:$0x20]
    %vm2733 = vcmask 1045509
    %v2734 = vsel %vm2733, %v2732, %v2730
    %s2735 = scalar_lea.vmem [#allocation1], 471
    %v2736 = vld [vmem:[%s2735] sm:$0x40]
    %vm2737 = vcmask 1046534
    %v2738 = vsel %vm2737, %v2736, %v2734
    %s2739 = scalar_lea.vmem [#allocation1], 502
    %v2740 = vld [vmem:[%s2739] sm:$0x80]
    %vm2741 = vcmask 1047559
    %v2742 = vsel %vm2741, %v2740, %v2738
    %2743 = vrot.lane.b32.xlu0 %v2742, 32
    %v2744 = vpop.permute.xlu0 %2743
    %vm2745 = vcmask 523520
    %s2746 = scalar_lea.vmem [#allocation0], 120
    %2747 = vst.msk [vmem:[%s2746] sm:$0xff] %vm2745, %v2744
    %s2749 = ssub.s32 256, 1
    %v2750 = vld [vmem:[#allocation0] sm:%s2749]
    %v2751 = vpack.c.bf16 0.0, %v2750
    %s2753 = ssub.s32 16, 1
    %2754 = vst [vmem:[%s1] sm:%s2753] %v2751
    %s2755 = scalar_lea.vmem [#allocation0], 8
    %v2756 = vld [vmem:[%s2755] sm:%s2749]
    %v2757 = vpack.c.bf16 0.0, %v2756
    %s2759 = ssub.s32 16, 1
    %s2760 = scalar_lea.vmem %s1, 4
    %2761 = vst [vmem:[%s2760] sm:%s2759] %v2757
    %s2762 = scalar_lea.vmem [#allocation0], 16
    %v2763 = vld [vmem:[%s2762] sm:%s2749]
    %v2764 = vpack.c.bf16 0.0, %v2763
    %s2766 = ssub.s32 16, 1
    %s2767 = scalar_lea.vmem %s1, 8
    %2768 = vst [vmem:[%s2767] sm:%s2766] %v2764
    %s2769 = scalar_lea.vmem [#allocation0], 24
    %v2770 = vld [vmem:[%s2769] sm:%s2749]
    %v2771 = vpack.c.bf16 0.0, %v2770
    %s2773 = ssub.s32 16, 1
    %s2774 = scalar_lea.vmem %s1, 12
    %2775 = vst [vmem:[%s2774] sm:%s2773] %v2771
    %s2776 = scalar_lea.vmem [#allocation0], 32
    %v2777 = vld [vmem:[%s2776] sm:%s2749]
    %v2778 = vpack.c.bf16 0.0, %v2777
    %s2780 = ssub.s32 16, 1
    %s2781 = scalar_lea.vmem %s1, 16
    %2782 = vst [vmem:[%s2781] sm:%s2780] %v2778
    %s2783 = scalar_lea.vmem [#allocation0], 40
    %v2784 = vld [vmem:[%s2783] sm:%s2749]
    %v2785 = vpack.c.bf16 0.0, %v2784
    %s2787 = ssub.s32 16, 1
    %s2788 = scalar_lea.vmem %s1, 20
    %2789 = vst [vmem:[%s2788] sm:%s2787] %v2785
    %s2790 = scalar_lea.vmem [#allocation0], 48
    %v2791 = vld [vmem:[%s2790] sm:%s2749]
    %v2792 = vpack.c.bf16 0.0, %v2791
    %s2794 = ssub.s32 16, 1
    %s2795 = scalar_lea.vmem %s1, 24
    %2796 = vst [vmem:[%s2795] sm:%s2794] %v2792
    %s2797 = scalar_lea.vmem [#allocation0], 56
    %v2798 = vld [vmem:[%s2797] sm:%s2749]
    %v2799 = vpack.c.bf16 0.0, %v2798
    %s2801 = ssub.s32 16, 1
    %s2802 = scalar_lea.vmem %s1, 28
    %2803 = vst [vmem:[%s2802] sm:%s2801] %v2799
    %s2804 = scalar_lea.vmem [#allocation0], 64
    %v2805 = vld [vmem:[%s2804] sm:%s2749]
    %v2806 = vpack.c.bf16 0.0, %v2805
    %s2808 = ssub.s32 16, 1
    %s2809 = scalar_lea.vmem %s1, 32
    %2810 = vst [vmem:[%s2809] sm:%s2808] %v2806
    %s2811 = scalar_lea.vmem [#allocation0], 72
    %v2812 = vld [vmem:[%s2811] sm:%s2749]
    %v2813 = vpack.c.bf16 0.0, %v2812
    %s2815 = ssub.s32 16, 1
    %s2816 = scalar_lea.vmem %s1, 36
    %2817 = vst [vmem:[%s2816] sm:%s2815] %v2813
    %s2818 = scalar_lea.vmem [#allocation0], 80
    %v2819 = vld [vmem:[%s2818] sm:%s2749]
    %v2820 = vpack.c.bf16 0.0, %v2819
    %s2822 = ssub.s32 16, 1
    %s2823 = scalar_lea.vmem %s1, 40
    %2824 = vst [vmem:[%s2823] sm:%s2822] %v2820
    %s2825 = scalar_lea.vmem [#allocation0], 88
    %v2826 = vld [vmem:[%s2825] sm:%s2749]
    %v2827 = vpack.c.bf16 0.0, %v2826
    %s2829 = ssub.s32 16, 1
    %s2830 = scalar_lea.vmem %s1, 44
    %2831 = vst [vmem:[%s2830] sm:%s2829] %v2827
    %s2832 = scalar_lea.vmem [#allocation0], 96
    %v2833 = vld [vmem:[%s2832] sm:%s2749]
    %v2834 = vpack.c.bf16 0.0, %v2833
    %s2836 = ssub.s32 16, 1
    %s2837 = scalar_lea.vmem %s1, 48
    %2838 = vst [vmem:[%s2837] sm:%s2836] %v2834
    %s2839 = scalar_lea.vmem [#allocation0], 104
    %v2840 = vld [vmem:[%s2839] sm:%s2749]
    %v2841 = vpack.c.bf16 0.0, %v2840
    %s2843 = ssub.s32 16, 1
    %s2844 = scalar_lea.vmem %s1, 52
    %2845 = vst [vmem:[%s2844] sm:%s2843] %v2841
    %s2846 = scalar_lea.vmem [#allocation0], 112
    %v2847 = vld [vmem:[%s2846] sm:%s2749]
    %v2848 = vpack.c.bf16 0.0, %v2847
    %s2850 = ssub.s32 16, 1
    %s2851 = scalar_lea.vmem %s1, 56
    %2852 = vst [vmem:[%s2851] sm:%s2850] %v2848
    %s2853 = scalar_lea.vmem [#allocation0], 120
    %v2854 = vld [vmem:[%s2853] sm:%s2749]
    %v2855 = vpack.c.bf16 0.0, %v2854
    %s2857 = ssub.s32 16, 1
    %s2858 = scalar_lea.vmem %s1, 60
    %2859 = vst [vmem:[%s2858] sm:%s2857] %v2855

// kernel: multimodal_bilinear_forward.1
$region0: #{multimodal_bilinear_forward.1}
  #allocation0 [shape = 'u32[]', space=smem, size = 0x4, offset = 0x4, fixed_abs, tag = 'smem constant byte address 0x4 - core index']
  #allocation1 [shape = 'u32[72,128]{1,0:T(1,128)}', space=vmem, size = 0x9000, scoped, tag = 'internal scratch']
  %s0 = inlined_call_operand.vmem [shape: f32[16,2048], index: 0, kind: input, shape index: {}]
  %s1 = inlined_call_operand.vmem [shape: bf16[16,1024], index: 1, kind: input, shape index: {}]
  %s2 = inlined_call_operand.vmem [shape: bf16[2048,32], index: 2, kind: input, shape index: {}]
  %s3 = inlined_call_operand.vmem [shape: bf16[32,1024], index: 3, kind: input, shape index: {}]
  %s4 = inlined_call_operand.vmem [shape: bf16[1024,128], index: 4, kind: input, shape index: {}]
  %s5 = inlined_call_operand.vmem [shape: f32[2,128], index: 5, kind: input, shape index: {}]
  %s6 = inlined_call_operand.vmem [shape: f32[16,128], index: 6, kind: output, shape index: {}]
  %s7 = sld [smem:[#allocation0]]
  $region57: #{multimodal_bilinear_forward.1} parent=0
    _
  %s9 = ssub.s32 1, %s7
  %s10 = scalar_select 0, %s9, %s7
  loop: start=0, step=1, limit=4
  $region2: #{multimodal_bilinear_forward.1} parent=0 // loop_pre_header
    _
  $region3: #{multimodal_bilinear_forward.1} parent=0 // loop_header
    %s12 = sphi 0, %s16
    %p13 = scmp.ge.s32.totalorder %s12, 4
    %s22 = sphi 0, %s24
    %s25 = sphi 0, %s22
    %s26 = sphi 0, %s25
    %s42 = sphi 0, %s26
    %s48 = sphi 0, %s50
    %s51 = sphi 0, %s48
    %s52 = sphi 0, %s51
    %s68 = sphi 0, %s52
    %s72 = sphi 0, %s72
    %s74 = sphi 0, %s72
    %s75 = sphi 0, %s74
    %s89 = sphi 0, %s75
    %s93 = sphi 0, %s93
    %s95 = sphi 0, %s93
    %s96 = sphi 0, %s95
    %s110 = sphi 0, %s96
    %s114 = sphi 0, %s114
    %s116 = sphi 0, %s114
    %s117 = sphi 0, %s116
    %s131 = sphi 0, %s117
    %s135 = sphi 0, %s135
    %s137 = sphi 0, %s135
    %s138 = sphi 0, %s137
    %s152 = sphi 0, %s138
    %s158 = sphi 0, %s160
    %s161 = sphi 0, %s158
    %s162 = sphi 0, %s161
    %s178 = sphi 0, %s162
  $region4: #{multimodal_bilinear_forward.1} parent=0 // loop_header_branch
    %15 = sbr.rel (%p13) target = $region8
  $region5: #{multimodal_bilinear_forward.1} parent=0 // loop_body
    %s17 = ssub.s32 %s12, 1
    %s18 = ssub.s32 %s12, 2
    %s19 = sadd.s32 %s12, 1
    %s20 = ssub.s32 %s12, %s19
    %p21 = scmp.eq.s32.totalorder %s20, 0
    %s23 = sadd.s32 %s22, 1
    %s24 = scalar_select %p21, %s22, %s23
    %p27 = pneg %p21
    %p28 = scmp.eq.s32.totalorder %s12, 1
    %p29 = por %p27, %p28
    %p30 = scmp.ne.s32.totalorder %s22, %s25
    %p31 = scmp.eq.s32.totalorder %s12, 0
    %p32 = por %p30, %p31
    %p33 = scmp.ne.s32.totalorder %s22, %s25
    %p34 = scmp.eq.s32.totalorder %s17, 1
    %p35 = por %p33, %p34
    %p36 = scmp.ne.s32.totalorder %s25, %s26
    %p37 = scmp.eq.s32.totalorder %s17, 0
    %p38 = por %p36, %p37
    %p39 = scmp.ne.s32.totalorder %s25, %s26
    %p40 = scmp.eq.s32.totalorder %s18, 1
    %p41 = por %p39, %p40
    %p43 = scmp.ne.s32.totalorder %s26, %s42
    %p44 = scmp.eq.s32.totalorder %s18, 0
    %p45 = por %p43, %p44
    %s46 = ssub.s32 %s12, %s19
    %p47 = scmp.eq.s32.totalorder %s46, 0
    %s49 = sadd.s32 %s48, 1
    %s50 = scalar_select %p47, %s48, %s49
    %p53 = pneg %p47
    %p54 = scmp.eq.s32.totalorder %s12, 1
    %p55 = por %p53, %p54
    %p56 = scmp.ne.s32.totalorder %s48, %s51
    %p57 = scmp.eq.s32.totalorder %s12, 0
    %p58 = por %p56, %p57
    %p59 = scmp.ne.s32.totalorder %s48, %s51
    %p60 = scmp.eq.s32.totalorder %s17, 1
    %p61 = por %p59, %p60
    %p62 = scmp.ne.s32.totalorder %s51, %s52
    %p63 = scmp.eq.s32.totalorder %s17, 0
    %p64 = por %p62, %p63
    %p65 = scmp.ne.s32.totalorder %s51, %s52
    %p66 = scmp.eq.s32.totalorder %s18, 1
    %p67 = por %p65, %p66
    %p69 = scmp.ne.s32.totalorder %s52, %s68
    %p70 = scmp.eq.s32.totalorder %s18, 0
    %p71 = por %p69, %p70
    %s73 = sadd.s32 %s72, 1
    %p76 = scmp.eq.s32.totalorder %s12, 1
    %p77 = scmp.ne.s32.totalorder %s72, %s74
    %p78 = scmp.eq.s32.totalorder %s12, 0
    %p79 = por %p77, %p78
    %p80 = scmp.ne.s32.totalorder %s72, %s74
    %p81 = scmp.eq.s32.totalorder %s17, 1
    %p82 = por %p80, %p81
    %p83 = scmp.ne.s32.totalorder %s74, %s75
    %p84 = scmp.eq.s32.totalorder %s17, 0
    %p85 = por %p83, %p84
    %p86 = scmp.ne.s32.totalorder %s74, %s75
    %p87 = scmp.eq.s32.totalorder %s18, 1
    %p88 = por %p86, %p87
    %p90 = scmp.ne.s32.totalorder %s75, %s89
    %p91 = scmp.eq.s32.totalorder %s18, 0
    %p92 = por %p90, %p91
    %s94 = sadd.s32 %s93, 1
    %p97 = scmp.eq.s32.totalorder %s12, 1
    %p98 = scmp.ne.s32.totalorder %s93, %s95
    %p99 = scmp.eq.s32.totalorder %s12, 0
    %p100 = por %p98, %p99
    %p101 = scmp.ne.s32.totalorder %s93, %s95
    %p102 = scmp.eq.s32.totalorder %s17, 1
    %p103 = por %p101, %p102
    %p104 = scmp.ne.s32.totalorder %s95, %s96
    %p105 = scmp.eq.s32.totalorder %s17, 0
    %p106 = por %p104, %p105
    %p107 = scmp.ne.s32.totalorder %s95, %s96
    %p108 = scmp.eq.s32.totalorder %s18, 1
    %p109 = por %p107, %p108
    %p111 = scmp.ne.s32.totalorder %s96, %s110
    %p112 = scmp.eq.s32.totalorder %s18, 0
    %p113 = por %p111, %p112
    %s115 = sadd.s32 %s114, 1
    %p118 = scmp.eq.s32.totalorder %s12, 1
    %p119 = scmp.ne.s32.totalorder %s114, %s116
    %p120 = scmp.eq.s32.totalorder %s12, 0
    %p121 = por %p119, %p120
    %p122 = scmp.ne.s32.totalorder %s114, %s116
    %p123 = scmp.eq.s32.totalorder %s17, 1
    %p124 = por %p122, %p123
    %p125 = scmp.ne.s32.totalorder %s116, %s117
    %p126 = scmp.eq.s32.totalorder %s17, 0
    %p127 = por %p125, %p126
    %p128 = scmp.ne.s32.totalorder %s116, %s117
    %p129 = scmp.eq.s32.totalorder %s18, 1
    %p130 = por %p128, %p129
    %p132 = scmp.ne.s32.totalorder %s117, %s131
    %p133 = scmp.eq.s32.totalorder %s18, 0
    %p134 = por %p132, %p133
    %s136 = sadd.s32 %s135, 1
    %p139 = scmp.eq.s32.totalorder %s12, 1
    %p140 = scmp.ne.s32.totalorder %s135, %s137
    %p141 = scmp.eq.s32.totalorder %s12, 0
    %p142 = por %p140, %p141
    %p143 = scmp.ne.s32.totalorder %s135, %s137
    %p144 = scmp.eq.s32.totalorder %s17, 1
    %p145 = por %p143, %p144
    %p146 = scmp.ne.s32.totalorder %s137, %s138
    %p147 = scmp.eq.s32.totalorder %s17, 0
    %p148 = por %p146, %p147
    %p149 = scmp.ne.s32.totalorder %s137, %s138
    %p150 = scmp.eq.s32.totalorder %s18, 1
    %p151 = por %p149, %p150
    %p153 = scmp.ne.s32.totalorder %s138, %s152
    %p154 = scmp.eq.s32.totalorder %s18, 0
    %p155 = por %p153, %p154
    %s156 = ssub.s32 %s12, %s19
    %p157 = scmp.eq.s32.totalorder %s156, 0
    %s159 = sadd.s32 %s158, 1
    %s160 = scalar_select %p157, %s158, %s159
    %p163 = pneg %p157
    %p164 = scmp.eq.s32.totalorder %s12, 1
    %p165 = por %p163, %p164
    %p166 = scmp.ne.s32.totalorder %s158, %s161
    %p167 = scmp.eq.s32.totalorder %s12, 0
    %p168 = por %p166, %p167
    %p169 = scmp.ne.s32.totalorder %s158, %s161
    %p170 = scmp.eq.s32.totalorder %s17, 1
    %p171 = por %p169, %p170
    %p172 = scmp.ne.s32.totalorder %s161, %s162
    %p173 = scmp.eq.s32.totalorder %s17, 0
    %p174 = por %p172, %p173
    %p175 = scmp.ne.s32.totalorder %s161, %s162
    %p176 = scmp.eq.s32.totalorder %s18, 1
    %p177 = por %p175, %p176
    %p179 = scmp.ne.s32.totalorder %s162, %s178
    %p180 = scmp.eq.s32.totalorder %s18, 0
    %p181 = por %p179, %p180
    %p182 = scmp.le.s32.totalorder 1, %s12
    %p183 = scmp.lt.s32.totalorder %s12, 3
    %p184 = pnand %p182, %p183
    %p185 = pneg %p184
    // Predicated region
    $region9: #{multimodal_bilinear_forward.1} parent=5 // pred_check
      _
    $region10: #{multimodal_bilinear_forward.1} parent=5 // pred_check_branch
      %187 = sbr.rel (%p184) target = $region12
    $region11: #{multimodal_bilinear_forward.1} parent=5 // pred_region
      %s188 = ssub.s32 %s12, 1
      // Predicated region
      $region13: #{multimodal_bilinear_forward.1} parent=11 // pred_check
        %p189 = pneg %p85
      $region14: #{multimodal_bilinear_forward.1} parent=11 // pred_check_branch
        %191 = sbr.rel (%p189) target = $region16
      $region15: #{multimodal_bilinear_forward.1} parent=11 // pred_region
        _
      $region16: #{multimodal_bilinear_forward.1} parent=11 // pred_fallthru
        _
      // Predicated region
      $region17: #{multimodal_bilinear_forward.1} parent=11 // pred_check
        %p192 = pneg %p106
      $region18: #{multimodal_bilinear_forward.1} parent=11 // pred_check_branch
        %194 = sbr.rel (%p192) target = $region20
      $region19: #{multimodal_bilinear_forward.1} parent=11 // pred_region
        _
      $region20: #{multimodal_bilinear_forward.1} parent=11 // pred_fallthru
        _
      // Predicated region
      $region21: #{multimodal_bilinear_forward.1} parent=11 // pred_check
        %p195 = pneg %p127
      $region22: #{multimodal_bilinear_forward.1} parent=11 // pred_check_branch
        %197 = sbr.rel (%p195) target = $region24
      $region23: #{multimodal_bilinear_forward.1} parent=11 // pred_region
        _
      $region24: #{multimodal_bilinear_forward.1} parent=11 // pred_fallthru
        _
      // Predicated region
      $region25: #{multimodal_bilinear_forward.1} parent=11 // pred_check
        %p198 = pneg %p148
      $region26: #{multimodal_bilinear_forward.1} parent=11 // pred_check_branch
        %200 = sbr.rel (%p198) target = $region28
      $region27: #{multimodal_bilinear_forward.1} parent=11 // pred_region
        _
      $region28: #{multimodal_bilinear_forward.1} parent=11 // pred_fallthru
        _
    $region12: #{multimodal_bilinear_forward.1} parent=5 // pred_fallthru
      _
    %p201 = scmp.lt.s32.totalorder %s12, 2
    // Predicated region
    $region29: #{multimodal_bilinear_forward.1} parent=5 // pred_check
      %p202 = pneg %p201
    $region30: #{multimodal_bilinear_forward.1} parent=5 // pred_check_branch
      %204 = sbr.rel (%p202) target = $region32
    $region31: #{multimodal_bilinear_forward.1} parent=5 // pred_region
      // Predicated region
      $region33: #{multimodal_bilinear_forward.1} parent=31 // pred_check
        %p205 = pneg %p32
      $region34: #{multimodal_bilinear_forward.1} parent=31 // pred_check_branch
        %207 = sbr.rel (%p205) target = $region36
      $region35: #{multimodal_bilinear_forward.1} parent=31 // pred_region
        %p208 = scmp.lt.s32.totalorder %s12, 1
        %s209 = scalar_select %p208, %s12, 1
        %s210 = smul.addr %s209, 16
        %s211 = smul.addr %s210, 8
        %s212 = scalar_lea.vmem %s0, %s211
      $region36: #{multimodal_bilinear_forward.1} parent=31 // pred_fallthru
        _
      // Predicated region
      $region37: #{multimodal_bilinear_forward.1} parent=31 // pred_check
        %p213 = pneg %p58
      $region38: #{multimodal_bilinear_forward.1} parent=31 // pred_check_branch
        %215 = sbr.rel (%p213) target = $region40
      $region39: #{multimodal_bilinear_forward.1} parent=31 // pred_region
        %p216 = scmp.lt.s32.totalorder %s12, 1
        %s217 = scalar_select %p216, %s12, 1
        %s218 = smul.addr %s217, 8
        %s219 = smul.addr %s218, 4
        %s220 = scalar_lea.vmem %s1, %s219
      $region40: #{multimodal_bilinear_forward.1} parent=31 // pred_fallthru
        _
    $region32: #{multimodal_bilinear_forward.1} parent=5 // pred_fallthru
      _
    %p221 = scmp.le.s32.totalorder 1, %s12
    %p222 = scmp.lt.s32.totalorder %s12, 3
    %p223 = pnand %p221, %p222
    %p224 = pneg %p223
    // Predicated region
    $region41: #{multimodal_bilinear_forward.1} parent=5 // pred_check
      _
    $region42: #{multimodal_bilinear_forward.1} parent=5 // pred_check_branch
      %226 = sbr.rel (%p223) target = $region44
    $region43: #{multimodal_bilinear_forward.1} parent=5 // pred_region
      %s227 = ssub.s32 %s12, 1
      %p228 = scmp.lt.s32.totalorder %s17, 1
      %s229 = scalar_select %p228, %s17, 1
      %s230 = smul.addr %s229, 16
      %s231 = smul.addr %s230, 8
      %s232 = scalar_lea.vmem %s0, %s231
      %p233 = pneg %p38
      %p234 = pneg %p35
      %p235 = scmp.lt.s32.totalorder %s17, 1
      %s236 = scalar_select %p235, %s17, 1
      %s237 = smul.addr %s236, 8
      %s238 = smul.addr %s237, 4
      %s239 = scalar_lea.vmem %s1, %s238
      %p240 = pneg %p64
      %p241 = pneg %p61
      %p242 = pneg %p85
      %p243 = pneg %p82
      %p244 = pneg %p106
      %p245 = pneg %p103
      %p246 = pneg %p127
      %p247 = pneg %p124
      %p248 = pneg %p148
      %p249 = pneg %p145
      %p250 = pneg %p174
      %p251 = pneg %p171
      %p252 = scmp.lt.s32.totalorder %s17, 1
      %s253 = scalar_select %p252, %s17, 1
      %s254 = smul.addr %s253, 8
      %s255 = scalar_lea.vmem %s6, %s254
      %p256 = scmp.lt.s32.totalorder %s17, 1
      %s257 = scalar_select %p256, %s17, 1
      %s258 = smul.addr %s257, 16
      %s259 = smul.addr %s258, 8
      %s260 = scalar_lea.vmem %s0, %s259
      %p261 = scmp.lt.s32.totalorder %s17, 1
      %s262 = scalar_select %p261, %s17, 1
      %s263 = smul.addr %s262, 8
      %s264 = smul.addr %s263, 4
      %s265 = scalar_lea.vmem %s1, %s264
      %p266 = scmp.lt.s32.totalorder %s17, 1
      %s267 = scalar_select %p266, %s17, 1
      %s268 = smul.addr %s267, 8
      %s269 = scalar_lea.vmem %s6, %s268
      %v271 = vld [vmem:[%s5] sm:$0x1]
      %v272 = vld [vmem:[%s5 + $0x1] sm:$0x1]
      %v273 = vld [vmem:[%s260] sm:$0xff]
      %v274 = vld [vmem:[%s260 + $0x8] sm:$0xff]
      %v275 = vld [vmem:[%s260 + $0x10] sm:$0xff]
      %v276 = vld [vmem:[%s260 + $0x18] sm:$0xff]
      %v277 = vld [vmem:[%s260 + $0x20] sm:$0xff]
      %v278 = vld [vmem:[%s260 + $0x28] sm:$0xff]
      %v279 = vld [vmem:[%s260 + $0x30] sm:$0xff]
      %v280 = vld [vmem:[%s260 + $0x38] sm:$0xff]
      %v281 = vld [vmem:[%s260 + $0x40] sm:$0xff]
      %v282 = vld [vmem:[%s260 + $0x48] sm:$0xff]
      %v283 = vld [vmem:[%s260 + $0x50] sm:$0xff]
      %v284 = vld [vmem:[%s260 + $0x58] sm:$0xff]
      %v285 = vld [vmem:[%s260 + $0x60] sm:$0xff]
      %v286 = vld [vmem:[%s260 + $0x68] sm:$0xff]
      %v287 = vld [vmem:[%s260 + $0x70] sm:$0xff]
      %v288 = vld [vmem:[%s260 + $0x78] sm:$0xff]
      %v289 = vpack.c.bf16 %v273, %v273
      %v290 = vpack.c.bf16 %v274, %v274
      %v291 = vpack.c.bf16 %v275, %v275
      %v292 = vpack.c.bf16 %v276, %v276
      %v293 = vpack.c.bf16 %v277, %v277
      %v294 = vpack.c.bf16 %v278, %v278
      %v295 = vpack.c.bf16 %v279, %v279
      %v296 = vpack.c.bf16 %v280, %v280
      %v297 = vpack.c.bf16 %v281, %v281
      %v298 = vpack.c.bf16 %v282, %v282
      %v299 = vpack.c.bf16 %v283, %v283
      %v300 = vpack.c.bf16 %v284, %v284
      %v301 = vpack.c.bf16 %v285, %v285
      %v302 = vpack.c.bf16 %v286, %v286
      %v303 = vpack.c.bf16 %v287, %v287
      %v304 = vpack.c.bf16 %v288, %v288
      %v305 = vld [vmem:[%s2] sm:$0xf]
      %v306 = vld [vmem:[%s2 + $0x4] sm:$0xf]
      %v307 = vld [vmem:[%s2 + $0x8] sm:$0xf]
      %v308 = vld [vmem:[%s2 + $0xc] sm:$0xf]
      %v309 = vld [vmem:[%s2 + $0x10] sm:$0xf]
      %v310 = vld [vmem:[%s2 + $0x14] sm:$0xf]
      %v311 = vld [vmem:[%s2 + $0x18] sm:$0xf]
      %v312 = vld [vmem:[%s2 + $0x1c] sm:$0xf]
      %v313 = vld [vmem:[%s2 + $0x20] sm:$0xf]
      %v314 = vld [vmem:[%s2 + $0x24] sm:$0xf]
      %v315 = vld [vmem:[%s2 + $0x28] sm:$0xf]
      %v316 = vld [vmem:[%s2 + $0x2c] sm:$0xf]
      %v317 = vld [vmem:[%s2 + $0x30] sm:$0xf]
      %v318 = vld [vmem:[%s2 + $0x34] sm:$0xf]
      %v319 = vld [vmem:[%s2 + $0x38] sm:$0xf]
      %v320 = vld [vmem:[%s2 + $0x3c] sm:$0xf]
      %v321 = vld [vmem:[%s2 + $0x40] sm:$0xf]
      %v322 = vld [vmem:[%s2 + $0x44] sm:$0xf]
      %v323 = vld [vmem:[%s2 + $0x48] sm:$0xf]
      %v324 = vld [vmem:[%s2 + $0x4c] sm:$0xf]
      %v325 = vld [vmem:[%s2 + $0x50] sm:$0xf]
      %v326 = vld [vmem:[%s2 + $0x54] sm:$0xf]
      %v327 = vld [vmem:[%s2 + $0x58] sm:$0xf]
      %v328 = vld [vmem:[%s2 + $0x5c] sm:$0xf]
      %v329 = vld [vmem:[%s2 + $0x60] sm:$0xf]
      %v330 = vld [vmem:[%s2 + $0x64] sm:$0xf]
      %v331 = vld [vmem:[%s2 + $0x68] sm:$0xf]
      %v332 = vld [vmem:[%s2 + $0x6c] sm:$0xf]
      %v333 = vld [vmem:[%s2 + $0x70] sm:$0xf]
      %v334 = vld [vmem:[%s2 + $0x74] sm:$0xf]
      %v335 = vld [vmem:[%s2 + $0x78] sm:$0xf]
      %v336 = vld [vmem:[%s2 + $0x7c] sm:$0xf]
      %v337 = vld [vmem:[%s2 + $0x80] sm:$0xf]
      %v338 = vld [vmem:[%s2 + $0x84] sm:$0xf]
      %v339 = vld [vmem:[%s2 + $0x88] sm:$0xf]
      %v340 = vld [vmem:[%s2 + $0x8c] sm:$0xf]
      %v341 = vld [vmem:[%s2 + $0x90] sm:$0xf]
      %v342 = vld [vmem:[%s2 + $0x94] sm:$0xf]
      %v343 = vld [vmem:[%s2 + $0x98] sm:$0xf]
      %v344 = vld [vmem:[%s2 + $0x9c] sm:$0xf]
      %v345 = vld [vmem:[%s2 + $0xa0] sm:$0xf]
      %v346 = vld [vmem:[%s2 + $0xa4] sm:$0xf]
      %v347 = vld [vmem:[%s2 + $0xa8] sm:$0xf]
      %v348 = vld [vmem:[%s2 + $0xac] sm:$0xf]
      %v349 = vld [vmem:[%s2 + $0xb0] sm:$0xf]
      %v350 = vld [vmem:[%s2 + $0xb4] sm:$0xf]
      %v351 = vld [vmem:[%s2 + $0xb8] sm:$0xf]
      %v352 = vld [vmem:[%s2 + $0xbc] sm:$0xf]
      %v353 = vld [vmem:[%s2 + $0xc0] sm:$0xf]
      %v354 = vld [vmem:[%s2 + $0xc4] sm:$0xf]
      %v355 = vld [vmem:[%s2 + $0xc8] sm:$0xf]
      %v356 = vld [vmem:[%s2 + $0xcc] sm:$0xf]
      %v357 = vld [vmem:[%s2 + $0xd0] sm:$0xf]
      %v358 = vld [vmem:[%s2 + $0xd4] sm:$0xf]
      %v359 = vld [vmem:[%s2 + $0xd8] sm:$0xf]
      %v360 = vld [vmem:[%s2 + $0xdc] sm:$0xf]
      %v361 = vld [vmem:[%s2 + $0xe0] sm:$0xf]
      %v362 = vld [vmem:[%s2 + $0xe4] sm:$0xf]
      %v363 = vld [vmem:[%s2 + $0xe8] sm:$0xf]
      %v364 = vld [vmem:[%s2 + $0xec] sm:$0xf]
      %v365 = vld [vmem:[%s2 + $0xf0] sm:$0xf]
      %v366 = vld [vmem:[%s2 + $0xf4] sm:$0xf]
      %v367 = vld [vmem:[%s2 + $0xf8] sm:$0xf]
      %v368 = vld [vmem:[%s2 + $0xfc] sm:$0xf]
      %v369 = vld [vmem:[%s2 + $0x100] sm:$0xf]
      %v370 = vld [vmem:[%s2 + $0x104] sm:$0xf]
      %v371 = vld [vmem:[%s2 + $0x108] sm:$0xf]
      %v372 = vld [vmem:[%s2 + $0x10c] sm:$0xf]
      %v373 = vld [vmem:[%s2 + $0x110] sm:$0xf]
      %v374 = vld [vmem:[%s2 + $0x114] sm:$0xf]
      %v375 = vld [vmem:[%s2 + $0x118] sm:$0xf]
      %v376 = vld [vmem:[%s2 + $0x11c] sm:$0xf]
      %v377 = vld [vmem:[%s2 + $0x120] sm:$0xf]
      %v378 = vld [vmem:[%s2 + $0x124] sm:$0xf]
      %v379 = vld [vmem:[%s2 + $0x128] sm:$0xf]
      %v380 = vld [vmem:[%s2 + $0x12c] sm:$0xf]
      %v381 = vld [vmem:[%s2 + $0x130] sm:$0xf]
      %v382 = vld [vmem:[%s2 + $0x134] sm:$0xf]
      %v383 = vld [vmem:[%s2 + $0x138] sm:$0xf]
      %v384 = vld [vmem:[%s2 + $0x13c] sm:$0xf]
      %v385 = vld [vmem:[%s2 + $0x140] sm:$0xf]
      %v386 = vld [vmem:[%s2 + $0x144] sm:$0xf]
      %v387 = vld [vmem:[%s2 + $0x148] sm:$0xf]
      %v388 = vld [vmem:[%s2 + $0x14c] sm:$0xf]
      %v389 = vld [vmem:[%s2 + $0x150] sm:$0xf]
      %v390 = vld [vmem:[%s2 + $0x154] sm:$0xf]
      %v391 = vld [vmem:[%s2 + $0x158] sm:$0xf]
      %v392 = vld [vmem:[%s2 + $0x15c] sm:$0xf]
      %v393 = vld [vmem:[%s2 + $0x160] sm:$0xf]
      %v394 = vld [vmem:[%s2 + $0x164] sm:$0xf]
      %v395 = vld [vmem:[%s2 + $0x168] sm:$0xf]
      %v396 = vld [vmem:[%s2 + $0x16c] sm:$0xf]
      %v397 = vld [vmem:[%s2 + $0x170] sm:$0xf]
      %v398 = vld [vmem:[%s2 + $0x174] sm:$0xf]
      %v399 = vld [vmem:[%s2 + $0x178] sm:$0xf]
      %v400 = vld [vmem:[%s2 + $0x17c] sm:$0xf]
      %v401 = vld [vmem:[%s2 + $0x180] sm:$0xf]
      %v402 = vld [vmem:[%s2 + $0x184] sm:$0xf]
      %v403 = vld [vmem:[%s2 + $0x188] sm:$0xf]
      %v404 = vld [vmem:[%s2 + $0x18c] sm:$0xf]
      %v405 = vld [vmem:[%s2 + $0x190] sm:$0xf]
      %v406 = vld [vmem:[%s2 + $0x194] sm:$0xf]
      %v407 = vld [vmem:[%s2 + $0x198] sm:$0xf]
      %v408 = vld [vmem:[%s2 + $0x19c] sm:$0xf]
      %v409 = vld [vmem:[%s2 + $0x1a0] sm:$0xf]
      %v410 = vld [vmem:[%s2 + $0x1a4] sm:$0xf]
      %v411 = vld [vmem:[%s2 + $0x1a8] sm:$0xf]
      %v412 = vld [vmem:[%s2 + $0x1ac] sm:$0xf]
      %v413 = vld [vmem:[%s2 + $0x1b0] sm:$0xf]
      %v414 = vld [vmem:[%s2 + $0x1b4] sm:$0xf]
      %v415 = vld [vmem:[%s2 + $0x1b8] sm:$0xf]
      %v416 = vld [vmem:[%s2 + $0x1bc] sm:$0xf]
      %v417 = vld [vmem:[%s2 + $0x1c0] sm:$0xf]
      %v418 = vld [vmem:[%s2 + $0x1c4] sm:$0xf]
      %v419 = vld [vmem:[%s2 + $0x1c8] sm:$0xf]
      %v420 = vld [vmem:[%s2 + $0x1cc] sm:$0xf]
      %v421 = vld [vmem:[%s2 + $0x1d0] sm:$0xf]
      %v422 = vld [vmem:[%s2 + $0x1d4] sm:$0xf]
      %v423 = vld [vmem:[%s2 + $0x1d8] sm:$0xf]
      %v424 = vld [vmem:[%s2 + $0x1dc] sm:$0xf]
      %v425 = vld [vmem:[%s2 + $0x1e0] sm:$0xf]
      %v426 = vld [vmem:[%s2 + $0x1e4] sm:$0xf]
      %v427 = vld [vmem:[%s2 + $0x1e8] sm:$0xf]
      %v428 = vld [vmem:[%s2 + $0x1ec] sm:$0xf]
      %v429 = vld [vmem:[%s2 + $0x1f0] sm:$0xf]
      %v430 = vld [vmem:[%s2 + $0x1f4] sm:$0xf]
      %v431 = vld [vmem:[%s2 + $0x1f8] sm:$0xf]
      %v432 = vld [vmem:[%s2 + $0x1fc] sm:$0xf]
      %v433 = vld [vmem:[%s2 + $0x200] sm:$0xf]
      %v434 = vld [vmem:[%s2 + $0x204] sm:$0xf]
      %v435 = vld [vmem:[%s2 + $0x208] sm:$0xf]
      %v436 = vld [vmem:[%s2 + $0x20c] sm:$0xf]
      %v437 = vld [vmem:[%s2 + $0x210] sm:$0xf]
      %v438 = vld [vmem:[%s2 + $0x214] sm:$0xf]
      %v439 = vld [vmem:[%s2 + $0x218] sm:$0xf]
      %v440 = vld [vmem:[%s2 + $0x21c] sm:$0xf]
      %v441 = vld [vmem:[%s2 + $0x220] sm:$0xf]
      %v442 = vld [vmem:[%s2 + $0x224] sm:$0xf]
      %v443 = vld [vmem:[%s2 + $0x228] sm:$0xf]
      %v444 = vld [vmem:[%s2 + $0x22c] sm:$0xf]
      %v445 = vld [vmem:[%s2 + $0x230] sm:$0xf]
      %v446 = vld [vmem:[%s2 + $0x234] sm:$0xf]
      %v447 = vld [vmem:[%s2 + $0x238] sm:$0xf]
      %v448 = vld [vmem:[%s2 + $0x23c] sm:$0xf]
      %v449 = vld [vmem:[%s2 + $0x240] sm:$0xf]
      %v450 = vld [vmem:[%s2 + $0x244] sm:$0xf]
      %v451 = vld [vmem:[%s2 + $0x248] sm:$0xf]
      %v452 = vld [vmem:[%s2 + $0x24c] sm:$0xf]
      %v453 = vld [vmem:[%s2 + $0x250] sm:$0xf]
      %v454 = vld [vmem:[%s2 + $0x254] sm:$0xf]
      %v455 = vld [vmem:[%s2 + $0x258] sm:$0xf]
      %v456 = vld [vmem:[%s2 + $0x25c] sm:$0xf]
      %v457 = vld [vmem:[%s2 + $0x260] sm:$0xf]
      %v458 = vld [vmem:[%s2 + $0x264] sm:$0xf]
      %v459 = vld [vmem:[%s2 + $0x268] sm:$0xf]
      %v460 = vld [vmem:[%s2 + $0x26c] sm:$0xf]
      %v461 = vld [vmem:[%s2 + $0x270] sm:$0xf]
      %v462 = vld [vmem:[%s2 + $0x274] sm:$0xf]
      %v463 = vld [vmem:[%s2 + $0x278] sm:$0xf]
      %v464 = vld [vmem:[%s2 + $0x27c] sm:$0xf]
      %v465 = vld [vmem:[%s2 + $0x280] sm:$0xf]
      %v466 = vld [vmem:[%s2 + $0x284] sm:$0xf]
      %v467 = vld [vmem:[%s2 + $0x288] sm:$0xf]
      %v468 = vld [vmem:[%s2 + $0x28c] sm:$0xf]
      %v469 = vld [vmem:[%s2 + $0x290] sm:$0xf]
      %v470 = vld [vmem:[%s2 + $0x294] sm:$0xf]
      %v471 = vld [vmem:[%s2 + $0x298] sm:$0xf]
      %v472 = vld [vmem:[%s2 + $0x29c] sm:$0xf]
      %v473 = vld [vmem:[%s2 + $0x2a0] sm:$0xf]
      %v474 = vld [vmem:[%s2 + $0x2a4] sm:$0xf]
      %v475 = vld [vmem:[%s2 + $0x2a8] sm:$0xf]
      %v476 = vld [vmem:[%s2 + $0x2ac] sm:$0xf]
      %v477 = vld [vmem:[%s2 + $0x2b0] sm:$0xf]
      %v478 = vld [vmem:[%s2 + $0x2b4] sm:$0xf]
      %v479 = vld [vmem:[%s2 + $0x2b8] sm:$0xf]
      %v480 = vld [vmem:[%s2 + $0x2bc] sm:$0xf]
      %v481 = vld [vmem:[%s2 + $0x2c0] sm:$0xf]
      %v482 = vld [vmem:[%s2 + $0x2c4] sm:$0xf]
      %v483 = vld [vmem:[%s2 + $0x2c8] sm:$0xf]
      %v484 = vld [vmem:[%s2 + $0x2cc] sm:$0xf]
      %v485 = vld [vmem:[%s2 + $0x2d0] sm:$0xf]
      %v486 = vld [vmem:[%s2 + $0x2d4] sm:$0xf]
      %v487 = vld [vmem:[%s2 + $0x2d8] sm:$0xf]
      %v488 = vld [vmem:[%s2 + $0x2dc] sm:$0xf]
      %v489 = vld [vmem:[%s2 + $0x2e0] sm:$0xf]
      %v490 = vld [vmem:[%s2 + $0x2e4] sm:$0xf]
      %v491 = vld [vmem:[%s2 + $0x2e8] sm:$0xf]
      %v492 = vld [vmem:[%s2 + $0x2ec] sm:$0xf]
      %v493 = vld [vmem:[%s2 + $0x2f0] sm:$0xf]
      %v494 = vld [vmem:[%s2 + $0x2f4] sm:$0xf]
      %v495 = vld [vmem:[%s2 + $0x2f8] sm:$0xf]
      %v496 = vld [vmem:[%s2 + $0x2fc] sm:$0xf]
      %v497 = vld [vmem:[%s2 + $0x300] sm:$0xf]
      %v498 = vld [vmem:[%s2 + $0x304] sm:$0xf]
      %v499 = vld [vmem:[%s2 + $0x308] sm:$0xf]
      %v500 = vld [vmem:[%s2 + $0x30c] sm:$0xf]
      %v501 = vld [vmem:[%s2 + $0x310] sm:$0xf]
      %v502 = vld [vmem:[%s2 + $0x314] sm:$0xf]
      %v503 = vld [vmem:[%s2 + $0x318] sm:$0xf]
      %v504 = vld [vmem:[%s2 + $0x31c] sm:$0xf]
      %v505 = vld [vmem:[%s2 + $0x320] sm:$0xf]
      %v506 = vld [vmem:[%s2 + $0x324] sm:$0xf]
      %v507 = vld [vmem:[%s2 + $0x328] sm:$0xf]
      %v508 = vld [vmem:[%s2 + $0x32c] sm:$0xf]
      %v509 = vld [vmem:[%s2 + $0x330] sm:$0xf]
      %v510 = vld [vmem:[%s2 + $0x334] sm:$0xf]
      %v511 = vld [vmem:[%s2 + $0x338] sm:$0xf]
      %v512 = vld [vmem:[%s2 + $0x33c] sm:$0xf]
      %v513 = vld [vmem:[%s2 + $0x340] sm:$0xf]
      %v514 = vld [vmem:[%s2 + $0x344] sm:$0xf]
      %v515 = vld [vmem:[%s2 + $0x348] sm:$0xf]
      %v516 = vld [vmem:[%s2 + $0x34c] sm:$0xf]
      %v517 = vld [vmem:[%s2 + $0x350] sm:$0xf]
      %v518 = vld [vmem:[%s2 + $0x354] sm:$0xf]
      %v519 = vld [vmem:[%s2 + $0x358] sm:$0xf]
      %v520 = vld [vmem:[%s2 + $0x35c] sm:$0xf]
      %v521 = vld [vmem:[%s2 + $0x360] sm:$0xf]
      %v522 = vld [vmem:[%s2 + $0x364] sm:$0xf]
      %v523 = vld [vmem:[%s2 + $0x368] sm:$0xf]
      %v524 = vld [vmem:[%s2 + $0x36c] sm:$0xf]
      %v525 = vld [vmem:[%s2 + $0x370] sm:$0xf]
      %v526 = vld [vmem:[%s2 + $0x374] sm:$0xf]
      %v527 = vld [vmem:[%s2 + $0x378] sm:$0xf]
      %v528 = vld [vmem:[%s2 + $0x37c] sm:$0xf]
      %v529 = vld [vmem:[%s2 + $0x380] sm:$0xf]
      %v530 = vld [vmem:[%s2 + $0x384] sm:$0xf]
      %v531 = vld [vmem:[%s2 + $0x388] sm:$0xf]
      %v532 = vld [vmem:[%s2 + $0x38c] sm:$0xf]
      %v533 = vld [vmem:[%s2 + $0x390] sm:$0xf]
      %v534 = vld [vmem:[%s2 + $0x394] sm:$0xf]
      %v535 = vld [vmem:[%s2 + $0x398] sm:$0xf]
      %v536 = vld [vmem:[%s2 + $0x39c] sm:$0xf]
      %v537 = vld [vmem:[%s2 + $0x3a0] sm:$0xf]
      %v538 = vld [vmem:[%s2 + $0x3a4] sm:$0xf]
      %v539 = vld [vmem:[%s2 + $0x3a8] sm:$0xf]
      %v540 = vld [vmem:[%s2 + $0x3ac] sm:$0xf]
      %v541 = vld [vmem:[%s2 + $0x3b0] sm:$0xf]
      %v542 = vld [vmem:[%s2 + $0x3b4] sm:$0xf]
      %v543 = vld [vmem:[%s2 + $0x3b8] sm:$0xf]
      %v544 = vld [vmem:[%s2 + $0x3bc] sm:$0xf]
      %v545 = vld [vmem:[%s2 + $0x3c0] sm:$0xf]
      %v546 = vld [vmem:[%s2 + $0x3c4] sm:$0xf]
      %v547 = vld [vmem:[%s2 + $0x3c8] sm:$0xf]
      %v548 = vld [vmem:[%s2 + $0x3cc] sm:$0xf]
      %v549 = vld [vmem:[%s2 + $0x3d0] sm:$0xf]
      %v550 = vld [vmem:[%s2 + $0x3d4] sm:$0xf]
      %v551 = vld [vmem:[%s2 + $0x3d8] sm:$0xf]
      %v552 = vld [vmem:[%s2 + $0x3dc] sm:$0xf]
      %v553 = vld [vmem:[%s2 + $0x3e0] sm:$0xf]
      %v554 = vld [vmem:[%s2 + $0x3e4] sm:$0xf]
      %v555 = vld [vmem:[%s2 + $0x3e8] sm:$0xf]
      %v556 = vld [vmem:[%s2 + $0x3ec] sm:$0xf]
      %v557 = vld [vmem:[%s2 + $0x3f0] sm:$0xf]
      %v558 = vld [vmem:[%s2 + $0x3f4] sm:$0xf]
      %v559 = vld [vmem:[%s2 + $0x3f8] sm:$0xf]
      %v560 = vld [vmem:[%s2 + $0x3fc] sm:$0xf]
      %v561 = vperm.slane %v271, 0
      %v818 = vunpack.c.l.b16 %v305
      %v819 = vunpack.c.l.b16 %v306
      %v820 = vunpack.c.l.b16 %v307
      %v821 = vunpack.c.l.b16 %v308
      %v822 = vunpack.c.l.b16 %v309
      %v823 = vunpack.c.l.b16 %v310
      %v824 = vunpack.c.l.b16 %v311
      %v825 = vunpack.c.l.b16 %v312
      %v826 = vunpack.c.l.b16 %v313
      %v827 = vunpack.c.l.b16 %v314
      %v828 = vunpack.c.l.b16 %v315
      %v829 = vunpack.c.l.b16 %v316
      %v830 = vunpack.c.l.b16 %v317
      %v831 = vunpack.c.l.b16 %v318
      %v832 = vunpack.c.l.b16 %v319
      %v833 = vunpack.c.l.b16 %v320
      %v834 = vunpack.c.l.b16 %v321
      %v835 = vunpack.c.l.b16 %v322
      %v836 = vunpack.c.l.b16 %v323
      %v837 = vunpack.c.l.b16 %v324
      %v838 = vunpack.c.l.b16 %v325
      %v839 = vunpack.c.l.b16 %v326
      %v840 = vunpack.c.l.b16 %v327
      %v841 = vunpack.c.l.b16 %v328
      %v842 = vunpack.c.l.b16 %v329
      %v843 = vunpack.c.l.b16 %v330
      %v844 = vunpack.c.l.b16 %v331
      %v845 = vunpack.c.l.b16 %v332
      %v846 = vunpack.c.l.b16 %v333
      %v847 = vunpack.c.l.b16 %v334
      %v848 = vunpack.c.l.b16 %v335
      %v849 = vunpack.c.l.b16 %v336
      %v850 = vunpack.c.l.b16 %v337
      %v851 = vunpack.c.l.b16 %v338
      %v852 = vunpack.c.l.b16 %v339
      %v853 = vunpack.c.l.b16 %v340
      %v854 = vunpack.c.l.b16 %v341
      %v855 = vunpack.c.l.b16 %v342
      %v856 = vunpack.c.l.b16 %v343
      %v857 = vunpack.c.l.b16 %v344
      %v858 = vunpack.c.l.b16 %v345
      %v859 = vunpack.c.l.b16 %v346
      %v860 = vunpack.c.l.b16 %v347
      %v861 = vunpack.c.l.b16 %v348
      %v862 = vunpack.c.l.b16 %v349
      %v863 = vunpack.c.l.b16 %v350
      %v864 = vunpack.c.l.b16 %v351
      %v865 = vunpack.c.l.b16 %v352
      %v866 = vunpack.c.l.b16 %v353
      %v867 = vunpack.c.l.b16 %v354
      %v868 = vunpack.c.l.b16 %v355
      %v869 = vunpack.c.l.b16 %v356
      %v870 = vunpack.c.l.b16 %v357
      %v871 = vunpack.c.l.b16 %v358
      %v872 = vunpack.c.l.b16 %v359
      %v873 = vunpack.c.l.b16 %v360
      %v874 = vunpack.c.l.b16 %v361
      %v875 = vunpack.c.l.b16 %v362
      %v876 = vunpack.c.l.b16 %v363
      %v877 = vunpack.c.l.b16 %v364
      %v878 = vunpack.c.l.b16 %v365
      %v879 = vunpack.c.l.b16 %v366
      %v880 = vunpack.c.l.b16 %v367
      %v881 = vunpack.c.l.b16 %v368
      %v882 = vunpack.c.l.b16 %v369
      %v883 = vunpack.c.l.b16 %v370
      %v884 = vunpack.c.l.b16 %v371
      %v885 = vunpack.c.l.b16 %v372
      %v886 = vunpack.c.l.b16 %v373
      %v887 = vunpack.c.l.b16 %v374
      %v888 = vunpack.c.l.b16 %v375
      %v889 = vunpack.c.l.b16 %v376
      %v890 = vunpack.c.l.b16 %v377
      %v891 = vunpack.c.l.b16 %v378
      %v892 = vunpack.c.l.b16 %v379
      %v893 = vunpack.c.l.b16 %v380
      %v894 = vunpack.c.l.b16 %v381
      %v895 = vunpack.c.l.b16 %v382
      %v896 = vunpack.c.l.b16 %v383
      %v897 = vunpack.c.l.b16 %v384
      %v898 = vunpack.c.l.b16 %v385
      %v899 = vunpack.c.l.b16 %v386
      %v900 = vunpack.c.l.b16 %v387
      %v901 = vunpack.c.l.b16 %v388
      %v902 = vunpack.c.l.b16 %v389
      %v903 = vunpack.c.l.b16 %v390
      %v904 = vunpack.c.l.b16 %v391
      %v905 = vunpack.c.l.b16 %v392
      %v906 = vunpack.c.l.b16 %v393
      %v907 = vunpack.c.l.b16 %v394
      %v908 = vunpack.c.l.b16 %v395
      %v909 = vunpack.c.l.b16 %v396
      %v910 = vunpack.c.l.b16 %v397
      %v911 = vunpack.c.l.b16 %v398
      %v912 = vunpack.c.l.b16 %v399
      %v913 = vunpack.c.l.b16 %v400
      %v914 = vunpack.c.l.b16 %v401
      %v915 = vunpack.c.l.b16 %v402
      %v916 = vunpack.c.l.b16 %v403
      %v917 = vunpack.c.l.b16 %v404
      %v918 = vunpack.c.l.b16 %v405
      %v919 = vunpack.c.l.b16 %v406
      %v920 = vunpack.c.l.b16 %v407
      %v921 = vunpack.c.l.b16 %v408
      %v922 = vunpack.c.l.b16 %v409
      %v923 = vunpack.c.l.b16 %v410
      %v924 = vunpack.c.l.b16 %v411
      %v925 = vunpack.c.l.b16 %v412
      %v926 = vunpack.c.l.b16 %v413
      %v927 = vunpack.c.l.b16 %v414
      %v928 = vunpack.c.l.b16 %v415
      %v929 = vunpack.c.l.b16 %v416
      %v930 = vunpack.c.l.b16 %v417
      %v931 = vunpack.c.l.b16 %v418
      %v932 = vunpack.c.l.b16 %v419
      %v933 = vunpack.c.l.b16 %v420
      %v934 = vunpack.c.l.b16 %v421
      %v935 = vunpack.c.l.b16 %v422
      %v936 = vunpack.c.l.b16 %v423
      %v937 = vunpack.c.l.b16 %v424
      %v938 = vunpack.c.l.b16 %v425
      %v939 = vunpack.c.l.b16 %v426
      %v940 = vunpack.c.l.b16 %v427
      %v941 = vunpack.c.l.b16 %v428
      %v942 = vunpack.c.l.b16 %v429
      %v943 = vunpack.c.l.b16 %v430
      %v944 = vunpack.c.l.b16 %v431
      %v945 = vunpack.c.l.b16 %v432
      %v946 = vunpack.c.l.b16 %v433
      %v947 = vunpack.c.l.b16 %v434
      %v948 = vunpack.c.l.b16 %v435
      %v949 = vunpack.c.l.b16 %v436
      %v950 = vunpack.c.l.b16 %v437
      %v951 = vunpack.c.l.b16 %v438
      %v952 = vunpack.c.l.b16 %v439
      %v953 = vunpack.c.l.b16 %v440
      %v954 = vunpack.c.l.b16 %v441
      %v955 = vunpack.c.l.b16 %v442
      %v956 = vunpack.c.l.b16 %v443
      %v957 = vunpack.c.l.b16 %v444
      %v958 = vunpack.c.l.b16 %v445
      %v959 = vunpack.c.l.b16 %v446
      %v960 = vunpack.c.l.b16 %v447
      %v961 = vunpack.c.l.b16 %v448
      %v962 = vunpack.c.l.b16 %v449
      %v963 = vunpack.c.l.b16 %v450
      %v964 = vunpack.c.l.b16 %v451
      %v965 = vunpack.c.l.b16 %v452
      %v966 = vunpack.c.l.b16 %v453
      %v967 = vunpack.c.l.b16 %v454
      %v968 = vunpack.c.l.b16 %v455
      %v969 = vunpack.c.l.b16 %v456
      %v970 = vunpack.c.l.b16 %v457
      %v971 = vunpack.c.l.b16 %v458
      %v972 = vunpack.c.l.b16 %v459
      %v973 = vunpack.c.l.b16 %v460
      %v974 = vunpack.c.l.b16 %v461
      %v975 = vunpack.c.l.b16 %v462
      %v976 = vunpack.c.l.b16 %v463
      %v977 = vunpack.c.l.b16 %v464
      %v978 = vunpack.c.l.b16 %v465
      %v979 = vunpack.c.l.b16 %v466
      %v980 = vunpack.c.l.b16 %v467
      %v981 = vunpack.c.l.b16 %v468
      %v982 = vunpack.c.l.b16 %v469
      %v983 = vunpack.c.l.b16 %v470
      %v984 = vunpack.c.l.b16 %v471
      %v985 = vunpack.c.l.b16 %v472
      %v986 = vunpack.c.l.b16 %v473
      %v987 = vunpack.c.l.b16 %v474
      %v988 = vunpack.c.l.b16 %v475
      %v989 = vunpack.c.l.b16 %v476
      %v990 = vunpack.c.l.b16 %v477
      %v991 = vunpack.c.l.b16 %v478
      %v992 = vunpack.c.l.b16 %v479
      %v993 = vunpack.c.l.b16 %v480
      %v994 = vunpack.c.l.b16 %v481
      %v995 = vunpack.c.l.b16 %v482
      %v996 = vunpack.c.l.b16 %v483
      %v997 = vunpack.c.l.b16 %v484
      %v998 = vunpack.c.l.b16 %v485
      %v999 = vunpack.c.l.b16 %v486
      %v1000 = vunpack.c.l.b16 %v487
      %v1001 = vunpack.c.l.b16 %v488
      %v1002 = vunpack.c.l.b16 %v489
      %v1003 = vunpack.c.l.b16 %v490
      %v1004 = vunpack.c.l.b16 %v491
      %v1005 = vunpack.c.l.b16 %v492
      %v1006 = vunpack.c.l.b16 %v493
      %v1007 = vunpack.c.l.b16 %v494
      %v1008 = vunpack.c.l.b16 %v495
      %v1009 = vunpack.c.l.b16 %v496
      %v1010 = vunpack.c.l.b16 %v497
      %v1011 = vunpack.c.l.b16 %v498
      %v1012 = vunpack.c.l.b16 %v499
      %v1013 = vunpack.c.l.b16 %v500
      %v1014 = vunpack.c.l.b16 %v501
      %v1015 = vunpack.c.l.b16 %v502
      %v1016 = vunpack.c.l.b16 %v503
      %v1017 = vunpack.c.l.b16 %v504
      %v1018 = vunpack.c.l.b16 %v505
      %v1019 = vunpack.c.l.b16 %v506
      %v1020 = vunpack.c.l.b16 %v507
      %v1021 = vunpack.c.l.b16 %v508
      %v1022 = vunpack.c.l.b16 %v509
      %v1023 = vunpack.c.l.b16 %v510
      %v1024 = vunpack.c.l.b16 %v511
      %v1025 = vunpack.c.l.b16 %v512
      %v1026 = vunpack.c.l.b16 %v513
      %v1027 = vunpack.c.l.b16 %v514
      %v1028 = vunpack.c.l.b16 %v515
      %v1029 = vunpack.c.l.b16 %v516
      %v1030 = vunpack.c.l.b16 %v517
      %v1031 = vunpack.c.l.b16 %v518
      %v1032 = vunpack.c.l.b16 %v519
      %v1033 = vunpack.c.l.b16 %v520
      %v1034 = vunpack.c.l.b16 %v521
      %v1035 = vunpack.c.l.b16 %v522
      %v1036 = vunpack.c.l.b16 %v523
      %v1037 = vunpack.c.l.b16 %v524
      %v1038 = vunpack.c.l.b16 %v525
      %v1039 = vunpack.c.l.b16 %v526
      %v1040 = vunpack.c.l.b16 %v527
      %v1041 = vunpack.c.l.b16 %v528
      %v1042 = vunpack.c.l.b16 %v529
      %v1043 = vunpack.c.l.b16 %v530
      %v1044 = vunpack.c.l.b16 %v531
      %v1045 = vunpack.c.l.b16 %v532
      %v1046 = vunpack.c.l.b16 %v533
      %v1047 = vunpack.c.l.b16 %v534
      %v1048 = vunpack.c.l.b16 %v535
      %v1049 = vunpack.c.l.b16 %v536
      %v1050 = vunpack.c.l.b16 %v537
      %v1051 = vunpack.c.l.b16 %v538
      %v1052 = vunpack.c.l.b16 %v539
      %v1053 = vunpack.c.l.b16 %v540
      %v1054 = vunpack.c.l.b16 %v541
      %v1055 = vunpack.c.l.b16 %v542
      %v1056 = vunpack.c.l.b16 %v543
      %v1057 = vunpack.c.l.b16 %v544
      %v1058 = vunpack.c.l.b16 %v545
      %v1059 = vunpack.c.l.b16 %v546
      %v1060 = vunpack.c.l.b16 %v547
      %v1061 = vunpack.c.l.b16 %v548
      %v1062 = vunpack.c.l.b16 %v549
      %v1063 = vunpack.c.l.b16 %v550
      %v1064 = vunpack.c.l.b16 %v551
      %v1065 = vunpack.c.l.b16 %v552
      %v1066 = vunpack.c.l.b16 %v553
      %v1067 = vunpack.c.l.b16 %v554
      %v1068 = vunpack.c.l.b16 %v555
      %v1069 = vunpack.c.l.b16 %v556
      %v1070 = vunpack.c.l.b16 %v557
      %v1071 = vunpack.c.l.b16 %v558
      %v1072 = vunpack.c.l.b16 %v559
      %v1073 = vunpack.c.l.b16 %v560
      %v1074 = vpack.c.b16 %v819, %v818
      %v1075 = vpack.c.b16 %v821, %v820
      %v1076 = vpack.c.b16 %v823, %v822
      %v1077 = vpack.c.b16 %v825, %v824
      %v1078 = vpack.c.b16 %v827, %v826
      %v1079 = vpack.c.b16 %v829, %v828
      %v1080 = vpack.c.b16 %v831, %v830
      %v1081 = vpack.c.b16 %v833, %v832
      %v1082 = vpack.c.b16 %v835, %v834
      %v1083 = vpack.c.b16 %v837, %v836
      %v1084 = vpack.c.b16 %v839, %v838
      %v1085 = vpack.c.b16 %v841, %v840
      %v1086 = vpack.c.b16 %v843, %v842
      %v1087 = vpack.c.b16 %v845, %v844
      %v1088 = vpack.c.b16 %v847, %v846
      %v1089 = vpack.c.b16 %v849, %v848
      %v1090 = vpack.c.b16 %v851, %v850
      %v1091 = vpack.c.b16 %v853, %v852
      %v1092 = vpack.c.b16 %v855, %v854
      %v1093 = vpack.c.b16 %v857, %v856
      %v1094 = vpack.c.b16 %v859, %v858
      %v1095 = vpack.c.b16 %v861, %v860
      %v1096 = vpack.c.b16 %v863, %v862
      %v1097 = vpack.c.b16 %v865, %v864
      %v1098 = vpack.c.b16 %v867, %v866
      %v1099 = vpack.c.b16 %v869, %v868
      %v1100 = vpack.c.b16 %v871, %v870
      %v1101 = vpack.c.b16 %v873, %v872
      %v1102 = vpack.c.b16 %v875, %v874
      %v1103 = vpack.c.b16 %v877, %v876
      %v1104 = vpack.c.b16 %v879, %v878
      %v1105 = vpack.c.b16 %v881, %v880
      %v1106 = vpack.c.b16 %v883, %v882
      %v1107 = vpack.c.b16 %v885, %v884
      %v1108 = vpack.c.b16 %v887, %v886
      %v1109 = vpack.c.b16 %v889, %v888
      %v1110 = vpack.c.b16 %v891, %v890
      %v1111 = vpack.c.b16 %v893, %v892
      %v1112 = vpack.c.b16 %v895, %v894
      %v1113 = vpack.c.b16 %v897, %v896
      %v1114 = vpack.c.b16 %v899, %v898
      %v1115 = vpack.c.b16 %v901, %v900
      %v1116 = vpack.c.b16 %v903, %v902
      %v1117 = vpack.c.b16 %v905, %v904
      %v1118 = vpack.c.b16 %v907, %v906
      %v1119 = vpack.c.b16 %v909, %v908
      %v1120 = vpack.c.b16 %v911, %v910
      %v1121 = vpack.c.b16 %v913, %v912
      %v1122 = vpack.c.b16 %v915, %v914
      %v1123 = vpack.c.b16 %v917, %v916
      %v1124 = vpack.c.b16 %v919, %v918
      %v1125 = vpack.c.b16 %v921, %v920
      %v1126 = vpack.c.b16 %v923, %v922
      %v1127 = vpack.c.b16 %v925, %v924
      %v1128 = vpack.c.b16 %v927, %v926
      %v1129 = vpack.c.b16 %v929, %v928
      %v1130 = vpack.c.b16 %v931, %v930
      %v1131 = vpack.c.b16 %v933, %v932
      %v1132 = vpack.c.b16 %v935, %v934
      %v1133 = vpack.c.b16 %v937, %v936
      %v1134 = vpack.c.b16 %v939, %v938
      %v1135 = vpack.c.b16 %v941, %v940
      %v1136 = vpack.c.b16 %v943, %v942
      %v1137 = vpack.c.b16 %v945, %v944
      %v1138 = vpack.c.b16 %v947, %v946
      %v1139 = vpack.c.b16 %v949, %v948
      %v1140 = vpack.c.b16 %v951, %v950
      %v1141 = vpack.c.b16 %v953, %v952
      %v1142 = vpack.c.b16 %v955, %v954
      %v1143 = vpack.c.b16 %v957, %v956
      %v1144 = vpack.c.b16 %v959, %v958
      %v1145 = vpack.c.b16 %v961, %v960
      %v1146 = vpack.c.b16 %v963, %v962
      %v1147 = vpack.c.b16 %v965, %v964
      %v1148 = vpack.c.b16 %v967, %v966
      %v1149 = vpack.c.b16 %v969, %v968
      %v1150 = vpack.c.b16 %v971, %v970
      %v1151 = vpack.c.b16 %v973, %v972
      %v1152 = vpack.c.b16 %v975, %v974
      %v1153 = vpack.c.b16 %v977, %v976
      %v1154 = vpack.c.b16 %v979, %v978
      %v1155 = vpack.c.b16 %v981, %v980
      %v1156 = vpack.c.b16 %v983, %v982
      %v1157 = vpack.c.b16 %v985, %v984
      %v1158 = vpack.c.b16 %v987, %v986
      %v1159 = vpack.c.b16 %v989, %v988
      %v1160 = vpack.c.b16 %v991, %v990
      %v1161 = vpack.c.b16 %v993, %v992
      %v1162 = vpack.c.b16 %v995, %v994
      %v1163 = vpack.c.b16 %v997, %v996
      %v1164 = vpack.c.b16 %v999, %v998
      %v1165 = vpack.c.b16 %v1001, %v1000
      %v1166 = vpack.c.b16 %v1003, %v1002
      %v1167 = vpack.c.b16 %v1005, %v1004
      %v1168 = vpack.c.b16 %v1007, %v1006
      %v1169 = vpack.c.b16 %v1009, %v1008
      %v1170 = vpack.c.b16 %v1011, %v1010
      %v1171 = vpack.c.b16 %v1013, %v1012
      %v1172 = vpack.c.b16 %v1015, %v1014
      %v1173 = vpack.c.b16 %v1017, %v1016
      %v1174 = vpack.c.b16 %v1019, %v1018
      %v1175 = vpack.c.b16 %v1021, %v1020
      %v1176 = vpack.c.b16 %v1023, %v1022
      %v1177 = vpack.c.b16 %v1025, %v1024
      %v1178 = vpack.c.b16 %v1027, %v1026
      %v1179 = vpack.c.b16 %v1029, %v1028
      %v1180 = vpack.c.b16 %v1031, %v1030
      %v1181 = vpack.c.b16 %v1033, %v1032
      %v1182 = vpack.c.b16 %v1035, %v1034
      %v1183 = vpack.c.b16 %v1037, %v1036
      %v1184 = vpack.c.b16 %v1039, %v1038
      %v1185 = vpack.c.b16 %v1041, %v1040
      %v1186 = vpack.c.b16 %v1043, %v1042
      %v1187 = vpack.c.b16 %v1045, %v1044
      %v1188 = vpack.c.b16 %v1047, %v1046
      %v1189 = vpack.c.b16 %v1049, %v1048
      %v1190 = vpack.c.b16 %v1051, %v1050
      %v1191 = vpack.c.b16 %v1053, %v1052
      %v1192 = vpack.c.b16 %v1055, %v1054
      %v1193 = vpack.c.b16 %v1057, %v1056
      %v1194 = vpack.c.b16 %v1059, %v1058
      %v1195 = vpack.c.b16 %v1061, %v1060
      %v1196 = vpack.c.b16 %v1063, %v1062
      %v1197 = vpack.c.b16 %v1065, %v1064
      %v1198 = vpack.c.b16 %v1067, %v1066
      %v1199 = vpack.c.b16 %v1069, %v1068
      %v1200 = vpack.c.b16 %v1071, %v1070
      %v1201 = vpack.c.b16 %v1073, %v1072
      %1330 = vmatpush.bf16.msra.mxu0 %v1081
      %1331 = vmatpush.bf16.msra.mxu0 %v1080
      %1332 = vmatpush.bf16.msra.mxu0 %v1079
      %1333 = vmatpush.bf16.msra.mxu0 %v1078
      %1334 = vmatpush.bf16.msra.mxu0 %v1077
      %1335 = vmatpush.bf16.msra.mxu0 %v1076
      %1336 = vmatpush.bf16.msra.mxu0 %v1075
      %1337 = vmatpush.bf16.msra.mxu0 %v1074
      %1338 = vmatmul.bf16.gmra.mxu0 %v289
      %v1339 = vpop.f32.mrf.mxu0
      %v1340 = vadd.f32 %v561, %v1339
      %v1341 = vpop.f32.mrf.mxu0
      %1342 = vdwg.mxu0
      %1343 = vmatpush.bf16.msra.mxu0 %v1089
      %1344 = vmatpush.bf16.msra.mxu0 %v1088
      %1345 = vmatpush.bf16.msra.mxu0 %v1087
      %1346 = vmatpush.bf16.msra.mxu0 %v1086
      %1347 = vmatpush.bf16.msra.mxu0 %v1085
      %1348 = vmatpush.bf16.msra.mxu0 %v1084
      %1349 = vmatpush.bf16.msra.mxu0 %v1083
      %1350 = vmatpush.bf16.msra.mxu0 %v1082
      %1351 = vmatmul.bf16.gmra.mxu0 %v290
      %v1352 = vpop.f32.mrf.mxu0
      %v1353 = vadd.f32 %v1340, %v1352
      %v1354 = vpop.f32.mrf.mxu0
      %1355 = vdwg.mxu0
      %1356 = vmatpush.bf16.msra.mxu0 %v1097
      %1357 = vmatpush.bf16.msra.mxu0 %v1096
      %1358 = vmatpush.bf16.msra.mxu0 %v1095
      %1359 = vmatpush.bf16.msra.mxu0 %v1094
      %1360 = vmatpush.bf16.msra.mxu0 %v1093
      %1361 = vmatpush.bf16.msra.mxu0 %v1092
      %1362 = vmatpush.bf16.msra.mxu0 %v1091
      %1363 = vmatpush.bf16.msra.mxu0 %v1090
      %1364 = vmatmul.bf16.gmra.mxu0 %v291
      %v1365 = vpop.f32.mrf.mxu0
      %v1366 = vadd.f32 %v1353, %v1365
      %v1367 = vpop.f32.mrf.mxu0
      %1368 = vdwg.mxu0
      %1369 = vmatpush.bf16.msra.mxu0 %v1105
      %1370 = vmatpush.bf16.msra.mxu0 %v1104
      %1371 = vmatpush.bf16.msra.mxu0 %v1103
      %1372 = vmatpush.bf16.msra.mxu0 %v1102
      %1373 = vmatpush.bf16.msra.mxu0 %v1101
      %1374 = vmatpush.bf16.msra.mxu0 %v1100
      %1375 = vmatpush.bf16.msra.mxu0 %v1099
      %1376 = vmatpush.bf16.msra.mxu0 %v1098
      %1377 = vmatmul.bf16.gmra.mxu0 %v292
      %v1378 = vpop.f32.mrf.mxu0
      %v1379 = vadd.f32 %v1366, %v1378
      %v1380 = vpop.f32.mrf.mxu0
      %1381 = vdwg.mxu0
      %1382 = vmatpush.bf16.msra.mxu0 %v1113
      %1383 = vmatpush.bf16.msra.mxu0 %v1112
      %1384 = vmatpush.bf16.msra.mxu0 %v1111
      %1385 = vmatpush.bf16.msra.mxu0 %v1110
      %1386 = vmatpush.bf16.msra.mxu0 %v1109
      %1387 = vmatpush.bf16.msra.mxu0 %v1108
      %1388 = vmatpush.bf16.msra.mxu0 %v1107
      %1389 = vmatpush.bf16.msra.mxu0 %v1106
      %1390 = vmatmul.bf16.gmra.mxu0 %v293
      %v1391 = vpop.f32.mrf.mxu0
      %v1392 = vadd.f32 %v1379, %v1391
      %v1393 = vpop.f32.mrf.mxu0
      %1394 = vdwg.mxu0
      %1395 = vmatpush.bf16.msra.mxu0 %v1121
      %1396 = vmatpush.bf16.msra.mxu0 %v1120
      %1397 = vmatpush.bf16.msra.mxu0 %v1119
      %1398 = vmatpush.bf16.msra.mxu0 %v1118
      %1399 = vmatpush.bf16.msra.mxu0 %v1117
      %1400 = vmatpush.bf16.msra.mxu0 %v1116
      %1401 = vmatpush.bf16.msra.mxu0 %v1115
      %1402 = vmatpush.bf16.msra.mxu0 %v1114
      %1403 = vmatmul.bf16.gmra.mxu0 %v294
      %v1404 = vpop.f32.mrf.mxu0
      %v1405 = vadd.f32 %v1392, %v1404
      %v1406 = vpop.f32.mrf.mxu0
      %1407 = vdwg.mxu0
      %1408 = vmatpush.bf16.msra.mxu0 %v1129
      %1409 = vmatpush.bf16.msra.mxu0 %v1128
      %1410 = vmatpush.bf16.msra.mxu0 %v1127
      %1411 = vmatpush.bf16.msra.mxu0 %v1126
      %1412 = vmatpush.bf16.msra.mxu0 %v1125
      %1413 = vmatpush.bf16.msra.mxu0 %v1124
      %1414 = vmatpush.bf16.msra.mxu0 %v1123
      %1415 = vmatpush.bf16.msra.mxu0 %v1122
      %1416 = vmatmul.bf16.gmra.mxu0 %v295
      %v1417 = vpop.f32.mrf.mxu0
      %v1418 = vadd.f32 %v1405, %v1417
      %v1419 = vpop.f32.mrf.mxu0
      %1420 = vdwg.mxu0
      %1421 = vmatpush.bf16.msra.mxu0 %v1137
      %1422 = vmatpush.bf16.msra.mxu0 %v1136
      %1423 = vmatpush.bf16.msra.mxu0 %v1135
      %1424 = vmatpush.bf16.msra.mxu0 %v1134
      %1425 = vmatpush.bf16.msra.mxu0 %v1133
      %1426 = vmatpush.bf16.msra.mxu0 %v1132
      %1427 = vmatpush.bf16.msra.mxu0 %v1131
      %1428 = vmatpush.bf16.msra.mxu0 %v1130
      %1429 = vmatmul.bf16.gmra.mxu0 %v296
      %v1430 = vpop.f32.mrf.mxu0
      %v1431 = vadd.f32 %v1418, %v1430
      %v1432 = vpop.f32.mrf.mxu0
      %1433 = vdwg.mxu0
      %1434 = vmatpush.bf16.msra.mxu0 %v1145
      %1435 = vmatpush.bf16.msra.mxu0 %v1144
      %1436 = vmatpush.bf16.msra.mxu0 %v1143
      %1437 = vmatpush.bf16.msra.mxu0 %v1142
      %1438 = vmatpush.bf16.msra.mxu0 %v1141
      %1439 = vmatpush.bf16.msra.mxu0 %v1140
      %1440 = vmatpush.bf16.msra.mxu0 %v1139
      %1441 = vmatpush.bf16.msra.mxu0 %v1138
      %1442 = vmatmul.bf16.gmra.mxu0 %v297
      %v1443 = vpop.f32.mrf.mxu0
      %v1444 = vadd.f32 %v1431, %v1443
      %v1445 = vpop.f32.mrf.mxu0
      %1446 = vdwg.mxu0
      %1447 = vmatpush.bf16.msra.mxu0 %v1153
      %1448 = vmatpush.bf16.msra.mxu0 %v1152
      %1449 = vmatpush.bf16.msra.mxu0 %v1151
      %1450 = vmatpush.bf16.msra.mxu0 %v1150
      %1451 = vmatpush.bf16.msra.mxu0 %v1149
      %1452 = vmatpush.bf16.msra.mxu0 %v1148
      %1453 = vmatpush.bf16.msra.mxu0 %v1147
      %1454 = vmatpush.bf16.msra.mxu0 %v1146
      %1455 = vmatmul.bf16.gmra.mxu0 %v298
      %v1456 = vpop.f32.mrf.mxu0
      %v1457 = vadd.f32 %v1444, %v1456
      %v1458 = vpop.f32.mrf.mxu0
      %1459 = vdwg.mxu0
      %1460 = vmatpush.bf16.msra.mxu0 %v1161
      %1461 = vmatpush.bf16.msra.mxu0 %v1160
      %1462 = vmatpush.bf16.msra.mxu0 %v1159
      %1463 = vmatpush.bf16.msra.mxu0 %v1158
      %1464 = vmatpush.bf16.msra.mxu0 %v1157
      %1465 = vmatpush.bf16.msra.mxu0 %v1156
      %1466 = vmatpush.bf16.msra.mxu0 %v1155
      %1467 = vmatpush.bf16.msra.mxu0 %v1154
      %1468 = vmatmul.bf16.gmra.mxu0 %v299
      %v1469 = vpop.f32.mrf.mxu0
      %v1470 = vadd.f32 %v1457, %v1469
      %v1471 = vpop.f32.mrf.mxu0
      %1472 = vdwg.mxu0
      %1473 = vmatpush.bf16.msra.mxu0 %v1169
      %1474 = vmatpush.bf16.msra.mxu0 %v1168
      %1475 = vmatpush.bf16.msra.mxu0 %v1167
      %1476 = vmatpush.bf16.msra.mxu0 %v1166
      %1477 = vmatpush.bf16.msra.mxu0 %v1165
      %1478 = vmatpush.bf16.msra.mxu0 %v1164
      %1479 = vmatpush.bf16.msra.mxu0 %v1163
      %1480 = vmatpush.bf16.msra.mxu0 %v1162
      %1481 = vmatmul.bf16.gmra.mxu0 %v300
      %v1482 = vpop.f32.mrf.mxu0
      %v1483 = vadd.f32 %v1470, %v1482
      %v1484 = vpop.f32.mrf.mxu0
      %1485 = vdwg.mxu0
      %1486 = vmatpush.bf16.msra.mxu0 %v1177
      %1487 = vmatpush.bf16.msra.mxu0 %v1176
      %1488 = vmatpush.bf16.msra.mxu0 %v1175
      %1489 = vmatpush.bf16.msra.mxu0 %v1174
      %1490 = vmatpush.bf16.msra.mxu0 %v1173
      %1491 = vmatpush.bf16.msra.mxu0 %v1172
      %1492 = vmatpush.bf16.msra.mxu0 %v1171
      %1493 = vmatpush.bf16.msra.mxu0 %v1170
      %1494 = vmatmul.bf16.gmra.mxu0 %v301
      %v1495 = vpop.f32.mrf.mxu0
      %v1496 = vadd.f32 %v1483, %v1495
      %v1497 = vpop.f32.mrf.mxu0
      %1498 = vdwg.mxu0
      %1499 = vmatpush.bf16.msra.mxu0 %v1185
      %1500 = vmatpush.bf16.msra.mxu0 %v1184
      %1501 = vmatpush.bf16.msra.mxu0 %v1183
      %1502 = vmatpush.bf16.msra.mxu0 %v1182
      %1503 = vmatpush.bf16.msra.mxu0 %v1181
      %1504 = vmatpush.bf16.msra.mxu0 %v1180
      %1505 = vmatpush.bf16.msra.mxu0 %v1179
      %1506 = vmatpush.bf16.msra.mxu0 %v1178
      %1507 = vmatmul.bf16.gmra.mxu0 %v302
      %v1508 = vpop.f32.mrf.mxu0
      %v1509 = vadd.f32 %v1496, %v1508
      %v1510 = vpop.f32.mrf.mxu0
      %1511 = vdwg.mxu0
      %1512 = vmatpush.bf16.msra.mxu0 %v1193
      %1513 = vmatpush.bf16.msra.mxu0 %v1192
      %1514 = vmatpush.bf16.msra.mxu0 %v1191
      %1515 = vmatpush.bf16.msra.mxu0 %v1190
      %1516 = vmatpush.bf16.msra.mxu0 %v1189
      %1517 = vmatpush.bf16.msra.mxu0 %v1188
      %1518 = vmatpush.bf16.msra.mxu0 %v1187
      %1519 = vmatpush.bf16.msra.mxu0 %v1186
      %1520 = vmatmul.bf16.gmra.mxu0 %v303
      %v1521 = vpop.f32.mrf.mxu0
      %v1522 = vadd.f32 %v1509, %v1521
      %v1523 = vpop.f32.mrf.mxu0
      %1524 = vdwg.mxu0
      %1525 = vmatpush.bf16.msra.mxu0 %v1201
      %1526 = vmatpush.bf16.msra.mxu0 %v1200
      %1527 = vmatpush.bf16.msra.mxu0 %v1199
      %1528 = vmatpush.bf16.msra.mxu0 %v1198
      %1529 = vmatpush.bf16.msra.mxu0 %v1197
      %1530 = vmatpush.bf16.msra.mxu0 %v1196
      %1531 = vmatpush.bf16.msra.mxu0 %v1195
      %1532 = vmatpush.bf16.msra.mxu0 %v1194
      %1533 = vmatmul.bf16.gmra.mxu0 %v304
      %v1534 = vpop.f32.mrf.mxu0
      %v1535 = vadd.f32 %v1522, %v1534
      %v1536 = vpop.f32.mrf.mxu0
      %1537 = vdwg.mxu0
      %v1538 = vpack.c.bf16 %v1535, %v1535
      %v1539 = vld [vmem:[%s3] sm:$0xff]
      %v1540 = vld [vmem:[%s3 + $0x8] sm:$0xff]
      %v1541 = vld [vmem:[%s3 + $0x10] sm:$0xff]
      %v1542 = vld [vmem:[%s3 + $0x18] sm:$0xff]
      %v1543 = vld [vmem:[%s3 + $0x20] sm:$0xff]
      %v1544 = vld [vmem:[%s3 + $0x28] sm:$0xff]
      %v1545 = vld [vmem:[%s3 + $0x30] sm:$0xff]
      %v1546 = vld [vmem:[%s3 + $0x38] sm:$0xff]
      %v1547 = vld [vmem:[%s3 + $0x40] sm:$0xff]
      %v1548 = vld [vmem:[%s3 + $0x48] sm:$0xff]
      %v1549 = vld [vmem:[%s3 + $0x50] sm:$0xff]
      %v1550 = vld [vmem:[%s3 + $0x58] sm:$0xff]
      %v1551 = vld [vmem:[%s3 + $0x60] sm:$0xff]
      %v1552 = vld [vmem:[%s3 + $0x68] sm:$0xff]
      %v1553 = vld [vmem:[%s3 + $0x70] sm:$0xff]
      %v1554 = vld [vmem:[%s3 + $0x78] sm:$0xff]
      %v1571 = vunpack.c.l.b16 %v1539
      %v1572 = vunpack.c.h.b16 %v1539
      %v1573 = vunpack.c.l.b16 %v1540
      %v1574 = vunpack.c.h.b16 %v1540
      %v1575 = vunpack.c.l.b16 %v1541
      %v1576 = vunpack.c.h.b16 %v1541
      %v1577 = vunpack.c.l.b16 %v1542
      %v1578 = vunpack.c.h.b16 %v1542
      %v1579 = vunpack.c.l.b16 %v1543
      %v1580 = vunpack.c.h.b16 %v1543
      %v1581 = vunpack.c.l.b16 %v1544
      %v1582 = vunpack.c.h.b16 %v1544
      %v1583 = vunpack.c.l.b16 %v1545
      %v1584 = vunpack.c.h.b16 %v1545
      %v1585 = vunpack.c.l.b16 %v1546
      %v1586 = vunpack.c.h.b16 %v1546
      %v1587 = vunpack.c.l.b16 %v1547
      %v1588 = vunpack.c.h.b16 %v1547
      %v1589 = vunpack.c.l.b16 %v1548
      %v1590 = vunpack.c.h.b16 %v1548
      %v1591 = vunpack.c.l.b16 %v1549
      %v1592 = vunpack.c.h.b16 %v1549
      %v1593 = vunpack.c.l.b16 %v1550
      %v1594 = vunpack.c.h.b16 %v1550
      %v1595 = vunpack.c.l.b16 %v1551
      %v1596 = vunpack.c.h.b16 %v1551
      %v1597 = vunpack.c.l.b16 %v1552
      %v1598 = vunpack.c.h.b16 %v1552
      %v1599 = vunpack.c.l.b16 %v1553
      %v1600 = vunpack.c.h.b16 %v1553
      %v1601 = vunpack.c.l.b16 %v1554
      %v1602 = vunpack.c.h.b16 %v1554
      %v1603 = vpack.c.b16 %v1579, %v1571
      %v1604 = vpack.c.b16 %v1580, %v1572
      %v1605 = vpack.c.b16 %v1581, %v1573
      %v1606 = vpack.c.b16 %v1582, %v1574
      %v1607 = vpack.c.b16 %v1583, %v1575
      %v1608 = vpack.c.b16 %v1584, %v1576
      %v1609 = vpack.c.b16 %v1585, %v1577
      %v1610 = vpack.c.b16 %v1586, %v1578
      %v1611 = vpack.c.b16 %v1595, %v1587
      %v1612 = vpack.c.b16 %v1596, %v1588
      %v1613 = vpack.c.b16 %v1597, %v1589
      %v1614 = vpack.c.b16 %v1598, %v1590
      %v1615 = vpack.c.b16 %v1599, %v1591
      %v1616 = vpack.c.b16 %v1600, %v1592
      %v1617 = vpack.c.b16 %v1601, %v1593
      %v1618 = vpack.c.b16 %v1602, %v1594
      %vm1635 = vcmask 261120
      %v1637 = vsel %vm1635, %v1538, 0
      %1639 = vmatpush.bf16.msra.mxu0 0
      %1640 = vmatpush.bf16.msra.mxu0 0
      %1641 = vmatpush.bf16.msra.mxu0 0
      %1642 = vmatpush.bf16.msra.mxu0 0
      %1643 = vmatpush.bf16.msra.mxu0 0
      %1644 = vmatpush.bf16.msra.mxu0 0
      %1645 = vmatpush.bf16.msra.mxu0 %v1611
      %1646 = vmatpush.bf16.msra.mxu0 %v1603
      %1647 = vmatmul.bf16.gmra.mxu0 %v1637
      %v1648 = vpop.f32.mrf.mxu0
      %v1649 = vadd.f32 0.0, %v1648
      %v1650 = vpop.f32.mrf.mxu0
      %1651 = vdwg.mxu0
      %1652 = vmatpush.bf16.msra.mxu0 0
      %1653 = vmatpush.bf16.msra.mxu0 0
      %1654 = vmatpush.bf16.msra.mxu0 0
      %1655 = vmatpush.bf16.msra.mxu0 0
      %1656 = vmatpush.bf16.msra.mxu0 0
      %1657 = vmatpush.bf16.msra.mxu0 0
      %1658 = vmatpush.bf16.msra.mxu0 %v1612
      %1659 = vmatpush.bf16.msra.mxu0 %v1604
      %1660 = vmatmul.bf16.gmra.mxu0 %v1637
      %v1661 = vpop.f32.mrf.mxu0
      %v1662 = vadd.f32 0.0, %v1661
      %v1663 = vpop.f32.mrf.mxu0
      %1664 = vdwg.mxu0
      %1665 = vmatpush.bf16.msra.mxu0 0
      %1666 = vmatpush.bf16.msra.mxu0 0
      %1667 = vmatpush.bf16.msra.mxu0 0
      %1668 = vmatpush.bf16.msra.mxu0 0
      %1669 = vmatpush.bf16.msra.mxu0 0
      %1670 = vmatpush.bf16.msra.mxu0 0
      %1671 = vmatpush.bf16.msra.mxu0 %v1613
      %1672 = vmatpush.bf16.msra.mxu0 %v1605
      %1673 = vmatmul.bf16.gmra.mxu0 %v1637
      %v1674 = vpop.f32.mrf.mxu0
      %v1675 = vadd.f32 0.0, %v1674
      %v1676 = vpop.f32.mrf.mxu0
      %1677 = vdwg.mxu0
      %1678 = vmatpush.bf16.msra.mxu0 0
      %1679 = vmatpush.bf16.msra.mxu0 0
      %1680 = vmatpush.bf16.msra.mxu0 0
      %1681 = vmatpush.bf16.msra.mxu0 0
      %1682 = vmatpush.bf16.msra.mxu0 0
      %1683 = vmatpush.bf16.msra.mxu0 0
      %1684 = vmatpush.bf16.msra.mxu0 %v1614
      %1685 = vmatpush.bf16.msra.mxu0 %v1606
      %1686 = vmatmul.bf16.gmra.mxu0 %v1637
      %v1687 = vpop.f32.mrf.mxu0
      %v1688 = vadd.f32 0.0, %v1687
      %v1689 = vpop.f32.mrf.mxu0
      %1690 = vdwg.mxu0
      %1691 = vmatpush.bf16.msra.mxu0 0
      %1692 = vmatpush.bf16.msra.mxu0 0
      %1693 = vmatpush.bf16.msra.mxu0 0
      %1694 = vmatpush.bf16.msra.mxu0 0
      %1695 = vmatpush.bf16.msra.mxu0 0
      %1696 = vmatpush.bf16.msra.mxu0 0
      %1697 = vmatpush.bf16.msra.mxu0 %v1615
      %1698 = vmatpush.bf16.msra.mxu0 %v1607
      %1699 = vmatmul.bf16.gmra.mxu0 %v1637
      %v1700 = vpop.f32.mrf.mxu0
      %v1701 = vadd.f32 0.0, %v1700
      %v1702 = vpop.f32.mrf.mxu0
      %1703 = vdwg.mxu0
      %1704 = vmatpush.bf16.msra.mxu0 0
      %1705 = vmatpush.bf16.msra.mxu0 0
      %1706 = vmatpush.bf16.msra.mxu0 0
      %1707 = vmatpush.bf16.msra.mxu0 0
      %1708 = vmatpush.bf16.msra.mxu0 0
      %1709 = vmatpush.bf16.msra.mxu0 0
      %1710 = vmatpush.bf16.msra.mxu0 %v1616
      %1711 = vmatpush.bf16.msra.mxu0 %v1608
      %1712 = vmatmul.bf16.gmra.mxu0 %v1637
      %v1713 = vpop.f32.mrf.mxu0
      %v1714 = vadd.f32 0.0, %v1713
      %v1715 = vpop.f32.mrf.mxu0
      %1716 = vdwg.mxu0
      %1717 = vmatpush.bf16.msra.mxu0 0
      %1718 = vmatpush.bf16.msra.mxu0 0
      %1719 = vmatpush.bf16.msra.mxu0 0
      %1720 = vmatpush.bf16.msra.mxu0 0
      %1721 = vmatpush.bf16.msra.mxu0 0
      %1722 = vmatpush.bf16.msra.mxu0 0
      %1723 = vmatpush.bf16.msra.mxu0 %v1617
      %1724 = vmatpush.bf16.msra.mxu0 %v1609
      %1725 = vmatmul.bf16.gmra.mxu0 %v1637
      %v1726 = vpop.f32.mrf.mxu0
      %v1727 = vadd.f32 0.0, %v1726
      %v1728 = vpop.f32.mrf.mxu0
      %1729 = vdwg.mxu0
      %1730 = vmatpush.bf16.msra.mxu0 0
      %1731 = vmatpush.bf16.msra.mxu0 0
      %1732 = vmatpush.bf16.msra.mxu0 0
      %1733 = vmatpush.bf16.msra.mxu0 0
      %1734 = vmatpush.bf16.msra.mxu0 0
      %1735 = vmatpush.bf16.msra.mxu0 0
      %1736 = vmatpush.bf16.msra.mxu0 %v1618
      %1737 = vmatpush.bf16.msra.mxu0 %v1610
      %1738 = vmatmul.bf16.gmra.mxu0 %v1637
      %v1739 = vpop.f32.mrf.mxu0
      %v1740 = vadd.f32 0.0, %v1739
      %v1741 = vpop.f32.mrf.mxu0
      %1742 = vdwg.mxu0
      %v1743 = vld [vmem:[%s265] sm:$0xff]
      %v1744 = vld [vmem:[%s265 + $0x8] sm:$0xff]
      %v1745 = vld [vmem:[%s265 + $0x10] sm:$0xff]
      %v1746 = vld [vmem:[%s265 + $0x18] sm:$0xff]
      %v1747 = vunpack.c.l.bf16 %v1743
      %v1748 = vunpack.c.h.bf16 %v1743
      %v1749 = vunpack.c.l.bf16 %v1744
      %v1750 = vunpack.c.h.bf16 %v1744
      %v1751 = vunpack.c.l.bf16 %v1745
      %v1752 = vunpack.c.h.bf16 %v1745
      %v1753 = vunpack.c.l.bf16 %v1746
      %v1754 = vunpack.c.h.bf16 %v1746
      %v1755 = vmul.f32 %v1649, %v1747
      %v1756 = vmul.f32 %v1662, %v1748
      %v1757 = vmul.f32 %v1675, %v1749
      %v1758 = vmul.f32 %v1688, %v1750
      %v1759 = vmul.f32 %v1701, %v1751
      %v1760 = vmul.f32 %v1714, %v1752
      %v1761 = vmul.f32 %v1727, %v1753
      %v1762 = vmul.f32 %v1740, %v1754
      %v1763 = vpack.c.bf16 %v1755, %v1755
      %v1764 = vpack.c.bf16 %v1756, %v1756
      %v1765 = vpack.c.bf16 %v1757, %v1757
      %v1766 = vpack.c.bf16 %v1758, %v1758
      %v1767 = vpack.c.bf16 %v1759, %v1759
      %v1768 = vpack.c.bf16 %v1760, %v1760
      %v1769 = vpack.c.bf16 %v1761, %v1761
      %v1770 = vpack.c.bf16 %v1762, %v1762
      %v1771 = vld [vmem:[%s4] sm:$0xf]
      %v1772 = vld [vmem:[%s4 + $0x4] sm:$0xf]
      %v1773 = vld [vmem:[%s4 + $0x8] sm:$0xf]
      %v1774 = vld [vmem:[%s4 + $0xc] sm:$0xf]
      %v1775 = vld [vmem:[%s4 + $0x10] sm:$0xf]
      %v1776 = vld [vmem:[%s4 + $0x14] sm:$0xf]
      %v1777 = vld [vmem:[%s4 + $0x18] sm:$0xf]
      %v1778 = vld [vmem:[%s4 + $0x1c] sm:$0xf]
      %v1779 = vld [vmem:[%s4 + $0x20] sm:$0xf]
      %v1780 = vld [vmem:[%s4 + $0x24] sm:$0xf]
      %v1781 = vld [vmem:[%s4 + $0x28] sm:$0xf]
      %v1782 = vld [vmem:[%s4 + $0x2c] sm:$0xf]
      %v1783 = vld [vmem:[%s4 + $0x30] sm:$0xf]
      %v1784 = vld [vmem:[%s4 + $0x34] sm:$0xf]
      %v1785 = vld [vmem:[%s4 + $0x38] sm:$0xf]
      %v1786 = vld [vmem:[%s4 + $0x3c] sm:$0xf]
      %v1787 = vld [vmem:[%s4 + $0x40] sm:$0xf]
      %v1788 = vld [vmem:[%s4 + $0x44] sm:$0xf]
      %v1789 = vld [vmem:[%s4 + $0x48] sm:$0xf]
      %v1790 = vld [vmem:[%s4 + $0x4c] sm:$0xf]
      %v1791 = vld [vmem:[%s4 + $0x50] sm:$0xf]
      %v1792 = vld [vmem:[%s4 + $0x54] sm:$0xf]
      %v1793 = vld [vmem:[%s4 + $0x58] sm:$0xf]
      %v1794 = vld [vmem:[%s4 + $0x5c] sm:$0xf]
      %v1795 = vld [vmem:[%s4 + $0x60] sm:$0xf]
      %v1796 = vld [vmem:[%s4 + $0x64] sm:$0xf]
      %v1797 = vld [vmem:[%s4 + $0x68] sm:$0xf]
      %v1798 = vld [vmem:[%s4 + $0x6c] sm:$0xf]
      %v1799 = vld [vmem:[%s4 + $0x70] sm:$0xf]
      %v1800 = vld [vmem:[%s4 + $0x74] sm:$0xf]
      %v1801 = vld [vmem:[%s4 + $0x78] sm:$0xf]
      %v1802 = vld [vmem:[%s4 + $0x7c] sm:$0xf]
      %v1803 = vld [vmem:[%s4 + $0x80] sm:$0xf]
      %v1804 = vld [vmem:[%s4 + $0x84] sm:$0xf]
      %v1805 = vld [vmem:[%s4 + $0x88] sm:$0xf]
      %v1806 = vld [vmem:[%s4 + $0x8c] sm:$0xf]
      %v1807 = vld [vmem:[%s4 + $0x90] sm:$0xf]
      %v1808 = vld [vmem:[%s4 + $0x94] sm:$0xf]
      %v1809 = vld [vmem:[%s4 + $0x98] sm:$0xf]
      %v1810 = vld [vmem:[%s4 + $0x9c] sm:$0xf]
      %v1811 = vld [vmem:[%s4 + $0xa0] sm:$0xf]
      %v1812 = vld [vmem:[%s4 + $0xa4] sm:$0xf]
      %v1813 = vld [vmem:[%s4 + $0xa8] sm:$0xf]
      %v1814 = vld [vmem:[%s4 + $0xac] sm:$0xf]
      %v1815 = vld [vmem:[%s4 + $0xb0] sm:$0xf]
      %v1816 = vld [vmem:[%s4 + $0xb4] sm:$0xf]
      %v1817 = vld [vmem:[%s4 + $0xb8] sm:$0xf]
      %v1818 = vld [vmem:[%s4 + $0xbc] sm:$0xf]
      %v1819 = vld [vmem:[%s4 + $0xc0] sm:$0xf]
      %v1820 = vld [vmem:[%s4 + $0xc4] sm:$0xf]
      %v1821 = vld [vmem:[%s4 + $0xc8] sm:$0xf]
      %v1822 = vld [vmem:[%s4 + $0xcc] sm:$0xf]
      %v1823 = vld [vmem:[%s4 + $0xd0] sm:$0xf]
      %v1824 = vld [vmem:[%s4 + $0xd4] sm:$0xf]
      %v1825 = vld [vmem:[%s4 + $0xd8] sm:$0xf]
      %v1826 = vld [vmem:[%s4 + $0xdc] sm:$0xf]
      %v1827 = vld [vmem:[%s4 + $0xe0] sm:$0xf]
      %v1828 = vld [vmem:[%s4 + $0xe4] sm:$0xf]
      %v1829 = vld [vmem:[%s4 + $0xe8] sm:$0xf]
      %v1830 = vld [vmem:[%s4 + $0xec] sm:$0xf]
      %v1831 = vld [vmem:[%s4 + $0xf0] sm:$0xf]
      %v1832 = vld [vmem:[%s4 + $0xf4] sm:$0xf]
      %v1833 = vld [vmem:[%s4 + $0xf8] sm:$0xf]
      %v1834 = vld [vmem:[%s4 + $0xfc] sm:$0xf]
      %v1835 = vld [vmem:[%s4 + $0x100] sm:$0xf]
      %v1836 = vld [vmem:[%s4 + $0x104] sm:$0xf]
      %v1837 = vld [vmem:[%s4 + $0x108] sm:$0xf]
      %v1838 = vld [vmem:[%s4 + $0x10c] sm:$0xf]
      %v1839 = vld [vmem:[%s4 + $0x110] sm:$0xf]
      %v1840 = vld [vmem:[%s4 + $0x114] sm:$0xf]
      %v1841 = vld [vmem:[%s4 + $0x118] sm:$0xf]
      %v1842 = vld [vmem:[%s4 + $0x11c] sm:$0xf]
      %v1843 = vld [vmem:[%s4 + $0x120] sm:$0xf]
      %v1844 = vld [vmem:[%s4 + $0x124] sm:$0xf]
      %v1845 = vld [vmem:[%s4 + $0x128] sm:$0xf]
      %v1846 = vld [vmem:[%s4 + $0x12c] sm:$0xf]
      %v1847 = vld [vmem:[%s4 + $0x130] sm:$0xf]
      %v1848 = vld [vmem:[%s4 + $0x134] sm:$0xf]
      %v1849 = vld [vmem:[%s4 + $0x138] sm:$0xf]
      %v1850 = vld [vmem:[%s4 + $0x13c] sm:$0xf]
      %v1851 = vld [vmem:[%s4 + $0x140] sm:$0xf]
      %v1852 = vld [vmem:[%s4 + $0x144] sm:$0xf]
      %v1853 = vld [vmem:[%s4 + $0x148] sm:$0xf]
      %v1854 = vld [vmem:[%s4 + $0x14c] sm:$0xf]
      %v1855 = vld [vmem:[%s4 + $0x150] sm:$0xf]
      %v1856 = vld [vmem:[%s4 + $0x154] sm:$0xf]
      %v1857 = vld [vmem:[%s4 + $0x158] sm:$0xf]
      %v1858 = vld [vmem:[%s4 + $0x15c] sm:$0xf]
      %v1859 = vld [vmem:[%s4 + $0x160] sm:$0xf]
      %v1860 = vld [vmem:[%s4 + $0x164] sm:$0xf]
      %v1861 = vld [vmem:[%s4 + $0x168] sm:$0xf]
      %v1862 = vld [vmem:[%s4 + $0x16c] sm:$0xf]
      %v1863 = vld [vmem:[%s4 + $0x170] sm:$0xf]
      %v1864 = vld [vmem:[%s4 + $0x174] sm:$0xf]
      %v1865 = vld [vmem:[%s4 + $0x178] sm:$0xf]
      %v1866 = vld [vmem:[%s4 + $0x17c] sm:$0xf]
      %v1867 = vld [vmem:[%s4 + $0x180] sm:$0xf]
      %v1868 = vld [vmem:[%s4 + $0x184] sm:$0xf]
      %v1869 = vld [vmem:[%s4 + $0x188] sm:$0xf]
      %v1870 = vld [vmem:[%s4 + $0x18c] sm:$0xf]
      %v1871 = vld [vmem:[%s4 + $0x190] sm:$0xf]
      %v1872 = vld [vmem:[%s4 + $0x194] sm:$0xf]
      %v1873 = vld [vmem:[%s4 + $0x198] sm:$0xf]
      %v1874 = vld [vmem:[%s4 + $0x19c] sm:$0xf]
      %v1875 = vld [vmem:[%s4 + $0x1a0] sm:$0xf]
      %v1876 = vld [vmem:[%s4 + $0x1a4] sm:$0xf]
      %v1877 = vld [vmem:[%s4 + $0x1a8] sm:$0xf]
      %v1878 = vld [vmem:[%s4 + $0x1ac] sm:$0xf]
      %v1879 = vld [vmem:[%s4 + $0x1b0] sm:$0xf]
      %v1880 = vld [vmem:[%s4 + $0x1b4] sm:$0xf]
      %v1881 = vld [vmem:[%s4 + $0x1b8] sm:$0xf]
      %v1882 = vld [vmem:[%s4 + $0x1bc] sm:$0xf]
      %v1883 = vld [vmem:[%s4 + $0x1c0] sm:$0xf]
      %v1884 = vld [vmem:[%s4 + $0x1c4] sm:$0xf]
      %v1885 = vld [vmem:[%s4 + $0x1c8] sm:$0xf]
      %v1886 = vld [vmem:[%s4 + $0x1cc] sm:$0xf]
      %v1887 = vld [vmem:[%s4 + $0x1d0] sm:$0xf]
      %v1888 = vld [vmem:[%s4 + $0x1d4] sm:$0xf]
      %v1889 = vld [vmem:[%s4 + $0x1d8] sm:$0xf]
      %v1890 = vld [vmem:[%s4 + $0x1dc] sm:$0xf]
      %v1891 = vld [vmem:[%s4 + $0x1e0] sm:$0xf]
      %v1892 = vld [vmem:[%s4 + $0x1e4] sm:$0xf]
      %v1893 = vld [vmem:[%s4 + $0x1e8] sm:$0xf]
      %v1894 = vld [vmem:[%s4 + $0x1ec] sm:$0xf]
      %v1895 = vld [vmem:[%s4 + $0x1f0] sm:$0xf]
      %v1896 = vld [vmem:[%s4 + $0x1f4] sm:$0xf]
      %v1897 = vld [vmem:[%s4 + $0x1f8] sm:$0xf]
      %v1898 = vld [vmem:[%s4 + $0x1fc] sm:$0xf]
      %v1899 = vperm.slane %v272, 0
      %v2028 = vunpack.c.l.b16 %v1771
      %v2029 = vunpack.c.l.b16 %v1772
      %v2030 = vunpack.c.l.b16 %v1773
      %v2031 = vunpack.c.l.b16 %v1774
      %v2032 = vunpack.c.l.b16 %v1775
      %v2033 = vunpack.c.l.b16 %v1776
      %v2034 = vunpack.c.l.b16 %v1777
      %v2035 = vunpack.c.l.b16 %v1778
      %v2036 = vunpack.c.l.b16 %v1779
      %v2037 = vunpack.c.l.b16 %v1780
      %v2038 = vunpack.c.l.b16 %v1781
      %v2039 = vunpack.c.l.b16 %v1782
      %v2040 = vunpack.c.l.b16 %v1783
      %v2041 = vunpack.c.l.b16 %v1784
      %v2042 = vunpack.c.l.b16 %v1785
      %v2043 = vunpack.c.l.b16 %v1786
      %v2044 = vunpack.c.l.b16 %v1787
      %v2045 = vunpack.c.l.b16 %v1788
      %v2046 = vunpack.c.l.b16 %v1789
      %v2047 = vunpack.c.l.b16 %v1790
      %v2048 = vunpack.c.l.b16 %v1791
      %v2049 = vunpack.c.l.b16 %v1792
      %v2050 = vunpack.c.l.b16 %v1793
      %v2051 = vunpack.c.l.b16 %v1794
      %v2052 = vunpack.c.l.b16 %v1795
      %v2053 = vunpack.c.l.b16 %v1796
      %v2054 = vunpack.c.l.b16 %v1797
      %v2055 = vunpack.c.l.b16 %v1798
      %v2056 = vunpack.c.l.b16 %v1799
      %v2057 = vunpack.c.l.b16 %v1800
      %v2058 = vunpack.c.l.b16 %v1801
      %v2059 = vunpack.c.l.b16 %v1802
      %v2060 = vunpack.c.l.b16 %v1803
      %v2061 = vunpack.c.l.b16 %v1804
      %v2062 = vunpack.c.l.b16 %v1805
      %v2063 = vunpack.c.l.b16 %v1806
      %v2064 = vunpack.c.l.b16 %v1807
      %v2065 = vunpack.c.l.b16 %v1808
      %v2066 = vunpack.c.l.b16 %v1809
      %v2067 = vunpack.c.l.b16 %v1810
      %v2068 = vunpack.c.l.b16 %v1811
      %v2069 = vunpack.c.l.b16 %v1812
      %v2070 = vunpack.c.l.b16 %v1813
      %v2071 = vunpack.c.l.b16 %v1814
      %v2072 = vunpack.c.l.b16 %v1815
      %v2073 = vunpack.c.l.b16 %v1816
      %v2074 = vunpack.c.l.b16 %v1817
      %v2075 = vunpack.c.l.b16 %v1818
      %v2076 = vunpack.c.l.b16 %v1819
      %v2077 = vunpack.c.l.b16 %v1820
      %v2078 = vunpack.c.l.b16 %v1821
      %v2079 = vunpack.c.l.b16 %v1822
      %v2080 = vunpack.c.l.b16 %v1823
      %v2081 = vunpack.c.l.b16 %v1824
      %v2082 = vunpack.c.l.b16 %v1825
      %v2083 = vunpack.c.l.b16 %v1826
      %v2084 = vunpack.c.l.b16 %v1827
      %v2085 = vunpack.c.l.b16 %v1828
      %v2086 = vunpack.c.l.b16 %v1829
      %v2087 = vunpack.c.l.b16 %v1830
      %v2088 = vunpack.c.l.b16 %v1831
      %v2089 = vunpack.c.l.b16 %v1832
      %v2090 = vunpack.c.l.b16 %v1833
      %v2091 = vunpack.c.l.b16 %v1834
      %v2092 = vunpack.c.l.b16 %v1835
      %v2093 = vunpack.c.l.b16 %v1836
      %v2094 = vunpack.c.l.b16 %v1837
      %v2095 = vunpack.c.l.b16 %v1838
      %v2096 = vunpack.c.l.b16 %v1839
      %v2097 = vunpack.c.l.b16 %v1840
      %v2098 = vunpack.c.l.b16 %v1841
      %v2099 = vunpack.c.l.b16 %v1842
      %v2100 = vunpack.c.l.b16 %v1843
      %v2101 = vunpack.c.l.b16 %v1844
      %v2102 = vunpack.c.l.b16 %v1845
      %v2103 = vunpack.c.l.b16 %v1846
      %v2104 = vunpack.c.l.b16 %v1847
      %v2105 = vunpack.c.l.b16 %v1848
      %v2106 = vunpack.c.l.b16 %v1849
      %v2107 = vunpack.c.l.b16 %v1850
      %v2108 = vunpack.c.l.b16 %v1851
      %v2109 = vunpack.c.l.b16 %v1852
      %v2110 = vunpack.c.l.b16 %v1853
      %v2111 = vunpack.c.l.b16 %v1854
      %v2112 = vunpack.c.l.b16 %v1855
      %v2113 = vunpack.c.l.b16 %v1856
      %v2114 = vunpack.c.l.b16 %v1857
      %v2115 = vunpack.c.l.b16 %v1858
      %v2116 = vunpack.c.l.b16 %v1859
      %v2117 = vunpack.c.l.b16 %v1860
      %v2118 = vunpack.c.l.b16 %v1861
      %v2119 = vunpack.c.l.b16 %v1862
      %v2120 = vunpack.c.l.b16 %v1863
      %v2121 = vunpack.c.l.b16 %v1864
      %v2122 = vunpack.c.l.b16 %v1865
      %v2123 = vunpack.c.l.b16 %v1866
      %v2124 = vunpack.c.l.b16 %v1867
      %v2125 = vunpack.c.l.b16 %v1868
      %v2126 = vunpack.c.l.b16 %v1869
      %v2127 = vunpack.c.l.b16 %v1870
      %v2128 = vunpack.c.l.b16 %v1871
      %v2129 = vunpack.c.l.b16 %v1872
      %v2130 = vunpack.c.l.b16 %v1873
      %v2131 = vunpack.c.l.b16 %v1874
      %v2132 = vunpack.c.l.b16 %v1875
      %v2133 = vunpack.c.l.b16 %v1876
      %v2134 = vunpack.c.l.b16 %v1877
      %v2135 = vunpack.c.l.b16 %v1878
      %v2136 = vunpack.c.l.b16 %v1879
      %v2137 = vunpack.c.l.b16 %v1880
      %v2138 = vunpack.c.l.b16 %v1881
      %v2139 = vunpack.c.l.b16 %v1882
      %v2140 = vunpack.c.l.b16 %v1883
      %v2141 = vunpack.c.l.b16 %v1884
      %v2142 = vunpack.c.l.b16 %v1885
      %v2143 = vunpack.c.l.b16 %v1886
      %v2144 = vunpack.c.l.b16 %v1887
      %v2145 = vunpack.c.l.b16 %v1888
      %v2146 = vunpack.c.l.b16 %v1889
      %v2147 = vunpack.c.l.b16 %v1890
      %v2148 = vunpack.c.l.b16 %v1891
      %v2149 = vunpack.c.l.b16 %v1892
      %v2150 = vunpack.c.l.b16 %v1893
      %v2151 = vunpack.c.l.b16 %v1894
      %v2152 = vunpack.c.l.b16 %v1895
      %v2153 = vunpack.c.l.b16 %v1896
      %v2154 = vunpack.c.l.b16 %v1897
      %v2155 = vunpack.c.l.b16 %v1898
      %v2156 = vpack.c.b16 %v2029, %v2028
      %v2157 = vpack.c.b16 %v2031, %v2030
      %v2158 = vpack.c.b16 %v2033, %v2032
      %v2159 = vpack.c.b16 %v2035, %v2034
      %v2160 = vpack.c.b16 %v2037, %v2036
      %v2161 = vpack.c.b16 %v2039, %v2038
      %v2162 = vpack.c.b16 %v2041, %v2040
      %v2163 = vpack.c.b16 %v2043, %v2042
      %v2164 = vpack.c.b16 %v2045, %v2044
      %v2165 = vpack.c.b16 %v2047, %v2046
      %v2166 = vpack.c.b16 %v2049, %v2048
      %v2167 = vpack.c.b16 %v2051, %v2050
      %v2168 = vpack.c.b16 %v2053, %v2052
      %v2169 = vpack.c.b16 %v2055, %v2054
      %v2170 = vpack.c.b16 %v2057, %v2056
      %v2171 = vpack.c.b16 %v2059, %v2058
      %v2172 = vpack.c.b16 %v2061, %v2060
      %v2173 = vpack.c.b16 %v2063, %v2062
      %v2174 = vpack.c.b16 %v2065, %v2064
      %v2175 = vpack.c.b16 %v2067, %v2066
      %v2176 = vpack.c.b16 %v2069, %v2068
      %v2177 = vpack.c.b16 %v2071, %v2070
      %v2178 = vpack.c.b16 %v2073, %v2072
      %v2179 = vpack.c.b16 %v2075, %v2074
      %v2180 = vpack.c.b16 %v2077, %v2076
      %v2181 = vpack.c.b16 %v2079, %v2078
      %v2182 = vpack.c.b16 %v2081, %v2080
      %v2183 = vpack.c.b16 %v2083, %v2082
      %v2184 = vpack.c.b16 %v2085, %v2084
      %v2185 = vpack.c.b16 %v2087, %v2086
      %v2186 = vpack.c.b16 %v2089, %v2088
      %v2187 = vpack.c.b16 %v2091, %v2090
      %v2188 = vpack.c.b16 %v2093, %v2092
      %v2189 = vpack.c.b16 %v2095, %v2094
      %v2190 = vpack.c.b16 %v2097, %v2096
      %v2191 = vpack.c.b16 %v2099, %v2098
      %v2192 = vpack.c.b16 %v2101, %v2100
      %v2193 = vpack.c.b16 %v2103, %v2102
      %v2194 = vpack.c.b16 %v2105, %v2104
      %v2195 = vpack.c.b16 %v2107, %v2106
      %v2196 = vpack.c.b16 %v2109, %v2108
      %v2197 = vpack.c.b16 %v2111, %v2110
      %v2198 = vpack.c.b16 %v2113, %v2112
      %v2199 = vpack.c.b16 %v2115, %v2114
      %v2200 = vpack.c.b16 %v2117, %v2116
      %v2201 = vpack.c.b16 %v2119, %v2118
      %v2202 = vpack.c.b16 %v2121, %v2120
      %v2203 = vpack.c.b16 %v2123, %v2122
      %v2204 = vpack.c.b16 %v2125, %v2124
      %v2205 = vpack.c.b16 %v2127, %v2126
      %v2206 = vpack.c.b16 %v2129, %v2128
      %v2207 = vpack.c.b16 %v2131, %v2130
      %v2208 = vpack.c.b16 %v2133, %v2132
      %v2209 = vpack.c.b16 %v2135, %v2134
      %v2210 = vpack.c.b16 %v2137, %v2136
      %v2211 = vpack.c.b16 %v2139, %v2138
      %v2212 = vpack.c.b16 %v2141, %v2140
      %v2213 = vpack.c.b16 %v2143, %v2142
      %v2214 = vpack.c.b16 %v2145, %v2144
      %v2215 = vpack.c.b16 %v2147, %v2146
      %v2216 = vpack.c.b16 %v2149, %v2148
      %v2217 = vpack.c.b16 %v2151, %v2150
      %v2218 = vpack.c.b16 %v2153, %v2152
      %v2219 = vpack.c.b16 %v2155, %v2154
      %2284 = vmatpush.bf16.msra.mxu0 %v2163
      %2285 = vmatpush.bf16.msra.mxu0 %v2162
      %2286 = vmatpush.bf16.msra.mxu0 %v2161
      %2287 = vmatpush.bf16.msra.mxu0 %v2160
      %2288 = vmatpush.bf16.msra.mxu0 %v2159
      %2289 = vmatpush.bf16.msra.mxu0 %v2158
      %2290 = vmatpush.bf16.msra.mxu0 %v2157
      %2291 = vmatpush.bf16.msra.mxu0 %v2156
      %2292 = vmatmul.bf16.gmra.mxu0 %v1763
      %v2293 = vpop.f32.mrf.mxu0
      %v2294 = vadd.f32 %v1899, %v2293
      %v2295 = vpop.f32.mrf.mxu0
      %2296 = vdwg.mxu0
      %2297 = vmatpush.bf16.msra.mxu0 %v2171
      %2298 = vmatpush.bf16.msra.mxu0 %v2170
      %2299 = vmatpush.bf16.msra.mxu0 %v2169
      %2300 = vmatpush.bf16.msra.mxu0 %v2168
      %2301 = vmatpush.bf16.msra.mxu0 %v2167
      %2302 = vmatpush.bf16.msra.mxu0 %v2166
      %2303 = vmatpush.bf16.msra.mxu0 %v2165
      %2304 = vmatpush.bf16.msra.mxu0 %v2164
      %2305 = vmatmul.bf16.gmra.mxu0 %v1764
      %v2306 = vpop.f32.mrf.mxu0
      %v2307 = vadd.f32 %v2294, %v2306
      %v2308 = vpop.f32.mrf.mxu0
      %2309 = vdwg.mxu0
      %2310 = vmatpush.bf16.msra.mxu0 %v2179
      %2311 = vmatpush.bf16.msra.mxu0 %v2178
      %2312 = vmatpush.bf16.msra.mxu0 %v2177
      %2313 = vmatpush.bf16.msra.mxu0 %v2176
      %2314 = vmatpush.bf16.msra.mxu0 %v2175
      %2315 = vmatpush.bf16.msra.mxu0 %v2174
      %2316 = vmatpush.bf16.msra.mxu0 %v2173
      %2317 = vmatpush.bf16.msra.mxu0 %v2172
      %2318 = vmatmul.bf16.gmra.mxu0 %v1765
      %v2319 = vpop.f32.mrf.mxu0
      %v2320 = vadd.f32 %v2307, %v2319
      %v2321 = vpop.f32.mrf.mxu0
      %2322 = vdwg.mxu0
      %2323 = vmatpush.bf16.msra.mxu0 %v2187
      %2324 = vmatpush.bf16.msra.mxu0 %v2186
      %2325 = vmatpush.bf16.msra.mxu0 %v2185
      %2326 = vmatpush.bf16.msra.mxu0 %v2184
      %2327 = vmatpush.bf16.msra.mxu0 %v2183
      %2328 = vmatpush.bf16.msra.mxu0 %v2182
      %2329 = vmatpush.bf16.msra.mxu0 %v2181
      %2330 = vmatpush.bf16.msra.mxu0 %v2180
      %2331 = vmatmul.bf16.gmra.mxu0 %v1766
      %v2332 = vpop.f32.mrf.mxu0
      %v2333 = vadd.f32 %v2320, %v2332
      %v2334 = vpop.f32.mrf.mxu0
      %2335 = vdwg.mxu0
      %2336 = vmatpush.bf16.msra.mxu0 %v2195
      %2337 = vmatpush.bf16.msra.mxu0 %v2194
      %2338 = vmatpush.bf16.msra.mxu0 %v2193
      %2339 = vmatpush.bf16.msra.mxu0 %v2192
      %2340 = vmatpush.bf16.msra.mxu0 %v2191
      %2341 = vmatpush.bf16.msra.mxu0 %v2190
      %2342 = vmatpush.bf16.msra.mxu0 %v2189
      %2343 = vmatpush.bf16.msra.mxu0 %v2188
      %2344 = vmatmul.bf16.gmra.mxu0 %v1767
      %v2345 = vpop.f32.mrf.mxu0
      %v2346 = vadd.f32 %v2333, %v2345
      %v2347 = vpop.f32.mrf.mxu0
      %2348 = vdwg.mxu0
      %2349 = vmatpush.bf16.msra.mxu0 %v2203
      %2350 = vmatpush.bf16.msra.mxu0 %v2202
      %2351 = vmatpush.bf16.msra.mxu0 %v2201
      %2352 = vmatpush.bf16.msra.mxu0 %v2200
      %2353 = vmatpush.bf16.msra.mxu0 %v2199
      %2354 = vmatpush.bf16.msra.mxu0 %v2198
      %2355 = vmatpush.bf16.msra.mxu0 %v2197
      %2356 = vmatpush.bf16.msra.mxu0 %v2196
      %2357 = vmatmul.bf16.gmra.mxu0 %v1768
      %v2358 = vpop.f32.mrf.mxu0
      %v2359 = vadd.f32 %v2346, %v2358
      %v2360 = vpop.f32.mrf.mxu0
      %2361 = vdwg.mxu0
      %2362 = vmatpush.bf16.msra.mxu0 %v2211
      %2363 = vmatpush.bf16.msra.mxu0 %v2210
      %2364 = vmatpush.bf16.msra.mxu0 %v2209
      %2365 = vmatpush.bf16.msra.mxu0 %v2208
      %2366 = vmatpush.bf16.msra.mxu0 %v2207
      %2367 = vmatpush.bf16.msra.mxu0 %v2206
      %2368 = vmatpush.bf16.msra.mxu0 %v2205
      %2369 = vmatpush.bf16.msra.mxu0 %v2204
      %2370 = vmatmul.bf16.gmra.mxu0 %v1769
      %v2371 = vpop.f32.mrf.mxu0
      %v2372 = vadd.f32 %v2359, %v2371
      %v2373 = vpop.f32.mrf.mxu0
      %2374 = vdwg.mxu0
      %2375 = vmatpush.bf16.msra.mxu0 %v2219
      %2376 = vmatpush.bf16.msra.mxu0 %v2218
      %2377 = vmatpush.bf16.msra.mxu0 %v2217
      %2378 = vmatpush.bf16.msra.mxu0 %v2216
      %2379 = vmatpush.bf16.msra.mxu0 %v2215
      %2380 = vmatpush.bf16.msra.mxu0 %v2214
      %2381 = vmatpush.bf16.msra.mxu0 %v2213
      %2382 = vmatpush.bf16.msra.mxu0 %v2212
      %2383 = vmatmul.bf16.gmra.mxu0 %v1770
      %v2384 = vpop.f32.mrf.mxu0
      %v2385 = vadd.f32 %v2372, %v2384
      %v2386 = vpop.f32.mrf.mxu0
      %2387 = vdwg.mxu0
      %2388 = vst [vmem:[%s269] sm:$0xff] %v2385
      %p2389 = scmp.lt.s32.totalorder %s17, 1
      %s2390 = scalar_select %p2389, %s17, 1
      %s2391 = smul.addr %s2390, 8
      %s2392 = scalar_lea.vmem %s6, %s2391
      // Predicated region
      $region45: #{multimodal_bilinear_forward.1} parent=43 // pred_check
        %p2393 = pneg %p171
      $region46: #{multimodal_bilinear_forward.1} parent=43 // pred_check_branch
        %2395 = sbr.rel (%p2393) target = $region48
      $region47: #{multimodal_bilinear_forward.1} parent=43 // pred_region
        _
      $region48: #{multimodal_bilinear_forward.1} parent=43 // pred_fallthru
        _
    $region44: #{multimodal_bilinear_forward.1} parent=5 // pred_fallthru
      _
    %p2396 = scmp.le.s32.totalorder 2, %s12
    // Predicated region
    $region49: #{multimodal_bilinear_forward.1} parent=5 // pred_check
      %p2397 = pneg %p2396
    $region50: #{multimodal_bilinear_forward.1} parent=5 // pred_check_branch
      %2399 = sbr.rel (%p2397) target = $region52
    $region51: #{multimodal_bilinear_forward.1} parent=5 // pred_region
      %s2400 = ssub.s32 %s12, 2
      // Predicated region
      $region53: #{multimodal_bilinear_forward.1} parent=51 // pred_check
        %p2401 = pneg %p177
      $region54: #{multimodal_bilinear_forward.1} parent=51 // pred_check_branch
        %2403 = sbr.rel (%p2401) target = $region56
      $region55: #{multimodal_bilinear_forward.1} parent=51 // pred_region
        %p2404 = scmp.lt.s32.totalorder %s18, 1
        %s2405 = scalar_select %p2404, %s18, 1
        %s2406 = smul.addr %s2405, 8
        %s2407 = scalar_lea.vmem %s6, %s2406
      $region56: #{multimodal_bilinear_forward.1} parent=51 // pred_fallthru
        _
    $region52: #{multimodal_bilinear_forward.1} parent=5 // pred_fallthru
      _
  $region6: #{multimodal_bilinear_forward.1} parent=0 // loop_footer
    %s16 = sadd.s32 1, %s12
  $region7: #{multimodal_bilinear_forward.1} parent=0 // loop_footer_branch
    %11 = sbr.rel target = $region3
  $region8: #{multimodal_bilinear_forward.1} parent=0 // loop_exit
    _

</llo_original>
